<compile_context>
chip_gen: v7x
topology: tpu7x:2x2x1
jax: 0.10.0
libtpu: 0.0.40
codegen_flags: <defaults>
</compile_context>

<pallas_src>
import functools

import jax
import jax.numpy as jnp
import numpy as np
from jax.experimental import pallas as pl
from jax.experimental.pallas import tpu as pltpu

# ---- hps (shapes implied by LSTMpcnn.__init__) -------------------------------
WORD_EMB_DIM   = 128   # hps.word_emb_dim  (embed_size, LSTM input size)
LSTM_HIDDEN    = 128   # hps.lstm_hidden_state
LSTM_LAYERS    = 2     # hps.lstm_layers
BIDIRECTIONAL  = True  # hps.bidirectional
N_FEATURE_SIZE = 128   # hps.n_feature_size
HIDDEN_SIZE    = 128   # hps.hidden_size


# ------------------------------ Pallas kernel ---------------------------------
def _lstmpcnn_kernel(x_ref,
                     w1_ref, b1_ref,
                     w2f_ref, w2r_ref, b2_ref,
                     wtf_ref, wtr_ref, ball_ref,
                     out_ref, *, hidden):
    """Fused: 2-layer bi-LSTM (seq_len==1) + folded linear tail.

    Transposed layout: activations are [features, tile_m] so the sentence axis
    is the lane axis and the [1, tile_m] output store is lane-dense.

    Gate weights carry only the live gates (i, g, o) per direction (the forget
    gate is dead at seq_len==1 with c0==0):  rows = fwd(i,g,o) ++ rev(i,g,o).
    """
    H = hidden

    def sigmoid(z):
        # Exact identity; one EUP push per map (avoids an exp + reciprocal
        # lowering of lax.logistic).  EUP is the saturating unit here.
        return 0.5 * jnp.tanh(0.5 * z) + 0.5

    def directions(gates):
        # gates: [6H, tile_m] f32
        def one(off):
            i = sigmoid(gates[off + 0 * H: off + 1 * H, :])
            g = jnp.tanh(gates[off + 1 * H: off + 2 * H, :])
            o = sigmoid(gates[off + 2 * H: off + 3 * H, :])
            return o * jnp.tanh(i * g)        # h = o*tanh(c), c = i*g (c0 == 0)
        return one(0), one(3 * H)

    x = x_ref[...]                                             # [E, tile_m] bf16

    # Layer 0: one wide fused matmul (both directions).
    g1 = jnp.dot(w1_ref[...], x, preferred_element_type=jnp.float32) + b1_ref[...]
    h1f, h1r = directions(g1)                                  # [H, tile_m] f32

    # Layer 1: per-direction K = H matmuls -> no [2H, tile_m] concat copy.
    g2 = (jnp.dot(w2f_ref[...], h1f.astype(jnp.bfloat16),
                  preferred_element_type=jnp.float32)
          + jnp.dot(w2r_ref[...], h1r.astype(jnp.bfloat16),
                    preferred_element_type=jnp.float32)
          + b2_ref[...])
    h2f, h2r = directions(g2)

    # Folded lstm_proj -> n_feature_proj -> wh collapses (no nonlinearity
    # in between) to two [1, H] vectors + scalar bias; evaluate as two
    # accumulating dots on the otherwise idle MXU.  Output is lane-dense.
    res = (jnp.dot(wtf_ref[...], h2f, preferred_element_type=jnp.float32)
           + jnp.dot(wtr_ref[...], h2r, preferred_element_type=jnp.float32)
           + ball_ref[...])
    out_ref[...] = res.astype(out_ref.dtype)


def _pick_tiling(n, tile_m_max):
    """Multiple-of-128 lane tiles; even grid (>=2) so both v7x TCs get work."""
    assert tile_m_max % 128 == 0
    grid = max(2, pl.cdiv(n, tile_m_max))
    grid += grid % 2
    tile_m = pl.cdiv(n, grid * 128) * 128
    return tile_m, grid * tile_m


def lstmpcnn_forward(ngram_feature, kparams, *, tile_m=1024):
    """ngram_feature: [N, E] float32 sentence features -> result [N, 1]."""
    N, E = ngram_feature.shape
    assert E == WORD_EMB_DIM

    tile_m, n_total = _pick_tiling(N, tile_m)
    n_pad = n_total - N
    if n_pad:
        ngram_feature = jnp.pad(ngram_feature, ((0, n_pad), (0, 0)))

    # Transpose once in XLA (lane axis = sentences) and cast to bf16 once so
    # the per-tile HBM DMA is half-width.  Padded rows are sliced off below.
    x_t = ngram_feature.T.astype(jnp.bfloat16)                 # [E, n_total]

    names = ("w1", "b1", "w2f", "w2r", "b2", "w_all_f", "w_all_r", "b_all")
    weights = [kparams[n] for n in names]

    in_specs = [pl.BlockSpec((E, tile_m), lambda i: (0, i))]
    # Weight blocks are grid-invariant (constant index_map); total footprint
    # is well under 1 MiB, so they stay resident in VMEM across the grid.
    in_specs += [pl.BlockSpec(w.shape, lambda i: (0, 0)) for w in weights]
    out_specs = pl.BlockSpec((1, tile_m), lambda i: (0, i))

    kernel = functools.partial(_lstmpcnn_kernel, hidden=LSTM_HIDDEN)
    out_t = pl.pallas_call(
        kernel,
        out_shape=jax.ShapeDtypeStruct((1, n_total), jnp.float32),
        grid=(n_total // tile_m,),
        in_specs=in_specs,
        out_specs=out_specs,
        compiler_params=pltpu.CompilerParams(dimension_semantics=("parallel",)),
    )(x_t, *weights)

    return out_t.T[:N]                                         # [N, 1]


# --------------------------- parameter construction ---------------------------
def init_raw_params(key):
    """Deterministic params in PyTorch convention (LSTM gate order i,f,g,o)."""
    E, H, F, HS = WORD_EMB_DIM, LSTM_HIDDEN, N_FEATURE_SIZE, HIDDEN_SIZE
    ks = jax.random.split(key, 17)
    u = lambda k, shape, s: jax.random.uniform(k, shape, jnp.float32, -s, s)
    kl = 1.0 / np.sqrt(H)
    raw = {
        # nn.LSTM layer 0 (W_hh_* omitted: h0 == 0 at the single timestep)
        "W_ih_l0":  u(ks[0], (4 * H, E), kl),
        "b_ih_l0":  u(ks[1], (4 * H,), kl),
        "b_hh_l0":  u(ks[2], (4 * H,), kl),
        "W_ih_l0r": u(ks[3], (4 * H, E), kl),
        "b_ih_l0r": u(ks[4], (4 * H,), kl),
        "b_hh_l0r": u(ks[5], (4 * H,), kl),
        # nn.LSTM layer 1 (input = 2H, bidirectional)
        "W_ih_l1":  u(ks[6], (4 * H, 2 * H), kl),
        "b_ih_l1":  u(ks[7], (4 * H,), kl),
        "b_hh_l1":  u(ks[8], (4 * H,), kl),
        "W_ih_l1r": u(ks[9], (4 * H, 2 * H), kl),
        "b_ih_l1r": u(ks[10], (4 * H,), kl),
        "b_hh_l1r": u(ks[11], (4 * H,), kl),
        # lstm_proj: Linear(2H, F)
        "Wp": u(ks[12], (F, 2 * H), 1.0 / np.sqrt(2 * H)),
        "bp": u(ks[13], (F,), 1.0 / np.sqrt(2 * H)),
        # n_feature_proj: Linear(F, HS, bias=False)
        "Wn": u(ks[14], (HS, F), 1.0 / np.sqrt(F)),
        # wh: Linear(HS, 1)
        "Ww": u(ks[15], (1, HS), 1.0 / np.sqrt(HS)),
        "bw": u(ks[16], (1,), 1.0 / np.sqrt(HS)),
    }
    return raw


def to_kernel_params(raw, gate_dtype=jnp.bfloat16):
    """Kernel layout for the transposed (feature-major) kernel.

    * Dead forget-gate rows dropped: per direction the rows kept are (i, g, o),
      so each layer's fused gate weight is [6H, in] (fwd rows then rev rows).
    * Layer-1 gate weight split by K into forward / reverse column halves so
      the kernel never concatenates the two layer-0 output halves.
    * b_ih + b_hh combined, kept f32, shaped [6H, 1] for lane-broadcast.
    * The three trailing Linear layers fold exactly (no nonlinearity between
      them) into two [1, H] row vectors (one per direction) + scalar bias.
    * Gate weights stored in bf16 (f32 accumulation via preferred_element_type).
    """
    H = LSTM_HIDDEN

    def igo(w):      # drop forget-gate rows: [4H, in] -> [3H, in]
        return jnp.concatenate([w[0 * H:1 * H], w[2 * H:3 * H], w[3 * H:4 * H]], axis=0)

    def igo_bias(b_ih, b_hh):
        b = b_ih + b_hh
        return jnp.concatenate([b[0 * H:1 * H], b[2 * H:3 * H], b[3 * H:4 * H]])[:, None]

    w1 = jnp.concatenate([igo(raw["W_ih_l0"]), igo(raw["W_ih_l0r"])], axis=0)
    b1 = jnp.concatenate([igo_bias(raw["b_ih_l0"], raw["b_hh_l0"]),
                          igo_bias(raw["b_ih_l0r"], raw["b_hh_l0r"])], axis=0)

    w2_full = jnp.concatenate([igo(raw["W_ih_l1"]), igo(raw["W_ih_l1r"])], axis=0)  # [6H, 2H]
    w2f, w2r = w2_full[:, :H], w2_full[:, H:]
    b2 = jnp.concatenate([igo_bias(raw["b_ih_l1"], raw["b_hh_l1"]),
                          igo_bias(raw["b_ih_l1r"], raw["b_hh_l1r"])], axis=0)

    # res = ((h2 @ Wp.T + bp) @ Wn.T) @ Ww.T + bw
    #     = h2 @ (Wp.T @ Wn.T @ Ww.T) + (bp @ Wn.T @ Ww.T + bw)
    w_all = raw["Wp"].T @ raw["Wn"].T @ raw["Ww"].T                     # [2H, 1]
    b_all = raw["bp"] @ raw["Wn"].T @ raw["Ww"].T + raw["bw"]           # [1]

    return {
        "w1": w1.astype(gate_dtype), "b1": b1.astype(jnp.float32),
        "w2f": w2f.astype(gate_dtype), "w2r": w2r.astype(gate_dtype),
        "b2": b2.astype(jnp.float32),
        "w_all_f": w_all[:H].T.astype(jnp.float32),                     # [1, H]
        "w_all_r": w_all[H:].T.astype(jnp.float32),                     # [1, H]
        "b_all": b_all.reshape(1, 1).astype(jnp.float32),
    }


# ------------------------------ pure-JAX reference ----------------------------
def reference_forward(x, raw):
    def cell(inp, W, b_ih, b_hh):
        gates = inp @ W.T + b_ih + b_hh
        i, f, g, o = jnp.split(gates, 4, axis=-1)
        c = jax.nn.sigmoid(i) * jnp.tanh(g)          # c0 = 0
        return jax.nn.sigmoid(o) * jnp.tanh(c)

    h1 = jnp.concatenate([cell(x, raw["W_ih_l0"], raw["b_ih_l0"], raw["b_hh_l0"]),
                          cell(x, raw["W_ih_l0r"], raw["b_ih_l0r"], raw["b_hh_l0r"])], -1)
    h2 = jnp.concatenate([cell(h1, raw["W_ih_l1"], raw["b_ih_l1"], raw["b_hh_l1"]),
                          cell(h1, raw["W_ih_l1r"], raw["b_ih_l1r"], raw["b_hh_l1r"])], -1)
    feat = h2 @ raw["Wp"].T + raw["bp"]
    sent = feat @ raw["Wn"].T
    return sent @ raw["Ww"].T + raw["bw"]


# ----------------------------------- main --------------------------------------
if __name__ == "__main__":
    key = jax.random.PRNGKey(0)
    k_feat, k_param = jax.random.split(key)

    # 512 sentences -> grid of 2 x 256-lane tiles (keeps both v7x TCs busy).
    N_SENTS = 512
    ngram_feature = jax.random.normal(k_feat, (N_SENTS, WORD_EMB_DIM), jnp.float32)

    raw = init_raw_params(k_param)
    kparams = to_kernel_params(raw)

    result = lstmpcnn_forward(ngram_feature, kparams, tile_m=1024)
    result = jax.block_until_ready(result)

    assert result.shape == (N_SENTS, 1), result.shape
    ref = reference_forward(ngram_feature, raw)
    max_err = float(jnp.max(jnp.abs(result - ref)))
    assert bool(jnp.allclose(result, ref, atol=2e-2, rtol=2e-2)), \
        f"mismatch: max abs err {max_err}"

    print("KERNEL_OK")
</pallas_src>

<mosaic_0001>
module attributes {stable_mosaic.version = 11 : i64} {
  func.func @_lstmpcnn_kernel(%arg0: i32, %arg1: memref<128x256xbf16, #tpu.memory_space<vmem>>, %arg2: memref<768x128xbf16, #tpu.memory_space<vmem>>, %arg3: memref<768x1xf32, #tpu.memory_space<vmem>>, %arg4: memref<768x128xbf16, #tpu.memory_space<vmem>>, %arg5: memref<768x128xbf16, #tpu.memory_space<vmem>>, %arg6: memref<768x1xf32, #tpu.memory_space<vmem>>, %arg7: memref<1x128xf32, #tpu.memory_space<vmem>>, %arg8: memref<1x128xf32, #tpu.memory_space<vmem>>, %arg9: memref<1x1xf32, #tpu.memory_space<vmem>>, %arg10: memref<1x256xf32, #tpu.memory_space<vmem>>) attributes {dimension_semantics = [#tpu.dimension_semantics<parallel>], iteration_bounds = array<i64: 2>, scalar_prefetch = 0 : i64, scratch_operands = 0 : i64, tpu.core_type = #tpu.core_type<tc>, window_params = [{transform_indices = @transform_0, window_bounds = array<i64: 128, 256>}, {pipeline_mode = #tpu.pipeline_mode<synchronous>, transform_indices = @transform_1, window_bounds = array<i64: 768, 128>}, {pipeline_mode = #tpu.pipeline_mode<synchronous>, transform_indices = @transform_2, window_bounds = array<i64: 768, 1>}, {pipeline_mode = #tpu.pipeline_mode<synchronous>, transform_indices = @transform_3, window_bounds = array<i64: 768, 128>}, {pipeline_mode = #tpu.pipeline_mode<synchronous>, transform_indices = @transform_4, window_bounds = array<i64: 768, 128>}, {pipeline_mode = #tpu.pipeline_mode<synchronous>, transform_indices = @transform_5, window_bounds = array<i64: 768, 1>}, {pipeline_mode = #tpu.pipeline_mode<synchronous>, transform_indices = @transform_6, window_bounds = array<i64: 1, 128>}, {pipeline_mode = #tpu.pipeline_mode<synchronous>, transform_indices = @transform_7, window_bounds = array<i64: 1, 128>}, {pipeline_mode = #tpu.pipeline_mode<synchronous>, transform_indices = @transform_8, window_bounds = array<i64: 1, 1>}, {transform_indices = @transform_9, window_bounds = array<i64: 1, 256>}]} {
    %c0 = arith.constant 0 : index
    %c0_0 = arith.constant 0 : index
    %0 = vector.load %arg1[%c0, %c0_0] : memref<128x256xbf16, #tpu.memory_space<vmem>>, vector<128x256xbf16>
    %c0_1 = arith.constant 0 : index
    %c0_2 = arith.constant 0 : index
    %1 = vector.load %arg2[%c0_1, %c0_2] : memref<768x128xbf16, #tpu.memory_space<vmem>>, vector<768x128xbf16>
    %cst = arith.constant dense<0.000000e+00> : vector<768x256xf32>
    %2 = tpu.matmul %1, %0, %cst {dimension_numbers = #tpu.dot_dimension_numbers<[1], [0], [0], [1], [0, 0, 1, 1], [], []>} : vector<768x128xbf16>, vector<128x256xbf16>, vector<768x256xf32> -> vector<768x256xf32>
    %c0_3 = arith.constant 0 : index
    %c0_4 = arith.constant 0 : index
    %3 = vector.load %arg3[%c0_3, %c0_4] : memref<768x1xf32, #tpu.memory_space<vmem>>, vector<768x1xf32>
    %4 = vector.broadcast %3 : vector<768x1xf32> to vector<768x256xf32>
    %5 = arith.addf %2, %4 : vector<768x256xf32>
    %6 = vector.extract_strided_slice %5 {offsets = [0, 0], sizes = [128, 256], strides = [1, 1]} : vector<768x256xf32> to vector<128x256xf32>
    %cst_5 = arith.constant 5.000000e-01 : f32
    %7 = vector.broadcast %cst_5 : f32 to vector<128x256xf32>
    %8 = arith.mulf %7, %6 : vector<128x256xf32>
    %9 = math.tanh %8 : vector<128x256xf32>
    %cst_6 = arith.constant 5.000000e-01 : f32
    %10 = vector.broadcast %cst_6 : f32 to vector<128x256xf32>
    %11 = arith.mulf %10, %9 : vector<128x256xf32>
    %cst_7 = arith.constant 5.000000e-01 : f32
    %12 = vector.broadcast %cst_7 : f32 to vector<128x256xf32>
    %13 = arith.addf %11, %12 : vector<128x256xf32>
    %14 = vector.extract_strided_slice %5 {offsets = [128, 0], sizes = [128, 256], strides = [1, 1]} : vector<768x256xf32> to vector<128x256xf32>
    %15 = math.tanh %14 : vector<128x256xf32>
    %16 = vector.extract_strided_slice %5 {offsets = [256, 0], sizes = [128, 256], strides = [1, 1]} : vector<768x256xf32> to vector<128x256xf32>
    %cst_8 = arith.constant 5.000000e-01 : f32
    %17 = vector.broadcast %cst_8 : f32 to vector<128x256xf32>
    %18 = arith.mulf %17, %16 : vector<128x256xf32>
    %19 = math.tanh %18 : vector<128x256xf32>
    %cst_9 = arith.constant 5.000000e-01 : f32
    %20 = vector.broadcast %cst_9 : f32 to vector<128x256xf32>
    %21 = arith.mulf %20, %19 : vector<128x256xf32>
    %cst_10 = arith.constant 5.000000e-01 : f32
    %22 = vector.broadcast %cst_10 : f32 to vector<128x256xf32>
    %23 = arith.addf %21, %22 : vector<128x256xf32>
    %24 = arith.mulf %13, %15 : vector<128x256xf32>
    %25 = math.tanh %24 : vector<128x256xf32>
    %26 = arith.mulf %23, %25 : vector<128x256xf32>
    %27 = vector.extract_strided_slice %5 {offsets = [384, 0], sizes = [128, 256], strides = [1, 1]} : vector<768x256xf32> to vector<128x256xf32>
    %cst_11 = arith.constant 5.000000e-01 : f32
    %28 = vector.broadcast %cst_11 : f32 to vector<128x256xf32>
    %29 = arith.mulf %28, %27 : vector<128x256xf32>
    %30 = math.tanh %29 : vector<128x256xf32>
    %cst_12 = arith.constant 5.000000e-01 : f32
    %31 = vector.broadcast %cst_12 : f32 to vector<128x256xf32>
    %32 = arith.mulf %31, %30 : vector<128x256xf32>
    %cst_13 = arith.constant 5.000000e-01 : f32
    %33 = vector.broadcast %cst_13 : f32 to vector<128x256xf32>
    %34 = arith.addf %32, %33 : vector<128x256xf32>
    %35 = vector.extract_strided_slice %5 {offsets = [512, 0], sizes = [128, 256], strides = [1, 1]} : vector<768x256xf32> to vector<128x256xf32>
    %36 = math.tanh %35 : vector<128x256xf32>
    %37 = vector.extract_strided_slice %5 {offsets = [640, 0], sizes = [128, 256], strides = [1, 1]} : vector<768x256xf32> to vector<128x256xf32>
    %cst_14 = arith.constant 5.000000e-01 : f32
    %38 = vector.broadcast %cst_14 : f32 to vector<128x256xf32>
    %39 = arith.mulf %38, %37 : vector<128x256xf32>
    %40 = math.tanh %39 : vector<128x256xf32>
    %cst_15 = arith.constant 5.000000e-01 : f32
    %41 = vector.broadcast %cst_15 : f32 to vector<128x256xf32>
    %42 = arith.mulf %41, %40 : vector<128x256xf32>
    %cst_16 = arith.constant 5.000000e-01 : f32
    %43 = vector.broadcast %cst_16 : f32 to vector<128x256xf32>
    %44 = arith.addf %42, %43 : vector<128x256xf32>
    %45 = arith.mulf %34, %36 : vector<128x256xf32>
    %46 = math.tanh %45 : vector<128x256xf32>
    %47 = arith.mulf %44, %46 : vector<128x256xf32>
    %c0_17 = arith.constant 0 : index
    %c0_18 = arith.constant 0 : index
    %48 = vector.load %arg4[%c0_17, %c0_18] : memref<768x128xbf16, #tpu.memory_space<vmem>>, vector<768x128xbf16>
    %49 = arith.truncf %26 : vector<128x256xf32> to vector<128x256xbf16>
    %cst_19 = arith.constant dense<0.000000e+00> : vector<768x256xf32>
    %50 = tpu.matmul %48, %49, %cst_19 {dimension_numbers = #tpu.dot_dimension_numbers<[1], [0], [0], [1], [0, 0, 1, 1], [], []>} : vector<768x128xbf16>, vector<128x256xbf16>, vector<768x256xf32> -> vector<768x256xf32>
    %c0_20 = arith.constant 0 : index
    %c0_21 = arith.constant 0 : index
    %51 = vector.load %arg5[%c0_20, %c0_21] : memref<768x128xbf16, #tpu.memory_space<vmem>>, vector<768x128xbf16>
    %52 = arith.truncf %47 : vector<128x256xf32> to vector<128x256xbf16>
    %cst_22 = arith.constant dense<0.000000e+00> : vector<768x256xf32>
    %53 = tpu.matmul %51, %52, %cst_22 {dimension_numbers = #tpu.dot_dimension_numbers<[1], [0], [0], [1], [0, 0, 1, 1], [], []>} : vector<768x128xbf16>, vector<128x256xbf16>, vector<768x256xf32> -> vector<768x256xf32>
    %54 = arith.addf %50, %53 : vector<768x256xf32>
    %c0_23 = arith.constant 0 : index
    %c0_24 = arith.constant 0 : index
    %55 = vector.load %arg6[%c0_23, %c0_24] : memref<768x1xf32, #tpu.memory_space<vmem>>, vector<768x1xf32>
    %56 = vector.broadcast %55 : vector<768x1xf32> to vector<768x256xf32>
    %57 = arith.addf %54, %56 : vector<768x256xf32>
    %58 = vector.extract_strided_slice %57 {offsets = [0, 0], sizes = [128, 256], strides = [1, 1]} : vector<768x256xf32> to vector<128x256xf32>
    %cst_25 = arith.constant 5.000000e-01 : f32
    %59 = vector.broadcast %cst_25 : f32 to vector<128x256xf32>
    %60 = arith.mulf %59, %58 : vector<128x256xf32>
    %61 = math.tanh %60 : vector<128x256xf32>
    %cst_26 = arith.constant 5.000000e-01 : f32
    %62 = vector.broadcast %cst_26 : f32 to vector<128x256xf32>
    %63 = arith.mulf %62, %61 : vector<128x256xf32>
    %cst_27 = arith.constant 5.000000e-01 : f32
    %64 = vector.broadcast %cst_27 : f32 to vector<128x256xf32>
    %65 = arith.addf %63, %64 : vector<128x256xf32>
    %66 = vector.extract_strided_slice %57 {offsets = [128, 0], sizes = [128, 256], strides = [1, 1]} : vector<768x256xf32> to vector<128x256xf32>
    %67 = math.tanh %66 : vector<128x256xf32>
    %68 = vector.extract_strided_slice %57 {offsets = [256, 0], sizes = [128, 256], strides = [1, 1]} : vector<768x256xf32> to vector<128x256xf32>
    %cst_28 = arith.constant 5.000000e-01 : f32
    %69 = vector.broadcast %cst_28 : f32 to vector<128x256xf32>
    %70 = arith.mulf %69, %68 : vector<128x256xf32>
    %71 = math.tanh %70 : vector<128x256xf32>
    %cst_29 = arith.constant 5.000000e-01 : f32
    %72 = vector.broadcast %cst_29 : f32 to vector<128x256xf32>
    %73 = arith.mulf %72, %71 : vector<128x256xf32>
    %cst_30 = arith.constant 5.000000e-01 : f32
    %74 = vector.broadcast %cst_30 : f32 to vector<128x256xf32>
    %75 = arith.addf %73, %74 : vector<128x256xf32>
    %76 = arith.mulf %65, %67 : vector<128x256xf32>
    %77 = math.tanh %76 : vector<128x256xf32>
    %78 = arith.mulf %75, %77 : vector<128x256xf32>
    %79 = vector.extract_strided_slice %57 {offsets = [384, 0], sizes = [128, 256], strides = [1, 1]} : vector<768x256xf32> to vector<128x256xf32>
    %cst_31 = arith.constant 5.000000e-01 : f32
    %80 = vector.broadcast %cst_31 : f32 to vector<128x256xf32>
    %81 = arith.mulf %80, %79 : vector<128x256xf32>
    %82 = math.tanh %81 : vector<128x256xf32>
    %cst_32 = arith.constant 5.000000e-01 : f32
    %83 = vector.broadcast %cst_32 : f32 to vector<128x256xf32>
    %84 = arith.mulf %83, %82 : vector<128x256xf32>
    %cst_33 = arith.constant 5.000000e-01 : f32
    %85 = vector.broadcast %cst_33 : f32 to vector<128x256xf32>
    %86 = arith.addf %84, %85 : vector<128x256xf32>
    %87 = vector.extract_strided_slice %57 {offsets = [512, 0], sizes = [128, 256], strides = [1, 1]} : vector<768x256xf32> to vector<128x256xf32>
    %88 = math.tanh %87 : vector<128x256xf32>
    %89 = vector.extract_strided_slice %57 {offsets = [640, 0], sizes = [128, 256], strides = [1, 1]} : vector<768x256xf32> to vector<128x256xf32>
    %cst_34 = arith.constant 5.000000e-01 : f32
    %90 = vector.broadcast %cst_34 : f32 to vector<128x256xf32>
    %91 = arith.mulf %90, %89 : vector<128x256xf32>
    %92 = math.tanh %91 : vector<128x256xf32>
    %cst_35 = arith.constant 5.000000e-01 : f32
    %93 = vector.broadcast %cst_35 : f32 to vector<128x256xf32>
    %94 = arith.mulf %93, %92 : vector<128x256xf32>
    %cst_36 = arith.constant 5.000000e-01 : f32
    %95 = vector.broadcast %cst_36 : f32 to vector<128x256xf32>
    %96 = arith.addf %94, %95 : vector<128x256xf32>
    %97 = arith.mulf %86, %88 : vector<128x256xf32>
    %98 = math.tanh %97 : vector<128x256xf32>
    %99 = arith.mulf %96, %98 : vector<128x256xf32>
    %c0_37 = arith.constant 0 : index
    %c0_38 = arith.constant 0 : index
    %100 = vector.load %arg7[%c0_37, %c0_38] : memref<1x128xf32, #tpu.memory_space<vmem>>, vector<1x128xf32>
    %cst_39 = arith.constant dense<0.000000e+00> : vector<1x256xf32>
    %101 = tpu.matmul %100, %78, %cst_39 {dimension_numbers = #tpu.dot_dimension_numbers<[1], [0], [0], [1], [0, 0, 1, 1], [], []>} : vector<1x128xf32>, vector<128x256xf32>, vector<1x256xf32> -> vector<1x256xf32>
    %c0_40 = arith.constant 0 : index
    %c0_41 = arith.constant 0 : index
    %102 = vector.load %arg8[%c0_40, %c0_41] : memref<1x128xf32, #tpu.memory_space<vmem>>, vector<1x128xf32>
    %cst_42 = arith.constant dense<0.000000e+00> : vector<1x256xf32>
    %103 = tpu.matmul %102, %99, %cst_42 {dimension_numbers = #tpu.dot_dimension_numbers<[1], [0], [0], [1], [0, 0, 1, 1], [], []>} : vector<1x128xf32>, vector<128x256xf32>, vector<1x256xf32> -> vector<1x256xf32>
    %104 = arith.addf %101, %103 : vector<1x256xf32>
    %c0_43 = arith.constant 0 : index
    %c0_44 = arith.constant 0 : index
    %105 = vector.load %arg9[%c0_43, %c0_44] : memref<1x1xf32, #tpu.memory_space<vmem>>, vector<1x1xf32>
    %106 = vector.broadcast %105 : vector<1x1xf32> to vector<1x256xf32>
    %107 = arith.addf %104, %106 : vector<1x256xf32>
    %c0_45 = arith.constant 0 : index
    %c0_46 = arith.constant 0 : index
    %108 = vector.load %arg10[%c0_45, %c0_46] : memref<1x256xf32, #tpu.memory_space<vmem>>, vector<1x256xf32>
    tpu.vector_store %arg10[%c0_45, %c0_46], %107 {strides = array<i32>} : memref<1x256xf32, #tpu.memory_space<vmem>>, vector<1x256xf32>,
    return
  }
  func.func @transform_0(%arg0: i32) -> (i32, i32) {
    %c0_i32 = arith.constant 0 : i32
    %c0_i32_0 = arith.constant 0 : i32
    return %c0_i32, %arg0 : i32, i32
  }
  func.func @transform_1(%arg0: i32) -> (i32, i32) {
    %c0_i32 = arith.constant 0 : i32
    %c0_i32_0 = arith.constant 0 : i32
    %c0_i32_1 = arith.constant 0 : i32
    return %c0_i32, %c0_i32_0 : i32, i32
  }
  func.func @transform_2(%arg0: i32) -> (i32, i32) {
    %c0_i32 = arith.constant 0 : i32
    %c0_i32_0 = arith.constant 0 : i32
    %c0_i32_1 = arith.constant 0 : i32
    return %c0_i32, %c0_i32_0 : i32, i32
  }
  func.func @transform_3(%arg0: i32) -> (i32, i32) {
    %c0_i32 = arith.constant 0 : i32
    %c0_i32_0 = arith.constant 0 : i32
    %c0_i32_1 = arith.constant 0 : i32
    return %c0_i32, %c0_i32_0 : i32, i32
  }
  func.func @transform_4(%arg0: i32) -> (i32, i32) {
    %c0_i32 = arith.constant 0 : i32
    %c0_i32_0 = arith.constant 0 : i32
    %c0_i32_1 = arith.constant 0 : i32
    return %c0_i32, %c0_i32_0 : i32, i32
  }
  func.func @transform_5(%arg0: i32) -> (i32, i32) {
    %c0_i32 = arith.constant 0 : i32
    %c0_i32_0 = arith.constant 0 : i32
    %c0_i32_1 = arith.constant 0 : i32
    return %c0_i32, %c0_i32_0 : i32, i32
  }
  func.func @transform_6(%arg0: i32) -> (i32, i32) {
    %c0_i32 = arith.constant 0 : i32
    %c0_i32_0 = arith.constant 0 : i32
    %c0_i32_1 = arith.constant 0 : i32
    return %c0_i32, %c0_i32_0 : i32, i32
  }
  func.func @transform_7(%arg0: i32) -> (i32, i32) {
    %c0_i32 = arith.constant 0 : i32
    %c0_i32_0 = arith.constant 0 : i32
    %c0_i32_1 = arith.constant 0 : i32
    return %c0_i32, %c0_i32_0 : i32, i32
  }
  func.func @transform_8(%arg0: i32) -> (i32, i32) {
    %c0_i32 = arith.constant 0 : i32
    %c0_i32_0 = arith.constant 0 : i32
    %c0_i32_1 = arith.constant 0 : i32
    return %c0_i32, %c0_i32_0 : i32, i32
  }
  func.func @transform_9(%arg0: i32) -> (i32, i32) {
    %c0_i32 = arith.constant 0 : i32
    %c0_i32_0 = arith.constant 0 : i32
    return %c0_i32, %arg0 : i32, i32
  }
}

</mosaic_0001>

<llo_original>
// kernel: tpu_custom_call.1
$region0: #{tpu_custom_call.1}
  #allocation0 [shape = 'u32[]', space=smem, size = 0x4, offset = 0x4, fixed_abs, tag = 'smem constant byte address 0x4 - core index']
  #allocation1 [shape = 'u32[144,128]{1,0:T(1,128)}', space=vmem, size = 0x12000, scoped, tag = 'internal scratch']
  #allocation2 [shape = 'f32[1,1]{1,0:T(1,128)S(1)}', space=vmem, size = 0x200, scoped, tag = 'scoped memory for tpu_custom_call.1']
  %s0 = inlined_call_operand.vmem [shape: bf16[128,512], index: 0, kind: input, shape index: {}]
  %s1 = inlined_call_operand.vmem [shape: bf16[768,128], index: 1, kind: input, shape index: {}]
  %s2 = inlined_call_operand.vmem [shape: f32[768,1], index: 2, kind: input, shape index: {}]
  %s3 = inlined_call_operand.vmem [shape: bf16[768,128], index: 3, kind: input, shape index: {}]
  %s4 = inlined_call_operand.vmem [shape: bf16[768,128], index: 4, kind: input, shape index: {}]
  %s5 = inlined_call_operand.vmem [shape: f32[768,1], index: 5, kind: input, shape index: {}]
  %s6 = inlined_call_operand.vmem [shape: f32[1,128], index: 6, kind: input, shape index: {}]
  %s7 = inlined_call_operand.vmem [shape: f32[1,128], index: 7, kind: input, shape index: {}]
  %s8 = inlined_call_operand.<no memory space> [shape: f32[1,1], index: 8, kind: input, shape index: {}]
  %s9 = inlined_call_operand.hbm [shape: f32[1,512], index: 9, kind: output, shape index: {}]
  %s10 = sld [smem:[#allocation0]]
  $region107: #{tpu_custom_call.1} parent=0
    _
  %s12 = ssub.s32 1, %s10
  %s13 = scalar_select 0, %s12, %s10
  %v14 = vstv %s8
  %15 = vst [vmem:[#allocation2] sm:$0x1] %v14
  $region1: #{tpu_custom_call.1} parent=0
    #allocation3 [shape = 'u8[131072]{0}', space=vmem, size = 0x20000, scoped, tag = 'input window, operand 0']
    #allocation4 [shape = 'u8[2048]{0}', space=vmem, size = 0x800, scoped, tag = 'output window, operand 0']
    #allocation5 [shape = 's32[2]{0}', space=sflag, size = 0x8, scoped, tag = 'scoped memory for tpu_custom_call.1']
    %16 = vsyncpa [#allocation5], 0
    %s17 = scalar_lea.sflag [#allocation5], 1
    %18 = vsyncpa %s17, 0
    loop: start=0, step=1, limit=4
    $region2: #{tpu_custom_call.1} parent=1 // loop_pre_header
      _
    $region3: #{tpu_custom_call.1} parent=1 // loop_header
      %s20 = sphi 0, %s24
      %p21 = scmp.ge.s32.totalorder %s20, 4
      %s30 = sphi 0, %s32
      %s33 = sphi 0, %s30
      %s34 = sphi 0, %s33
      %s50 = sphi 0, %s34
      %s54 = sphi 0, %s54
      %s56 = sphi 0, %s54
      %s57 = sphi 0, %s56
      %s71 = sphi 0, %s57
      %s75 = sphi 0, %s75
      %s77 = sphi 0, %s75
      %s78 = sphi 0, %s77
      %s92 = sphi 0, %s78
      %s96 = sphi 0, %s96
      %s98 = sphi 0, %s96
      %s99 = sphi 0, %s98
      %s113 = sphi 0, %s99
      %s117 = sphi 0, %s117
      %s119 = sphi 0, %s117
      %s120 = sphi 0, %s119
      %s134 = sphi 0, %s120
      %s138 = sphi 0, %s138
      %s140 = sphi 0, %s138
      %s141 = sphi 0, %s140
      %s155 = sphi 0, %s141
      %s159 = sphi 0, %s159
      %s161 = sphi 0, %s159
      %s162 = sphi 0, %s161
      %s176 = sphi 0, %s162
      %s180 = sphi 0, %s180
      %s182 = sphi 0, %s180
      %s183 = sphi 0, %s182
      %s197 = sphi 0, %s183
      %s201 = sphi 0, %s201
      %s203 = sphi 0, %s201
      %s204 = sphi 0, %s203
      %s218 = sphi 0, %s204
      %s224 = sphi 0, %s226
      %s227 = sphi 0, %s224
      %s228 = sphi 0, %s227
      %s244 = sphi 0, %s228
    $region4: #{tpu_custom_call.1} parent=1 // loop_header_branch
      %23 = sbr.rel (%p21) target = $region8
    $region5: #{tpu_custom_call.1} parent=1 // loop_body
      %s25 = ssub.s32 %s20, 1
      %s26 = ssub.s32 %s20, 2
      %s27 = sadd.s32 %s20, 1
      %s28 = ssub.s32 %s20, %s27
      %p29 = scmp.eq.s32.totalorder %s28, 0
      %s31 = sadd.s32 %s30, 1
      %s32 = scalar_select %p29, %s30, %s31
      %p35 = pneg %p29
      %p36 = scmp.eq.s32.totalorder %s20, 1
      %p37 = por %p35, %p36
      %p38 = scmp.ne.s32.totalorder %s30, %s33
      %p39 = scmp.eq.s32.totalorder %s20, 0
      %p40 = por %p38, %p39
      %p41 = scmp.ne.s32.totalorder %s30, %s33
      %p42 = scmp.eq.s32.totalorder %s25, 1
      %p43 = por %p41, %p42
      %p44 = scmp.ne.s32.totalorder %s33, %s34
      %p45 = scmp.eq.s32.totalorder %s25, 0
      %p46 = por %p44, %p45
      %p47 = scmp.ne.s32.totalorder %s33, %s34
      %p48 = scmp.eq.s32.totalorder %s26, 1
      %p49 = por %p47, %p48
      %p51 = scmp.ne.s32.totalorder %s34, %s50
      %p52 = scmp.eq.s32.totalorder %s26, 0
      %p53 = por %p51, %p52
      %s55 = sadd.s32 %s54, 1
      %p58 = scmp.eq.s32.totalorder %s20, 1
      %p59 = scmp.ne.s32.totalorder %s54, %s56
      %p60 = scmp.eq.s32.totalorder %s20, 0
      %p61 = por %p59, %p60
      %p62 = scmp.ne.s32.totalorder %s54, %s56
      %p63 = scmp.eq.s32.totalorder %s25, 1
      %p64 = por %p62, %p63
      %p65 = scmp.ne.s32.totalorder %s56, %s57
      %p66 = scmp.eq.s32.totalorder %s25, 0
      %p67 = por %p65, %p66
      %p68 = scmp.ne.s32.totalorder %s56, %s57
      %p69 = scmp.eq.s32.totalorder %s26, 1
      %p70 = por %p68, %p69
      %p72 = scmp.ne.s32.totalorder %s57, %s71
      %p73 = scmp.eq.s32.totalorder %s26, 0
      %p74 = por %p72, %p73
      %s76 = sadd.s32 %s75, 1
      %p79 = scmp.eq.s32.totalorder %s20, 1
      %p80 = scmp.ne.s32.totalorder %s75, %s77
      %p81 = scmp.eq.s32.totalorder %s20, 0
      %p82 = por %p80, %p81
      %p83 = scmp.ne.s32.totalorder %s75, %s77
      %p84 = scmp.eq.s32.totalorder %s25, 1
      %p85 = por %p83, %p84
      %p86 = scmp.ne.s32.totalorder %s77, %s78
      %p87 = scmp.eq.s32.totalorder %s25, 0
      %p88 = por %p86, %p87
      %p89 = scmp.ne.s32.totalorder %s77, %s78
      %p90 = scmp.eq.s32.totalorder %s26, 1
      %p91 = por %p89, %p90
      %p93 = scmp.ne.s32.totalorder %s78, %s92
      %p94 = scmp.eq.s32.totalorder %s26, 0
      %p95 = por %p93, %p94
      %s97 = sadd.s32 %s96, 1
      %p100 = scmp.eq.s32.totalorder %s20, 1
      %p101 = scmp.ne.s32.totalorder %s96, %s98
      %p102 = scmp.eq.s32.totalorder %s20, 0
      %p103 = por %p101, %p102
      %p104 = scmp.ne.s32.totalorder %s96, %s98
      %p105 = scmp.eq.s32.totalorder %s25, 1
      %p106 = por %p104, %p105
      %p107 = scmp.ne.s32.totalorder %s98, %s99
      %p108 = scmp.eq.s32.totalorder %s25, 0
      %p109 = por %p107, %p108
      %p110 = scmp.ne.s32.totalorder %s98, %s99
      %p111 = scmp.eq.s32.totalorder %s26, 1
      %p112 = por %p110, %p111
      %p114 = scmp.ne.s32.totalorder %s99, %s113
      %p115 = scmp.eq.s32.totalorder %s26, 0
      %p116 = por %p114, %p115
      %s118 = sadd.s32 %s117, 1
      %p121 = scmp.eq.s32.totalorder %s20, 1
      %p122 = scmp.ne.s32.totalorder %s117, %s119
      %p123 = scmp.eq.s32.totalorder %s20, 0
      %p124 = por %p122, %p123
      %p125 = scmp.ne.s32.totalorder %s117, %s119
      %p126 = scmp.eq.s32.totalorder %s25, 1
      %p127 = por %p125, %p126
      %p128 = scmp.ne.s32.totalorder %s119, %s120
      %p129 = scmp.eq.s32.totalorder %s25, 0
      %p130 = por %p128, %p129
      %p131 = scmp.ne.s32.totalorder %s119, %s120
      %p132 = scmp.eq.s32.totalorder %s26, 1
      %p133 = por %p131, %p132
      %p135 = scmp.ne.s32.totalorder %s120, %s134
      %p136 = scmp.eq.s32.totalorder %s26, 0
      %p137 = por %p135, %p136
      %s139 = sadd.s32 %s138, 1
      %p142 = scmp.eq.s32.totalorder %s20, 1
      %p143 = scmp.ne.s32.totalorder %s138, %s140
      %p144 = scmp.eq.s32.totalorder %s20, 0
      %p145 = por %p143, %p144
      %p146 = scmp.ne.s32.totalorder %s138, %s140
      %p147 = scmp.eq.s32.totalorder %s25, 1
      %p148 = por %p146, %p147
      %p149 = scmp.ne.s32.totalorder %s140, %s141
      %p150 = scmp.eq.s32.totalorder %s25, 0
      %p151 = por %p149, %p150
      %p152 = scmp.ne.s32.totalorder %s140, %s141
      %p153 = scmp.eq.s32.totalorder %s26, 1
      %p154 = por %p152, %p153
      %p156 = scmp.ne.s32.totalorder %s141, %s155
      %p157 = scmp.eq.s32.totalorder %s26, 0
      %p158 = por %p156, %p157
      %s160 = sadd.s32 %s159, 1
      %p163 = scmp.eq.s32.totalorder %s20, 1
      %p164 = scmp.ne.s32.totalorder %s159, %s161
      %p165 = scmp.eq.s32.totalorder %s20, 0
      %p166 = por %p164, %p165
      %p167 = scmp.ne.s32.totalorder %s159, %s161
      %p168 = scmp.eq.s32.totalorder %s25, 1
      %p169 = por %p167, %p168
      %p170 = scmp.ne.s32.totalorder %s161, %s162
      %p171 = scmp.eq.s32.totalorder %s25, 0
      %p172 = por %p170, %p171
      %p173 = scmp.ne.s32.totalorder %s161, %s162
      %p174 = scmp.eq.s32.totalorder %s26, 1
      %p175 = por %p173, %p174
      %p177 = scmp.ne.s32.totalorder %s162, %s176
      %p178 = scmp.eq.s32.totalorder %s26, 0
      %p179 = por %p177, %p178
      %s181 = sadd.s32 %s180, 1
      %p184 = scmp.eq.s32.totalorder %s20, 1
      %p185 = scmp.ne.s32.totalorder %s180, %s182
      %p186 = scmp.eq.s32.totalorder %s20, 0
      %p187 = por %p185, %p186
      %p188 = scmp.ne.s32.totalorder %s180, %s182
      %p189 = scmp.eq.s32.totalorder %s25, 1
      %p190 = por %p188, %p189
      %p191 = scmp.ne.s32.totalorder %s182, %s183
      %p192 = scmp.eq.s32.totalorder %s25, 0
      %p193 = por %p191, %p192
      %p194 = scmp.ne.s32.totalorder %s182, %s183
      %p195 = scmp.eq.s32.totalorder %s26, 1
      %p196 = por %p194, %p195
      %p198 = scmp.ne.s32.totalorder %s183, %s197
      %p199 = scmp.eq.s32.totalorder %s26, 0
      %p200 = por %p198, %p199
      %s202 = sadd.s32 %s201, 1
      %p205 = scmp.eq.s32.totalorder %s20, 1
      %p206 = scmp.ne.s32.totalorder %s201, %s203
      %p207 = scmp.eq.s32.totalorder %s20, 0
      %p208 = por %p206, %p207
      %p209 = scmp.ne.s32.totalorder %s201, %s203
      %p210 = scmp.eq.s32.totalorder %s25, 1
      %p211 = por %p209, %p210
      %p212 = scmp.ne.s32.totalorder %s203, %s204
      %p213 = scmp.eq.s32.totalorder %s25, 0
      %p214 = por %p212, %p213
      %p215 = scmp.ne.s32.totalorder %s203, %s204
      %p216 = scmp.eq.s32.totalorder %s26, 1
      %p217 = por %p215, %p216
      %p219 = scmp.ne.s32.totalorder %s204, %s218
      %p220 = scmp.eq.s32.totalorder %s26, 0
      %p221 = por %p219, %p220
      %s222 = ssub.s32 %s20, %s27
      %p223 = scmp.eq.s32.totalorder %s222, 0
      %s225 = sadd.s32 %s224, 1
      %s226 = scalar_select %p223, %s224, %s225
      %p229 = pneg %p223
      %p230 = scmp.eq.s32.totalorder %s20, 1
      %p231 = por %p229, %p230
      %p232 = scmp.ne.s32.totalorder %s224, %s227
      %p233 = scmp.eq.s32.totalorder %s20, 0
      %p234 = por %p232, %p233
      %p235 = scmp.ne.s32.totalorder %s224, %s227
      %p236 = scmp.eq.s32.totalorder %s25, 1
      %p237 = por %p235, %p236
      %p238 = scmp.ne.s32.totalorder %s227, %s228
      %p239 = scmp.eq.s32.totalorder %s25, 0
      %p240 = por %p238, %p239
      %p241 = scmp.ne.s32.totalorder %s227, %s228
      %p242 = scmp.eq.s32.totalorder %s26, 1
      %p243 = por %p241, %p242
      %p245 = scmp.ne.s32.totalorder %s228, %s244
      %p246 = scmp.eq.s32.totalorder %s26, 0
      %p247 = por %p245, %p246
      %p248 = scmp.le.s32.totalorder 1, %s20
      %p249 = scmp.lt.s32.totalorder %s20, 3
      %p250 = pnand %p248, %p249
      %p251 = pneg %p250
      // Predicated region
      $region9: #{tpu_custom_call.1} parent=5 // pred_check
        _
      $region10: #{tpu_custom_call.1} parent=5 // pred_check_branch
        %253 = sbr.rel (%p250) target = $region12
      $region11: #{tpu_custom_call.1} parent=5 // pred_region
        %s254 = ssub.s32 %s20, 1
        // Predicated region
        $region13: #{tpu_custom_call.1} parent=11 // pred_check
          %p255 = pneg %p67
        $region14: #{tpu_custom_call.1} parent=11 // pred_check_branch
          %257 = sbr.rel (%p255) target = $region16
        $region15: #{tpu_custom_call.1} parent=11 // pred_region
          _
        $region16: #{tpu_custom_call.1} parent=11 // pred_fallthru
          _
        // Predicated region
        $region17: #{tpu_custom_call.1} parent=11 // pred_check
          %p258 = pneg %p88
        $region18: #{tpu_custom_call.1} parent=11 // pred_check_branch
          %260 = sbr.rel (%p258) target = $region20
        $region19: #{tpu_custom_call.1} parent=11 // pred_region
          _
        $region20: #{tpu_custom_call.1} parent=11 // pred_fallthru
          _
        // Predicated region
        $region21: #{tpu_custom_call.1} parent=11 // pred_check
          %p261 = pneg %p109
        $region22: #{tpu_custom_call.1} parent=11 // pred_check_branch
          %263 = sbr.rel (%p261) target = $region24
        $region23: #{tpu_custom_call.1} parent=11 // pred_region
          _
        $region24: #{tpu_custom_call.1} parent=11 // pred_fallthru
          _
        // Predicated region
        $region25: #{tpu_custom_call.1} parent=11 // pred_check
          %p264 = pneg %p130
        $region26: #{tpu_custom_call.1} parent=11 // pred_check_branch
          %266 = sbr.rel (%p264) target = $region28
        $region27: #{tpu_custom_call.1} parent=11 // pred_region
          _
        $region28: #{tpu_custom_call.1} parent=11 // pred_fallthru
          _
        // Predicated region
        $region29: #{tpu_custom_call.1} parent=11 // pred_check
          %p267 = pneg %p151
        $region30: #{tpu_custom_call.1} parent=11 // pred_check_branch
          %269 = sbr.rel (%p267) target = $region32
        $region31: #{tpu_custom_call.1} parent=11 // pred_region
          _
        $region32: #{tpu_custom_call.1} parent=11 // pred_fallthru
          _
        // Predicated region
        $region33: #{tpu_custom_call.1} parent=11 // pred_check
          %p270 = pneg %p172
        $region34: #{tpu_custom_call.1} parent=11 // pred_check_branch
          %272 = sbr.rel (%p270) target = $region36
        $region35: #{tpu_custom_call.1} parent=11 // pred_region
          _
        $region36: #{tpu_custom_call.1} parent=11 // pred_fallthru
          _
        // Predicated region
        $region37: #{tpu_custom_call.1} parent=11 // pred_check
          %p273 = pneg %p193
        $region38: #{tpu_custom_call.1} parent=11 // pred_check_branch
          %275 = sbr.rel (%p273) target = $region40
        $region39: #{tpu_custom_call.1} parent=11 // pred_region
          _
        $region40: #{tpu_custom_call.1} parent=11 // pred_fallthru
          _
        // Predicated region
        $region41: #{tpu_custom_call.1} parent=11 // pred_check
          %p276 = pneg %p214
        $region42: #{tpu_custom_call.1} parent=11 // pred_check_branch
          %278 = sbr.rel (%p276) target = $region44
        $region43: #{tpu_custom_call.1} parent=11 // pred_region
          _
        $region44: #{tpu_custom_call.1} parent=11 // pred_fallthru
          _
      $region12: #{tpu_custom_call.1} parent=5 // pred_fallthru
        _
      %p279 = scmp.lt.s32.totalorder %s20, 2
      // Predicated region
      $region45: #{tpu_custom_call.1} parent=5 // pred_check
        %p280 = pneg %p279
      $region46: #{tpu_custom_call.1} parent=5 // pred_check_branch
        %282 = sbr.rel (%p280) target = $region48
      $region47: #{tpu_custom_call.1} parent=5 // pred_region
        // Predicated region
        $region49: #{tpu_custom_call.1} parent=47 // pred_check
          %p283 = pneg %p40
        $region50: #{tpu_custom_call.1} parent=47 // pred_check_branch
          %285 = sbr.rel (%p283) target = $region52
        $region51: #{tpu_custom_call.1} parent=47 // pred_region
          %s286 = sand.u32 %s30, 1
          %s287 = sand.u32 %s30, 1
          %s288 = smul.addr %s287, 128
          %s289 = scalar_lea.vmem [#allocation3], %s288
          %s290 = smul.u32 2, %s20
          %s291 = smul.addr %s290, 4
          %s292 = scalar_lea.vmem %s0, %s291
          // Predicated region
          $region53: #{tpu_custom_call.1} parent=51 // pred_check
            _
          $region54: #{tpu_custom_call.1} parent=51 // pred_check_branch
            %294 = sbr.rel (0) target = $region56
          $region55: #{tpu_custom_call.1} parent=51 // pred_region
            // Predicated region
            $region57: #{tpu_custom_call.1} parent=55 // pred_check
              _
            $region58: #{tpu_custom_call.1} parent=55 // pred_check_branch
              %296 = sbr.rel (0) target = $region60
            $region59: #{tpu_custom_call.1} parent=55 // pred_region
              // Predicated region
              $region72: #{tpu_custom_call.1} parent=59 // pred_check
                _
              $region73: #{tpu_custom_call.1} parent=59 // pred_check_branch
                %341 = sbr.rel (0) target = $region75
              $region74: #{tpu_custom_call.1} parent=59 // pred_region
                loop: start=0, step=1, limit=1
                $region76: #{tpu_custom_call.1} parent=74 // loop_pre_header
                  _
                $region77: #{tpu_custom_call.1} parent=74 // loop_header
                  %s343 = sphi 0, %s347
                  %p344 = scmp.ge.s32.totalorder %s343, 1
                  %s348 = sphi %s292, %s292
                  %s349 = sphi %s289, %s289
                $region78: #{tpu_custom_call.1} parent=74 // loop_header_branch
                  %346 = sbr.rel (%p344) target = $region82
                $region79: #{tpu_custom_call.1} parent=74 // loop_body
                  %v350 = vld [vmem:[%s348] sm:$0xff]
                  %351 = vst [vmem:[%s349] sm:$0xff] %v350
                  %v352 = vld [vmem:[%s348 + $0x10] sm:$0xff]
                  %353 = vst [vmem:[%s349 + $0x8] sm:$0xff] %v352
                  %v354 = vld [vmem:[%s348 + $0x20] sm:$0xff]
                  %355 = vst [vmem:[%s349 + $0x10] sm:$0xff] %v354
                  %v356 = vld [vmem:[%s348 + $0x30] sm:$0xff]
                  %357 = vst [vmem:[%s349 + $0x18] sm:$0xff] %v356
                  %v358 = vld [vmem:[%s348 + $0x40] sm:$0xff]
                  %359 = vst [vmem:[%s349 + $0x20] sm:$0xff] %v358
                  %v360 = vld [vmem:[%s348 + $0x50] sm:$0xff]
                  %361 = vst [vmem:[%s349 + $0x28] sm:$0xff] %v360
                  %v362 = vld [vmem:[%s348 + $0x60] sm:$0xff]
                  %363 = vst [vmem:[%s349 + $0x30] sm:$0xff] %v362
                  %v364 = vld [vmem:[%s348 + $0x70] sm:$0xff]
                  %365 = vst [vmem:[%s349 + $0x38] sm:$0xff] %v364
                  %v366 = vld [vmem:[%s348 + $0x80] sm:$0xff]
                  %367 = vst [vmem:[%s349 + $0x40] sm:$0xff] %v366
                  %v368 = vld [vmem:[%s348 + $0x90] sm:$0xff]
                  %369 = vst [vmem:[%s349 + $0x48] sm:$0xff] %v368
                  %v370 = vld [vmem:[%s348 + $0xa0] sm:$0xff]
                  %371 = vst [vmem:[%s349 + $0x50] sm:$0xff] %v370
                  %v372 = vld [vmem:[%s348 + $0xb0] sm:$0xff]
                  %373 = vst [vmem:[%s349 + $0x58] sm:$0xff] %v372
                  %v374 = vld [vmem:[%s348 + $0xc0] sm:$0xff]
                  %375 = vst [vmem:[%s349 + $0x60] sm:$0xff] %v374
                  %v376 = vld [vmem:[%s348 + $0xd0] sm:$0xff]
                  %377 = vst [vmem:[%s349 + $0x68] sm:$0xff] %v376
                  %v378 = vld [vmem:[%s348 + $0xe0] sm:$0xff]
                  %379 = vst [vmem:[%s349 + $0x70] sm:$0xff] %v378
                  %v380 = vld [vmem:[%s348 + $0xf0] sm:$0xff]
                  %381 = vst [vmem:[%s349 + $0x78] sm:$0xff] %v380
                $region80: #{tpu_custom_call.1} parent=74 // loop_footer
                  %s347 = sadd.s32 1, %s343
                $region81: #{tpu_custom_call.1} parent=74 // loop_footer_branch
                  %342 = sbr.rel target = $region77
                $region82: #{tpu_custom_call.1} parent=74 // loop_exit
                  _
              $region75: #{tpu_custom_call.1} parent=59 // pred_fallthru
                _
              // Predicated region
              $region83: #{tpu_custom_call.1} parent=59 // pred_check
                _
              $region84: #{tpu_custom_call.1} parent=59 // pred_check_branch
                %383 = sbr.rel target = $region86
              $region85: #{tpu_custom_call.1} parent=59 // pred_region
                _
              $region86: #{tpu_custom_call.1} parent=59 // pred_fallthru
                _
            $region60: #{tpu_custom_call.1} parent=55 // pred_fallthru
              _
            // Predicated region
            $region61: #{tpu_custom_call.1} parent=55 // pred_check
              _
            $region62: #{tpu_custom_call.1} parent=55 // pred_check_branch
              %298 = sbr.rel target = $region64
            $region63: #{tpu_custom_call.1} parent=55 // pred_region
              loop: start=0, step=1, limit=1
              $region65: #{tpu_custom_call.1} parent=63 // loop_pre_header
                _
              $region66: #{tpu_custom_call.1} parent=63 // loop_header
                %s301 = sphi 0, %s305
                %p302 = scmp.ge.s32.totalorder %s301, 1
                %s306 = sphi %s292, %s292
                %s307 = sphi %s289, %s289
              $region67: #{tpu_custom_call.1} parent=63 // loop_header_branch
                %304 = sbr.rel (%p302) target = $region71
              $region68: #{tpu_custom_call.1} parent=63 // loop_body
                %v308 = vld [vmem:[%s306] sm:$0xff]
                %309 = vst [vmem:[%s307] sm:$0xff] %v308
                %v310 = vld [vmem:[%s306 + $0x10] sm:$0xff]
                %311 = vst [vmem:[%s307 + $0x8] sm:$0xff] %v310
                %v312 = vld [vmem:[%s306 + $0x20] sm:$0xff]
                %313 = vst [vmem:[%s307 + $0x10] sm:$0xff] %v312
                %v314 = vld [vmem:[%s306 + $0x30] sm:$0xff]
                %315 = vst [vmem:[%s307 + $0x18] sm:$0xff] %v314
                %v316 = vld [vmem:[%s306 + $0x40] sm:$0xff]
                %317 = vst [vmem:[%s307 + $0x20] sm:$0xff] %v316
                %v318 = vld [vmem:[%s306 + $0x50] sm:$0xff]
                %319 = vst [vmem:[%s307 + $0x28] sm:$0xff] %v318
                %v320 = vld [vmem:[%s306 + $0x60] sm:$0xff]
                %321 = vst [vmem:[%s307 + $0x30] sm:$0xff] %v320
                %v322 = vld [vmem:[%s306 + $0x70] sm:$0xff]
                %323 = vst [vmem:[%s307 + $0x38] sm:$0xff] %v322
                %v324 = vld [vmem:[%s306 + $0x80] sm:$0xff]
                %325 = vst [vmem:[%s307 + $0x40] sm:$0xff] %v324
                %v326 = vld [vmem:[%s306 + $0x90] sm:$0xff]
                %327 = vst [vmem:[%s307 + $0x48] sm:$0xff] %v326
                %v328 = vld [vmem:[%s306 + $0xa0] sm:$0xff]
                %329 = vst [vmem:[%s307 + $0x50] sm:$0xff] %v328
                %v330 = vld [vmem:[%s306 + $0xb0] sm:$0xff]
                %331 = vst [vmem:[%s307 + $0x58] sm:$0xff] %v330
                %v332 = vld [vmem:[%s306 + $0xc0] sm:$0xff]
                %333 = vst [vmem:[%s307 + $0x60] sm:$0xff] %v332
                %v334 = vld [vmem:[%s306 + $0xd0] sm:$0xff]
                %335 = vst [vmem:[%s307 + $0x68] sm:$0xff] %v334
                %v336 = vld [vmem:[%s306 + $0xe0] sm:$0xff]
                %337 = vst [vmem:[%s307 + $0x70] sm:$0xff] %v336
                %v338 = vld [vmem:[%s306 + $0xf0] sm:$0xff]
                %339 = vst [vmem:[%s307 + $0x78] sm:$0xff] %v338
              $region69: #{tpu_custom_call.1} parent=63 // loop_footer
                %s305 = sadd.s32 1, %s301
              $region70: #{tpu_custom_call.1} parent=63 // loop_footer_branch
                %300 = sbr.rel target = $region66
              $region71: #{tpu_custom_call.1} parent=63 // loop_exit
                _
            $region64: #{tpu_custom_call.1} parent=55 // pred_fallthru
              _
          $region56: #{tpu_custom_call.1} parent=51 // pred_fallthru
            _
          %384 = vnop
        $region52: #{tpu_custom_call.1} parent=47 // pred_fallthru
          _
      $region48: #{tpu_custom_call.1} parent=5 // pred_fallthru
        _
      %p385 = scmp.le.s32.totalorder 1, %s20
      %p386 = scmp.lt.s32.totalorder %s20, 3
      %p387 = pnand %p385, %p386
      %p388 = pneg %p387
      // Predicated region
      $region87: #{tpu_custom_call.1} parent=5 // pred_check
        _
      $region88: #{tpu_custom_call.1} parent=5 // pred_check_branch
        %390 = sbr.rel (%p387) target = $region90
      $region89: #{tpu_custom_call.1} parent=5 // pred_region
        %s391 = ssub.s32 %s20, 1
        %s392 = sand.u32 %s33, 1
        %s393 = sand.u32 %s33, 1
        %s394 = smul.addr %s393, 128
        %s395 = scalar_lea.vmem [#allocation3], %s394
        // Predicated region
        $region91: #{tpu_custom_call.1} parent=89 // pred_check
          %p396 = pneg %p46
        $region92: #{tpu_custom_call.1} parent=89 // pred_check_branch
          %398 = sbr.rel (%p396) target = $region94
        $region93: #{tpu_custom_call.1} parent=89 // pred_region
          _
        $region94: #{tpu_custom_call.1} parent=89 // pred_fallthru
          _
        %s399 = sand.u32 %s33, 1
        %s400 = sand.u32 %s33, 1
        %s401 = smul.addr %s400, 128
        %s402 = scalar_lea.vmem [#allocation3], %s401
        %p403 = pneg %p46
        %p404 = pneg %p43
        %p405 = pneg %p67
        %p406 = pneg %p64
        %p407 = pneg %p88
        %p408 = pneg %p85
        %p409 = pneg %p109
        %p410 = pneg %p106
        %p411 = pneg %p130
        %p412 = pneg %p127
        %p413 = pneg %p151
        %p414 = pneg %p148
        %p415 = pneg %p172
        %p416 = pneg %p169
        %p417 = pneg %p193
        %p418 = pneg %p190
        %p419 = pneg %p214
        %p420 = pneg %p211
        %p421 = pneg %p240
        %p422 = pneg %p237
        %s423 = sand.u32 %s227, 1
        %s424 = scalar_lea.sflag [#allocation5], %s423
        %s425 = sand.u32 %s227, 1
        %s426 = smul.addr %s425, 2
        %s427 = scalar_lea.vmem [#allocation4], %s426
        %s428 = smul.u32 2, %s25
        %s429 = smul.u32 2, %s25
        %v431 = vld [vmem:[%s395] sm:$0xff]
        %v432 = vld [vmem:[%s395 + $0x8] sm:$0xff]
        %v433 = vld [vmem:[%s395 + $0x10] sm:$0xff]
        %v434 = vld [vmem:[%s395 + $0x18] sm:$0xff]
        %v435 = vld [vmem:[%s395 + $0x20] sm:$0xff]
        %v436 = vld [vmem:[%s395 + $0x28] sm:$0xff]
        %v437 = vld [vmem:[%s395 + $0x30] sm:$0xff]
        %v438 = vld [vmem:[%s395 + $0x38] sm:$0xff]
        %v439 = vld [vmem:[%s395 + $0x40] sm:$0xff]
        %v440 = vld [vmem:[%s395 + $0x48] sm:$0xff]
        %v441 = vld [vmem:[%s395 + $0x50] sm:$0xff]
        %v442 = vld [vmem:[%s395 + $0x58] sm:$0xff]
        %v443 = vld [vmem:[%s395 + $0x60] sm:$0xff]
        %v444 = vld [vmem:[%s395 + $0x68] sm:$0xff]
        %v445 = vld [vmem:[%s395 + $0x70] sm:$0xff]
        %v446 = vld [vmem:[%s395 + $0x78] sm:$0xff]
        %v447 = vld [vmem:[%s1] sm:$0xf]
        %v448 = vld [vmem:[%s1 + $0x4] sm:$0xf]
        %v449 = vld [vmem:[%s1 + $0x8] sm:$0xf]
        %v450 = vld [vmem:[%s1 + $0xc] sm:$0xf]
        %v451 = vld [vmem:[%s1 + $0x10] sm:$0xf]
        %v452 = vld [vmem:[%s1 + $0x14] sm:$0xf]
        %v453 = vld [vmem:[%s1 + $0x18] sm:$0xf]
        %v454 = vld [vmem:[%s1 + $0x1c] sm:$0xf]
        %v455 = vld [vmem:[%s1 + $0x20] sm:$0xf]
        %v456 = vld [vmem:[%s1 + $0x24] sm:$0xf]
        %v457 = vld [vmem:[%s1 + $0x28] sm:$0xf]
        %v458 = vld [vmem:[%s1 + $0x2c] sm:$0xf]
        %v459 = vld [vmem:[%s1 + $0x30] sm:$0xf]
        %v460 = vld [vmem:[%s1 + $0x34] sm:$0xf]
        %v461 = vld [vmem:[%s1 + $0x38] sm:$0xf]
        %v462 = vld [vmem:[%s1 + $0x3c] sm:$0xf]
        %v463 = vld [vmem:[%s1 + $0x40] sm:$0xf]
        %v464 = vld [vmem:[%s1 + $0x44] sm:$0xf]
        %v465 = vld [vmem:[%s1 + $0x48] sm:$0xf]
        %v466 = vld [vmem:[%s1 + $0x4c] sm:$0xf]
        %v467 = vld [vmem:[%s1 + $0x50] sm:$0xf]
        %v468 = vld [vmem:[%s1 + $0x54] sm:$0xf]
        %v469 = vld [vmem:[%s1 + $0x58] sm:$0xf]
        %v470 = vld [vmem:[%s1 + $0x5c] sm:$0xf]
        %v471 = vld [vmem:[%s1 + $0x60] sm:$0xf]
        %v472 = vld [vmem:[%s1 + $0x64] sm:$0xf]
        %v473 = vld [vmem:[%s1 + $0x68] sm:$0xf]
        %v474 = vld [vmem:[%s1 + $0x6c] sm:$0xf]
        %v475 = vld [vmem:[%s1 + $0x70] sm:$0xf]
        %v476 = vld [vmem:[%s1 + $0x74] sm:$0xf]
        %v477 = vld [vmem:[%s1 + $0x78] sm:$0xf]
        %v478 = vld [vmem:[%s1 + $0x7c] sm:$0xf]
        %v479 = vld [vmem:[%s1 + $0x80] sm:$0xf]
        %v480 = vld [vmem:[%s1 + $0x84] sm:$0xf]
        %v481 = vld [vmem:[%s1 + $0x88] sm:$0xf]
        %v482 = vld [vmem:[%s1 + $0x8c] sm:$0xf]
        %v483 = vld [vmem:[%s1 + $0x90] sm:$0xf]
        %v484 = vld [vmem:[%s1 + $0x94] sm:$0xf]
        %v485 = vld [vmem:[%s1 + $0x98] sm:$0xf]
        %v486 = vld [vmem:[%s1 + $0x9c] sm:$0xf]
        %v487 = vld [vmem:[%s1 + $0xa0] sm:$0xf]
        %v488 = vld [vmem:[%s1 + $0xa4] sm:$0xf]
        %v489 = vld [vmem:[%s1 + $0xa8] sm:$0xf]
        %v490 = vld [vmem:[%s1 + $0xac] sm:$0xf]
        %v491 = vld [vmem:[%s1 + $0xb0] sm:$0xf]
        %v492 = vld [vmem:[%s1 + $0xb4] sm:$0xf]
        %v493 = vld [vmem:[%s1 + $0xb8] sm:$0xf]
        %v494 = vld [vmem:[%s1 + $0xbc] sm:$0xf]
        %v495 = vld [vmem:[%s1 + $0xc0] sm:$0xf]
        %v496 = vld [vmem:[%s1 + $0xc4] sm:$0xf]
        %v497 = vld [vmem:[%s1 + $0xc8] sm:$0xf]
        %v498 = vld [vmem:[%s1 + $0xcc] sm:$0xf]
        %v499 = vld [vmem:[%s1 + $0xd0] sm:$0xf]
        %v500 = vld [vmem:[%s1 + $0xd4] sm:$0xf]
        %v501 = vld [vmem:[%s1 + $0xd8] sm:$0xf]
        %v502 = vld [vmem:[%s1 + $0xdc] sm:$0xf]
        %v503 = vld [vmem:[%s1 + $0xe0] sm:$0xf]
        %v504 = vld [vmem:[%s1 + $0xe4] sm:$0xf]
        %v505 = vld [vmem:[%s1 + $0xe8] sm:$0xf]
        %v506 = vld [vmem:[%s1 + $0xec] sm:$0xf]
        %v507 = vld [vmem:[%s1 + $0xf0] sm:$0xf]
        %v508 = vld [vmem:[%s1 + $0xf4] sm:$0xf]
        %v509 = vld [vmem:[%s1 + $0xf8] sm:$0xf]
        %v510 = vld [vmem:[%s1 + $0xfc] sm:$0xf]
        %v511 = vld [vmem:[%s1 + $0x100] sm:$0xf]
        %v512 = vld [vmem:[%s1 + $0x104] sm:$0xf]
        %v513 = vld [vmem:[%s1 + $0x108] sm:$0xf]
        %v514 = vld [vmem:[%s1 + $0x10c] sm:$0xf]
        %v515 = vld [vmem:[%s1 + $0x110] sm:$0xf]
        %v516 = vld [vmem:[%s1 + $0x114] sm:$0xf]
        %v517 = vld [vmem:[%s1 + $0x118] sm:$0xf]
        %v518 = vld [vmem:[%s1 + $0x11c] sm:$0xf]
        %v519 = vld [vmem:[%s1 + $0x120] sm:$0xf]
        %v520 = vld [vmem:[%s1 + $0x124] sm:$0xf]
        %v521 = vld [vmem:[%s1 + $0x128] sm:$0xf]
        %v522 = vld [vmem:[%s1 + $0x12c] sm:$0xf]
        %v523 = vld [vmem:[%s1 + $0x130] sm:$0xf]
        %v524 = vld [vmem:[%s1 + $0x134] sm:$0xf]
        %v525 = vld [vmem:[%s1 + $0x138] sm:$0xf]
        %v526 = vld [vmem:[%s1 + $0x13c] sm:$0xf]
        %v527 = vld [vmem:[%s1 + $0x140] sm:$0xf]
        %v528 = vld [vmem:[%s1 + $0x144] sm:$0xf]
        %v529 = vld [vmem:[%s1 + $0x148] sm:$0xf]
        %v530 = vld [vmem:[%s1 + $0x14c] sm:$0xf]
        %v531 = vld [vmem:[%s1 + $0x150] sm:$0xf]
        %v532 = vld [vmem:[%s1 + $0x154] sm:$0xf]
        %v533 = vld [vmem:[%s1 + $0x158] sm:$0xf]
        %v534 = vld [vmem:[%s1 + $0x15c] sm:$0xf]
        %v535 = vld [vmem:[%s1 + $0x160] sm:$0xf]
        %v536 = vld [vmem:[%s1 + $0x164] sm:$0xf]
        %v537 = vld [vmem:[%s1 + $0x168] sm:$0xf]
        %v538 = vld [vmem:[%s1 + $0x16c] sm:$0xf]
        %v539 = vld [vmem:[%s1 + $0x170] sm:$0xf]
        %v540 = vld [vmem:[%s1 + $0x174] sm:$0xf]
        %v541 = vld [vmem:[%s1 + $0x178] sm:$0xf]
        %v542 = vld [vmem:[%s1 + $0x17c] sm:$0xf]
        %v543 = vld [vmem:[%s2] sm:$0xff]
        %v544 = vld [vmem:[%s2 + $0x8] sm:$0xff]
        %v545 = vld [vmem:[%s2 + $0x10] sm:$0xff]
        %v546 = vld [vmem:[%s2 + $0x18] sm:$0xff]
        %v547 = vld [vmem:[%s2 + $0x20] sm:$0xff]
        %v548 = vld [vmem:[%s2 + $0x28] sm:$0xff]
        %v549 = vld [vmem:[%s2 + $0x30] sm:$0xff]
        %v550 = vld [vmem:[%s2 + $0x38] sm:$0xff]
        %v551 = vld [vmem:[%s2 + $0x40] sm:$0xff]
        %v552 = vld [vmem:[%s2 + $0x48] sm:$0xff]
        %v553 = vld [vmem:[%s2 + $0x50] sm:$0xff]
        %v554 = vld [vmem:[%s2 + $0x58] sm:$0xff]
        %v555 = vld [vmem:[%s2 + $0x60] sm:$0xff]
        %v556 = vld [vmem:[%s2 + $0x68] sm:$0xff]
        %v557 = vld [vmem:[%s2 + $0x70] sm:$0xff]
        %v558 = vld [vmem:[%s2 + $0x78] sm:$0xff]
        %v559 = vld [vmem:[%s2 + $0x80] sm:$0xff]
        %v560 = vld [vmem:[%s2 + $0x88] sm:$0xff]
        %v561 = vld [vmem:[%s2 + $0x90] sm:$0xff]
        %v562 = vld [vmem:[%s2 + $0x98] sm:$0xff]
        %v563 = vld [vmem:[%s2 + $0xa0] sm:$0xff]
        %v564 = vld [vmem:[%s2 + $0xa8] sm:$0xff]
        %v565 = vld [vmem:[%s2 + $0xb0] sm:$0xff]
        %v566 = vld [vmem:[%s2 + $0xb8] sm:$0xff]
        %v567 = vld [vmem:[%s2 + $0xc0] sm:$0xff]
        %v568 = vld [vmem:[%s2 + $0xc8] sm:$0xff]
        %v569 = vld [vmem:[%s2 + $0xd0] sm:$0xff]
        %v570 = vld [vmem:[%s2 + $0xd8] sm:$0xff]
        %v571 = vld [vmem:[%s2 + $0xe0] sm:$0xff]
        %v572 = vld [vmem:[%s2 + $0xe8] sm:$0xff]
        %v573 = vld [vmem:[%s2 + $0xf0] sm:$0xff]
        %v574 = vld [vmem:[%s2 + $0xf8] sm:$0xff]
        %v575 = vld [vmem:[%s2 + $0x100] sm:$0xff]
        %v576 = vld [vmem:[%s2 + $0x108] sm:$0xff]
        %v577 = vld [vmem:[%s2 + $0x110] sm:$0xff]
        %v578 = vld [vmem:[%s2 + $0x118] sm:$0xff]
        %v579 = vld [vmem:[%s2 + $0x120] sm:$0xff]
        %v580 = vld [vmem:[%s2 + $0x128] sm:$0xff]
        %v581 = vld [vmem:[%s2 + $0x130] sm:$0xff]
        %v582 = vld [vmem:[%s2 + $0x138] sm:$0xff]
        %v583 = vld [vmem:[%s2 + $0x140] sm:$0xff]
        %v584 = vld [vmem:[%s2 + $0x148] sm:$0xff]
        %v585 = vld [vmem:[%s2 + $0x150] sm:$0xff]
        %v586 = vld [vmem:[%s2 + $0x158] sm:$0xff]
        %v587 = vld [vmem:[%s2 + $0x160] sm:$0xff]
        %v588 = vld [vmem:[%s2 + $0x168] sm:$0xff]
        %v589 = vld [vmem:[%s2 + $0x170] sm:$0xff]
        %v590 = vld [vmem:[%s2 + $0x178] sm:$0xff]
        %v591 = vld [vmem:[%s2 + $0x180] sm:$0xff]
        %v592 = vld [vmem:[%s2 + $0x188] sm:$0xff]
        %v593 = vld [vmem:[%s2 + $0x190] sm:$0xff]
        %v594 = vld [vmem:[%s2 + $0x198] sm:$0xff]
        %v595 = vld [vmem:[%s2 + $0x1a0] sm:$0xff]
        %v596 = vld [vmem:[%s2 + $0x1a8] sm:$0xff]
        %v597 = vld [vmem:[%s2 + $0x1b0] sm:$0xff]
        %v598 = vld [vmem:[%s2 + $0x1b8] sm:$0xff]
        %v599 = vld [vmem:[%s2 + $0x1c0] sm:$0xff]
        %v600 = vld [vmem:[%s2 + $0x1c8] sm:$0xff]
        %v601 = vld [vmem:[%s2 + $0x1d0] sm:$0xff]
        %v602 = vld [vmem:[%s2 + $0x1d8] sm:$0xff]
        %v603 = vld [vmem:[%s2 + $0x1e0] sm:$0xff]
        %v604 = vld [vmem:[%s2 + $0x1e8] sm:$0xff]
        %v605 = vld [vmem:[%s2 + $0x1f0] sm:$0xff]
        %v606 = vld [vmem:[%s2 + $0x1f8] sm:$0xff]
        %v607 = vld [vmem:[%s2 + $0x200] sm:$0xff]
        %v608 = vld [vmem:[%s2 + $0x208] sm:$0xff]
        %v609 = vld [vmem:[%s2 + $0x210] sm:$0xff]
        %v610 = vld [vmem:[%s2 + $0x218] sm:$0xff]
        %v611 = vld [vmem:[%s2 + $0x220] sm:$0xff]
        %v612 = vld [vmem:[%s2 + $0x228] sm:$0xff]
        %v613 = vld [vmem:[%s2 + $0x230] sm:$0xff]
        %v614 = vld [vmem:[%s2 + $0x238] sm:$0xff]
        %v615 = vld [vmem:[%s2 + $0x240] sm:$0xff]
        %v616 = vld [vmem:[%s2 + $0x248] sm:$0xff]
        %v617 = vld [vmem:[%s2 + $0x250] sm:$0xff]
        %v618 = vld [vmem:[%s2 + $0x258] sm:$0xff]
        %v619 = vld [vmem:[%s2 + $0x260] sm:$0xff]
        %v620 = vld [vmem:[%s2 + $0x268] sm:$0xff]
        %v621 = vld [vmem:[%s2 + $0x270] sm:$0xff]
        %v622 = vld [vmem:[%s2 + $0x278] sm:$0xff]
        %v623 = vld [vmem:[%s2 + $0x280] sm:$0xff]
        %v624 = vld [vmem:[%s2 + $0x288] sm:$0xff]
        %v625 = vld [vmem:[%s2 + $0x290] sm:$0xff]
        %v626 = vld [vmem:[%s2 + $0x298] sm:$0xff]
        %v627 = vld [vmem:[%s2 + $0x2a0] sm:$0xff]
        %v628 = vld [vmem:[%s2 + $0x2a8] sm:$0xff]
        %v629 = vld [vmem:[%s2 + $0x2b0] sm:$0xff]
        %v630 = vld [vmem:[%s2 + $0x2b8] sm:$0xff]
        %v631 = vld [vmem:[%s2 + $0x2c0] sm:$0xff]
        %v632 = vld [vmem:[%s2 + $0x2c8] sm:$0xff]
        %v633 = vld [vmem:[%s2 + $0x2d0] sm:$0xff]
        %v634 = vld [vmem:[%s2 + $0x2d8] sm:$0xff]
        %v635 = vld [vmem:[%s2 + $0x2e0] sm:$0xff]
        %v636 = vld [vmem:[%s2 + $0x2e8] sm:$0xff]
        %v637 = vld [vmem:[%s2 + $0x2f0] sm:$0xff]
        %v638 = vld [vmem:[%s2 + $0x2f8] sm:$0xff]
        %640 = vset.pattern.permute.xlu0 0
        %641 = vperm.xlu0 %640, %v543
        %v642 = vpop.permute.xlu0 %641
        %645 = vset.pattern.permute.xlu0 0
        %646 = vperm.xlu0 %645, %v544
        %v647 = vpop.permute.xlu0 %646
        %650 = vset.pattern.permute.xlu0 0
        %651 = vperm.xlu0 %650, %v545
        %v652 = vpop.permute.xlu0 %651
        %655 = vset.pattern.permute.xlu0 0
        %656 = vperm.xlu0 %655, %v546
        %v657 = vpop.permute.xlu0 %656
        %660 = vset.pattern.permute.xlu0 0
        %661 = vperm.xlu0 %660, %v547
        %v662 = vpop.permute.xlu0 %661
        %665 = vset.pattern.permute.xlu0 0
        %666 = vperm.xlu0 %665, %v548
        %v667 = vpop.permute.xlu0 %666
        %670 = vset.pattern.permute.xlu0 0
        %671 = vperm.xlu0 %670, %v549
        %v672 = vpop.permute.xlu0 %671
        %675 = vset.pattern.permute.xlu0 0
        %676 = vperm.xlu0 %675, %v550
        %v677 = vpop.permute.xlu0 %676
        %680 = vset.pattern.permute.xlu0 0
        %681 = vperm.xlu0 %680, %v551
        %v682 = vpop.permute.xlu0 %681
        %685 = vset.pattern.permute.xlu0 0
        %686 = vperm.xlu0 %685, %v552
        %v687 = vpop.permute.xlu0 %686
        %690 = vset.pattern.permute.xlu0 0
        %691 = vperm.xlu0 %690, %v553
        %v692 = vpop.permute.xlu0 %691
        %695 = vset.pattern.permute.xlu0 0
        %696 = vperm.xlu0 %695, %v554
        %v697 = vpop.permute.xlu0 %696
        %700 = vset.pattern.permute.xlu0 0
        %701 = vperm.xlu0 %700, %v555
        %v702 = vpop.permute.xlu0 %701
        %705 = vset.pattern.permute.xlu0 0
        %706 = vperm.xlu0 %705, %v556
        %v707 = vpop.permute.xlu0 %706
        %710 = vset.pattern.permute.xlu0 0
        %711 = vperm.xlu0 %710, %v557
        %v712 = vpop.permute.xlu0 %711
        %715 = vset.pattern.permute.xlu0 0
        %716 = vperm.xlu0 %715, %v558
        %v717 = vpop.permute.xlu0 %716
        %720 = vset.pattern.permute.xlu0 0
        %721 = vperm.xlu0 %720, %v559
        %v722 = vpop.permute.xlu0 %721
        %725 = vset.pattern.permute.xlu0 0
        %726 = vperm.xlu0 %725, %v560
        %v727 = vpop.permute.xlu0 %726
        %730 = vset.pattern.permute.xlu0 0
        %731 = vperm.xlu0 %730, %v561
        %v732 = vpop.permute.xlu0 %731
        %735 = vset.pattern.permute.xlu0 0
        %736 = vperm.xlu0 %735, %v562
        %v737 = vpop.permute.xlu0 %736
        %740 = vset.pattern.permute.xlu0 0
        %741 = vperm.xlu0 %740, %v563
        %v742 = vpop.permute.xlu0 %741
        %745 = vset.pattern.permute.xlu0 0
        %746 = vperm.xlu0 %745, %v564
        %v747 = vpop.permute.xlu0 %746
        %750 = vset.pattern.permute.xlu0 0
        %751 = vperm.xlu0 %750, %v565
        %v752 = vpop.permute.xlu0 %751
        %755 = vset.pattern.permute.xlu0 0
        %756 = vperm.xlu0 %755, %v566
        %v757 = vpop.permute.xlu0 %756
        %760 = vset.pattern.permute.xlu0 0
        %761 = vperm.xlu0 %760, %v567
        %v762 = vpop.permute.xlu0 %761
        %765 = vset.pattern.permute.xlu0 0
        %766 = vperm.xlu0 %765, %v568
        %v767 = vpop.permute.xlu0 %766
        %770 = vset.pattern.permute.xlu0 0
        %771 = vperm.xlu0 %770, %v569
        %v772 = vpop.permute.xlu0 %771
        %775 = vset.pattern.permute.xlu0 0
        %776 = vperm.xlu0 %775, %v570
        %v777 = vpop.permute.xlu0 %776
        %780 = vset.pattern.permute.xlu0 0
        %781 = vperm.xlu0 %780, %v571
        %v782 = vpop.permute.xlu0 %781
        %785 = vset.pattern.permute.xlu0 0
        %786 = vperm.xlu0 %785, %v572
        %v787 = vpop.permute.xlu0 %786
        %790 = vset.pattern.permute.xlu0 0
        %791 = vperm.xlu0 %790, %v573
        %v792 = vpop.permute.xlu0 %791
        %795 = vset.pattern.permute.xlu0 0
        %796 = vperm.xlu0 %795, %v574
        %v797 = vpop.permute.xlu0 %796
        %800 = vset.pattern.permute.xlu0 0
        %801 = vperm.xlu0 %800, %v575
        %v802 = vpop.permute.xlu0 %801
        %805 = vset.pattern.permute.xlu0 0
        %806 = vperm.xlu0 %805, %v576
        %v807 = vpop.permute.xlu0 %806
        %810 = vset.pattern.permute.xlu0 0
        %811 = vperm.xlu0 %810, %v577
        %v812 = vpop.permute.xlu0 %811
        %815 = vset.pattern.permute.xlu0 0
        %816 = vperm.xlu0 %815, %v578
        %v817 = vpop.permute.xlu0 %816
        %820 = vset.pattern.permute.xlu0 0
        %821 = vperm.xlu0 %820, %v579
        %v822 = vpop.permute.xlu0 %821
        %825 = vset.pattern.permute.xlu0 0
        %826 = vperm.xlu0 %825, %v580
        %v827 = vpop.permute.xlu0 %826
        %830 = vset.pattern.permute.xlu0 0
        %831 = vperm.xlu0 %830, %v581
        %v832 = vpop.permute.xlu0 %831
        %835 = vset.pattern.permute.xlu0 0
        %836 = vperm.xlu0 %835, %v582
        %v837 = vpop.permute.xlu0 %836
        %840 = vset.pattern.permute.xlu0 0
        %841 = vperm.xlu0 %840, %v583
        %v842 = vpop.permute.xlu0 %841
        %845 = vset.pattern.permute.xlu0 0
        %846 = vperm.xlu0 %845, %v584
        %v847 = vpop.permute.xlu0 %846
        %850 = vset.pattern.permute.xlu0 0
        %851 = vperm.xlu0 %850, %v585
        %v852 = vpop.permute.xlu0 %851
        %855 = vset.pattern.permute.xlu0 0
        %856 = vperm.xlu0 %855, %v586
        %v857 = vpop.permute.xlu0 %856
        %860 = vset.pattern.permute.xlu0 0
        %861 = vperm.xlu0 %860, %v587
        %v862 = vpop.permute.xlu0 %861
        %865 = vset.pattern.permute.xlu0 0
        %866 = vperm.xlu0 %865, %v588
        %v867 = vpop.permute.xlu0 %866
        %870 = vset.pattern.permute.xlu0 0
        %871 = vperm.xlu0 %870, %v589
        %v872 = vpop.permute.xlu0 %871
        %875 = vset.pattern.permute.xlu0 0
        %876 = vperm.xlu0 %875, %v590
        %v877 = vpop.permute.xlu0 %876
        %880 = vset.pattern.permute.xlu0 0
        %881 = vperm.xlu0 %880, %v591
        %v882 = vpop.permute.xlu0 %881
        %885 = vset.pattern.permute.xlu0 0
        %886 = vperm.xlu0 %885, %v592
        %v887 = vpop.permute.xlu0 %886
        %890 = vset.pattern.permute.xlu0 0
        %891 = vperm.xlu0 %890, %v593
        %v892 = vpop.permute.xlu0 %891
        %895 = vset.pattern.permute.xlu0 0
        %896 = vperm.xlu0 %895, %v594
        %v897 = vpop.permute.xlu0 %896
        %900 = vset.pattern.permute.xlu0 0
        %901 = vperm.xlu0 %900, %v595
        %v902 = vpop.permute.xlu0 %901
        %905 = vset.pattern.permute.xlu0 0
        %906 = vperm.xlu0 %905, %v596
        %v907 = vpop.permute.xlu0 %906
        %910 = vset.pattern.permute.xlu0 0
        %911 = vperm.xlu0 %910, %v597
        %v912 = vpop.permute.xlu0 %911
        %915 = vset.pattern.permute.xlu0 0
        %916 = vperm.xlu0 %915, %v598
        %v917 = vpop.permute.xlu0 %916
        %920 = vset.pattern.permute.xlu0 0
        %921 = vperm.xlu0 %920, %v599
        %v922 = vpop.permute.xlu0 %921
        %925 = vset.pattern.permute.xlu0 0
        %926 = vperm.xlu0 %925, %v600
        %v927 = vpop.permute.xlu0 %926
        %930 = vset.pattern.permute.xlu0 0
        %931 = vperm.xlu0 %930, %v601
        %v932 = vpop.permute.xlu0 %931
        %935 = vset.pattern.permute.xlu0 0
        %936 = vperm.xlu0 %935, %v602
        %v937 = vpop.permute.xlu0 %936
        %940 = vset.pattern.permute.xlu0 0
        %941 = vperm.xlu0 %940, %v603
        %v942 = vpop.permute.xlu0 %941
        %945 = vset.pattern.permute.xlu0 0
        %946 = vperm.xlu0 %945, %v604
        %v947 = vpop.permute.xlu0 %946
        %950 = vset.pattern.permute.xlu0 0
        %951 = vperm.xlu0 %950, %v605
        %v952 = vpop.permute.xlu0 %951
        %955 = vset.pattern.permute.xlu0 0
        %956 = vperm.xlu0 %955, %v606
        %v957 = vpop.permute.xlu0 %956
        %960 = vset.pattern.permute.xlu0 0
        %961 = vperm.xlu0 %960, %v607
        %v962 = vpop.permute.xlu0 %961
        %965 = vset.pattern.permute.xlu0 0
        %966 = vperm.xlu0 %965, %v608
        %v967 = vpop.permute.xlu0 %966
        %970 = vset.pattern.permute.xlu0 0
        %971 = vperm.xlu0 %970, %v609
        %v972 = vpop.permute.xlu0 %971
        %975 = vset.pattern.permute.xlu0 0
        %976 = vperm.xlu0 %975, %v610
        %v977 = vpop.permute.xlu0 %976
        %980 = vset.pattern.permute.xlu0 0
        %981 = vperm.xlu0 %980, %v611
        %v982 = vpop.permute.xlu0 %981
        %985 = vset.pattern.permute.xlu0 0
        %986 = vperm.xlu0 %985, %v612
        %v987 = vpop.permute.xlu0 %986
        %990 = vset.pattern.permute.xlu0 0
        %991 = vperm.xlu0 %990, %v613
        %v992 = vpop.permute.xlu0 %991
        %995 = vset.pattern.permute.xlu0 0
        %996 = vperm.xlu0 %995, %v614
        %v997 = vpop.permute.xlu0 %996
        %1000 = vset.pattern.permute.xlu0 0
        %1001 = vperm.xlu0 %1000, %v615
        %v1002 = vpop.permute.xlu0 %1001
        %1005 = vset.pattern.permute.xlu0 0
        %1006 = vperm.xlu0 %1005, %v616
        %v1007 = vpop.permute.xlu0 %1006
        %1010 = vset.pattern.permute.xlu0 0
        %1011 = vperm.xlu0 %1010, %v617
        %v1012 = vpop.permute.xlu0 %1011
        %1015 = vset.pattern.permute.xlu0 0
        %1016 = vperm.xlu0 %1015, %v618
        %v1017 = vpop.permute.xlu0 %1016
        %1020 = vset.pattern.permute.xlu0 0
        %1021 = vperm.xlu0 %1020, %v619
        %v1022 = vpop.permute.xlu0 %1021
        %1025 = vset.pattern.permute.xlu0 0
        %1026 = vperm.xlu0 %1025, %v620
        %v1027 = vpop.permute.xlu0 %1026
        %1030 = vset.pattern.permute.xlu0 0
        %1031 = vperm.xlu0 %1030, %v621
        %v1032 = vpop.permute.xlu0 %1031
        %1035 = vset.pattern.permute.xlu0 0
        %1036 = vperm.xlu0 %1035, %v622
        %v1037 = vpop.permute.xlu0 %1036
        %1040 = vset.pattern.permute.xlu0 0
        %1041 = vperm.xlu0 %1040, %v623
        %v1042 = vpop.permute.xlu0 %1041
        %1045 = vset.pattern.permute.xlu0 0
        %1046 = vperm.xlu0 %1045, %v624
        %v1047 = vpop.permute.xlu0 %1046
        %1050 = vset.pattern.permute.xlu0 0
        %1051 = vperm.xlu0 %1050, %v625
        %v1052 = vpop.permute.xlu0 %1051
        %1055 = vset.pattern.permute.xlu0 0
        %1056 = vperm.xlu0 %1055, %v626
        %v1057 = vpop.permute.xlu0 %1056
        %1060 = vset.pattern.permute.xlu0 0
        %1061 = vperm.xlu0 %1060, %v627
        %v1062 = vpop.permute.xlu0 %1061
        %1065 = vset.pattern.permute.xlu0 0
        %1066 = vperm.xlu0 %1065, %v628
        %v1067 = vpop.permute.xlu0 %1066
        %1070 = vset.pattern.permute.xlu0 0
        %1071 = vperm.xlu0 %1070, %v629
        %v1072 = vpop.permute.xlu0 %1071
        %1075 = vset.pattern.permute.xlu0 0
        %1076 = vperm.xlu0 %1075, %v630
        %v1077 = vpop.permute.xlu0 %1076
        %1080 = vset.pattern.permute.xlu0 0
        %1081 = vperm.xlu0 %1080, %v631
        %v1082 = vpop.permute.xlu0 %1081
        %1085 = vset.pattern.permute.xlu0 0
        %1086 = vperm.xlu0 %1085, %v632
        %v1087 = vpop.permute.xlu0 %1086
        %1090 = vset.pattern.permute.xlu0 0
        %1091 = vperm.xlu0 %1090, %v633
        %v1092 = vpop.permute.xlu0 %1091
        %1095 = vset.pattern.permute.xlu0 0
        %1096 = vperm.xlu0 %1095, %v634
        %v1097 = vpop.permute.xlu0 %1096
        %1100 = vset.pattern.permute.xlu0 0
        %1101 = vperm.xlu0 %1100, %v635
        %v1102 = vpop.permute.xlu0 %1101
        %1105 = vset.pattern.permute.xlu0 0
        %1106 = vperm.xlu0 %1105, %v636
        %v1107 = vpop.permute.xlu0 %1106
        %1110 = vset.pattern.permute.xlu0 0
        %1111 = vperm.xlu0 %1110, %v637
        %v1112 = vpop.permute.xlu0 %1111
        %1115 = vset.pattern.permute.xlu0 0
        %1116 = vperm.xlu0 %1115, %v638
        %v1117 = vpop.permute.xlu0 %1116
        %v1215 = vunpack.c.l.b16 %v447
        %v1216 = vunpack.c.l.b16 %v448
        %v1217 = vunpack.c.l.b16 %v449
        %v1218 = vunpack.c.l.b16 %v450
        %v1219 = vunpack.c.l.b16 %v451
        %v1220 = vunpack.c.l.b16 %v452
        %v1221 = vunpack.c.l.b16 %v453
        %v1222 = vunpack.c.l.b16 %v454
        %v1223 = vunpack.c.l.b16 %v455
        %v1224 = vunpack.c.l.b16 %v456
        %v1225 = vunpack.c.l.b16 %v457
        %v1226 = vunpack.c.l.b16 %v458
        %v1227 = vunpack.c.l.b16 %v459
        %v1228 = vunpack.c.l.b16 %v460
        %v1229 = vunpack.c.l.b16 %v461
        %v1230 = vunpack.c.l.b16 %v462
        %v1231 = vunpack.c.l.b16 %v463
        %v1232 = vunpack.c.l.b16 %v464
        %v1233 = vunpack.c.l.b16 %v465
        %v1234 = vunpack.c.l.b16 %v466
        %v1235 = vunpack.c.l.b16 %v467
        %v1236 = vunpack.c.l.b16 %v468
        %v1237 = vunpack.c.l.b16 %v469
        %v1238 = vunpack.c.l.b16 %v470
        %v1239 = vunpack.c.l.b16 %v471
        %v1240 = vunpack.c.l.b16 %v472
        %v1241 = vunpack.c.l.b16 %v473
        %v1242 = vunpack.c.l.b16 %v474
        %v1243 = vunpack.c.l.b16 %v475
        %v1244 = vunpack.c.l.b16 %v476
        %v1245 = vunpack.c.l.b16 %v477
        %v1246 = vunpack.c.l.b16 %v478
        %v1247 = vunpack.c.l.b16 %v479
        %v1248 = vunpack.c.l.b16 %v480
        %v1249 = vunpack.c.l.b16 %v481
        %v1250 = vunpack.c.l.b16 %v482
        %v1251 = vunpack.c.l.b16 %v483
        %v1252 = vunpack.c.l.b16 %v484
        %v1253 = vunpack.c.l.b16 %v485
        %v1254 = vunpack.c.l.b16 %v486
        %v1255 = vunpack.c.l.b16 %v487
        %v1256 = vunpack.c.l.b16 %v488
        %v1257 = vunpack.c.l.b16 %v489
        %v1258 = vunpack.c.l.b16 %v490
        %v1259 = vunpack.c.l.b16 %v491
        %v1260 = vunpack.c.l.b16 %v492
        %v1261 = vunpack.c.l.b16 %v493
        %v1262 = vunpack.c.l.b16 %v494
        %v1263 = vunpack.c.l.b16 %v495
        %v1264 = vunpack.c.l.b16 %v496
        %v1265 = vunpack.c.l.b16 %v497
        %v1266 = vunpack.c.l.b16 %v498
        %v1267 = vunpack.c.l.b16 %v499
        %v1268 = vunpack.c.l.b16 %v500
        %v1269 = vunpack.c.l.b16 %v501
        %v1270 = vunpack.c.l.b16 %v502
        %v1271 = vunpack.c.l.b16 %v503
        %v1272 = vunpack.c.l.b16 %v504
        %v1273 = vunpack.c.l.b16 %v505
        %v1274 = vunpack.c.l.b16 %v506
        %v1275 = vunpack.c.l.b16 %v507
        %v1276 = vunpack.c.l.b16 %v508
        %v1277 = vunpack.c.l.b16 %v509
        %v1278 = vunpack.c.l.b16 %v510
        %v1279 = vunpack.c.l.b16 %v511
        %v1280 = vunpack.c.l.b16 %v512
        %v1281 = vunpack.c.l.b16 %v513
        %v1282 = vunpack.c.l.b16 %v514
        %v1283 = vunpack.c.l.b16 %v515
        %v1284 = vunpack.c.l.b16 %v516
        %v1285 = vunpack.c.l.b16 %v517
        %v1286 = vunpack.c.l.b16 %v518
        %v1287 = vunpack.c.l.b16 %v519
        %v1288 = vunpack.c.l.b16 %v520
        %v1289 = vunpack.c.l.b16 %v521
        %v1290 = vunpack.c.l.b16 %v522
        %v1291 = vunpack.c.l.b16 %v523
        %v1292 = vunpack.c.l.b16 %v524
        %v1293 = vunpack.c.l.b16 %v525
        %v1294 = vunpack.c.l.b16 %v526
        %v1295 = vunpack.c.l.b16 %v527
        %v1296 = vunpack.c.l.b16 %v528
        %v1297 = vunpack.c.l.b16 %v529
        %v1298 = vunpack.c.l.b16 %v530
        %v1299 = vunpack.c.l.b16 %v531
        %v1300 = vunpack.c.l.b16 %v532
        %v1301 = vunpack.c.l.b16 %v533
        %v1302 = vunpack.c.l.b16 %v534
        %v1303 = vunpack.c.l.b16 %v535
        %v1304 = vunpack.c.l.b16 %v536
        %v1305 = vunpack.c.l.b16 %v537
        %v1306 = vunpack.c.l.b16 %v538
        %v1307 = vunpack.c.l.b16 %v539
        %v1308 = vunpack.c.l.b16 %v540
        %v1309 = vunpack.c.l.b16 %v541
        %v1310 = vunpack.c.l.b16 %v542
        %v1311 = vpack.c.b16 %v1216, %v1215
        %v1312 = vpack.c.b16 %v1218, %v1217
        %v1313 = vpack.c.b16 %v1220, %v1219
        %v1314 = vpack.c.b16 %v1222, %v1221
        %v1315 = vpack.c.b16 %v1224, %v1223
        %v1316 = vpack.c.b16 %v1226, %v1225
        %v1317 = vpack.c.b16 %v1228, %v1227
        %v1318 = vpack.c.b16 %v1230, %v1229
        %v1319 = vpack.c.b16 %v1232, %v1231
        %v1320 = vpack.c.b16 %v1234, %v1233
        %v1321 = vpack.c.b16 %v1236, %v1235
        %v1322 = vpack.c.b16 %v1238, %v1237
        %v1323 = vpack.c.b16 %v1240, %v1239
        %v1324 = vpack.c.b16 %v1242, %v1241
        %v1325 = vpack.c.b16 %v1244, %v1243
        %v1326 = vpack.c.b16 %v1246, %v1245
        %v1327 = vpack.c.b16 %v1248, %v1247
        %v1328 = vpack.c.b16 %v1250, %v1249
        %v1329 = vpack.c.b16 %v1252, %v1251
        %v1330 = vpack.c.b16 %v1254, %v1253
        %v1331 = vpack.c.b16 %v1256, %v1255
        %v1332 = vpack.c.b16 %v1258, %v1257
        %v1333 = vpack.c.b16 %v1260, %v1259
        %v1334 = vpack.c.b16 %v1262, %v1261
        %v1335 = vpack.c.b16 %v1264, %v1263
        %v1336 = vpack.c.b16 %v1266, %v1265
        %v1337 = vpack.c.b16 %v1268, %v1267
        %v1338 = vpack.c.b16 %v1270, %v1269
        %v1339 = vpack.c.b16 %v1272, %v1271
        %v1340 = vpack.c.b16 %v1274, %v1273
        %v1341 = vpack.c.b16 %v1276, %v1275
        %v1342 = vpack.c.b16 %v1278, %v1277
        %v1343 = vpack.c.b16 %v1280, %v1279
        %v1344 = vpack.c.b16 %v1282, %v1281
        %v1345 = vpack.c.b16 %v1284, %v1283
        %v1346 = vpack.c.b16 %v1286, %v1285
        %v1347 = vpack.c.b16 %v1288, %v1287
        %v1348 = vpack.c.b16 %v1290, %v1289
        %v1349 = vpack.c.b16 %v1292, %v1291
        %v1350 = vpack.c.b16 %v1294, %v1293
        %v1351 = vpack.c.b16 %v1296, %v1295
        %v1352 = vpack.c.b16 %v1298, %v1297
        %v1353 = vpack.c.b16 %v1300, %v1299
        %v1354 = vpack.c.b16 %v1302, %v1301
        %v1355 = vpack.c.b16 %v1304, %v1303
        %v1356 = vpack.c.b16 %v1306, %v1305
        %v1357 = vpack.c.b16 %v1308, %v1307
        %v1358 = vpack.c.b16 %v1310, %v1309
        %v1423 = vunpack.c.l.b16 %v431
        %v1424 = vunpack.c.h.b16 %v431
        %v1425 = vunpack.c.l.b16 %v432
        %v1426 = vunpack.c.h.b16 %v432
        %v1427 = vunpack.c.l.b16 %v433
        %v1428 = vunpack.c.h.b16 %v433
        %v1429 = vunpack.c.l.b16 %v434
        %v1430 = vunpack.c.h.b16 %v434
        %v1431 = vunpack.c.l.b16 %v435
        %v1432 = vunpack.c.h.b16 %v435
        %v1433 = vunpack.c.l.b16 %v436
        %v1434 = vunpack.c.h.b16 %v436
        %v1435 = vunpack.c.l.b16 %v437
        %v1436 = vunpack.c.h.b16 %v437
        %v1437 = vunpack.c.l.b16 %v438
        %v1438 = vunpack.c.h.b16 %v438
        %v1439 = vunpack.c.l.b16 %v439
        %v1440 = vunpack.c.h.b16 %v439
        %v1441 = vunpack.c.l.b16 %v440
        %v1442 = vunpack.c.h.b16 %v440
        %v1443 = vunpack.c.l.b16 %v441
        %v1444 = vunpack.c.h.b16 %v441
        %v1445 = vunpack.c.l.b16 %v442
        %v1446 = vunpack.c.h.b16 %v442
        %v1447 = vunpack.c.l.b16 %v443
        %v1448 = vunpack.c.h.b16 %v443
        %v1449 = vunpack.c.l.b16 %v444
        %v1450 = vunpack.c.h.b16 %v444
        %v1451 = vunpack.c.l.b16 %v445
        %v1452 = vunpack.c.h.b16 %v445
        %v1453 = vunpack.c.l.b16 %v446
        %v1454 = vunpack.c.h.b16 %v446
        %v1455 = vpack.c.b16 %v1425, %v1423
        %v1456 = vpack.c.b16 %v1426, %v1424
        %v1457 = vpack.c.b16 %v1429, %v1427
        %v1458 = vpack.c.b16 %v1430, %v1428
        %v1459 = vpack.c.b16 %v1433, %v1431
        %v1460 = vpack.c.b16 %v1434, %v1432
        %v1461 = vpack.c.b16 %v1437, %v1435
        %v1462 = vpack.c.b16 %v1438, %v1436
        %v1463 = vpack.c.b16 %v1441, %v1439
        %v1464 = vpack.c.b16 %v1442, %v1440
        %v1465 = vpack.c.b16 %v1445, %v1443
        %v1466 = vpack.c.b16 %v1446, %v1444
        %v1467 = vpack.c.b16 %v1449, %v1447
        %v1468 = vpack.c.b16 %v1450, %v1448
        %v1469 = vpack.c.b16 %v1453, %v1451
        %v1470 = vpack.c.b16 %v1454, %v1452
        %1487 = vmatprep.subr.bf16.mxu0 %v1456
        %1488 = vmatpush1.bf16.msra.mxu0 %v1455
        %1489 = vmatprep.subr.bf16.mxu0 %v1458
        %1490 = vmatpush1.bf16.msra.mxu0 %v1457
        %1491 = vmatprep.subr.bf16.mxu0 %v1460
        %1492 = vmatpush1.bf16.msra.mxu0 %v1459
        %1493 = vmatprep.subr.bf16.mxu0 %v1462
        %1494 = vmatpush1.bf16.msra.mxu0 %v1461
        %1495 = vmatprep.subr.bf16.mxu0 %v1464
        %1496 = vmatpush1.bf16.msra.mxu0 %v1463
        %1497 = vmatprep.subr.bf16.mxu0 %v1466
        %1498 = vmatpush1.bf16.msra.mxu0 %v1465
        %1499 = vmatprep.subr.bf16.mxu0 %v1468
        %1500 = vmatpush1.bf16.msra.mxu0 %v1467
        %1501 = vmatprep.subr.bf16.mxu0 %v1470
        %1502 = vmatpush1.bf16.msra.mxu0 %v1469
        %1503 = vmatprep.subr.bf16.mxu0 0
        %1504 = vmatpush1.bf16.msra.mxu0 0
        %1505 = vmatprep.subr.bf16.mxu0 0
        %1506 = vmatpush1.bf16.msra.mxu0 0
        %1507 = vmatprep.subr.bf16.mxu0 0
        %1508 = vmatpush1.bf16.msra.mxu0 0
        %1509 = vmatprep.subr.bf16.mxu0 0
        %1510 = vmatpush1.bf16.msra.mxu0 0
        %1511 = vmatprep.subr.bf16.mxu0 0
        %1512 = vmatpush1.bf16.msra.mxu0 0
        %1513 = vmatprep.subr.bf16.mxu0 0
        %1514 = vmatpush1.bf16.msra.mxu0 0
        %1515 = vmatprep.subr.bf16.mxu0 0
        %1516 = vmatpush1.bf16.msra.mxu0 0
        %1517 = vmatprep.subr.bf16.mxu0 0
        %1518 = vmatpush1.bf16.msra.mxu0 0
        %1519 = vmatprep.mubr.bf16.mxu0 0
        %1520 = vmatmul.mubr.bf16.gmra.mrb[0].mxu0 %v1311
        %v1521 = vpop.f32.mrb[0].mxu0
        %v1522 = vadd.f32 %v642, %v1521
        %v1523 = vpop.f32.mrb[0].mxu0
        %v1524 = vadd.f32 %v642, %v1523
        %v1525 = vpop.f32.mrb[0].mxu0
        %v1526 = vadd.f32 %v647, %v1525
        %v1527 = vpop.f32.mrb[0].mxu0
        %v1528 = vadd.f32 %v647, %v1527
        %1529 = vmatprep.mubr.bf16.mxu0 0
        %1530 = vmatmul.mubr.bf16.gmra.mrb[0].mxu0 %v1312
        %v1531 = vpop.f32.mrb[0].mxu0
        %v1532 = vadd.f32 %v652, %v1531
        %v1533 = vpop.f32.mrb[0].mxu0
        %v1534 = vadd.f32 %v652, %v1533
        %v1535 = vpop.f32.mrb[0].mxu0
        %v1536 = vadd.f32 %v657, %v1535
        %v1537 = vpop.f32.mrb[0].mxu0
        %v1538 = vadd.f32 %v657, %v1537
        %1539 = vmatprep.mubr.bf16.mxu0 0
        %1540 = vmatmul.mubr.bf16.gmra.mrb[0].mxu0 %v1313
        %v1541 = vpop.f32.mrb[0].mxu0
        %v1542 = vadd.f32 %v662, %v1541
        %v1543 = vpop.f32.mrb[0].mxu0
        %v1544 = vadd.f32 %v662, %v1543
        %v1545 = vpop.f32.mrb[0].mxu0
        %v1546 = vadd.f32 %v667, %v1545
        %v1547 = vpop.f32.mrb[0].mxu0
        %v1548 = vadd.f32 %v667, %v1547
        %1549 = vmatprep.mubr.bf16.mxu0 0
        %1550 = vmatmul.mubr.bf16.gmra.mrb[0].mxu0 %v1314
        %v1551 = vpop.f32.mrb[0].mxu0
        %v1552 = vadd.f32 %v672, %v1551
        %v1553 = vpop.f32.mrb[0].mxu0
        %v1554 = vadd.f32 %v672, %v1553
        %v1555 = vpop.f32.mrb[0].mxu0
        %v1556 = vadd.f32 %v677, %v1555
        %v1557 = vpop.f32.mrb[0].mxu0
        %v1558 = vadd.f32 %v677, %v1557
        %1559 = vmatprep.mubr.bf16.mxu0 0
        %1560 = vmatmul.mubr.bf16.gmra.mrb[0].mxu0 %v1315
        %v1561 = vpop.f32.mrb[0].mxu0
        %v1562 = vadd.f32 %v682, %v1561
        %v1563 = vpop.f32.mrb[0].mxu0
        %v1564 = vadd.f32 %v682, %v1563
        %v1565 = vpop.f32.mrb[0].mxu0
        %v1566 = vadd.f32 %v687, %v1565
        %v1567 = vpop.f32.mrb[0].mxu0
        %v1568 = vadd.f32 %v687, %v1567
        %1569 = vmatprep.mubr.bf16.mxu0 0
        %1570 = vmatmul.mubr.bf16.gmra.mrb[0].mxu0 %v1316
        %v1571 = vpop.f32.mrb[0].mxu0
        %v1572 = vadd.f32 %v692, %v1571
        %v1573 = vpop.f32.mrb[0].mxu0
        %v1574 = vadd.f32 %v692, %v1573
        %v1575 = vpop.f32.mrb[0].mxu0
        %v1576 = vadd.f32 %v697, %v1575
        %v1577 = vpop.f32.mrb[0].mxu0
        %v1578 = vadd.f32 %v697, %v1577
        %1579 = vmatprep.mubr.bf16.mxu0 0
        %1580 = vmatmul.mubr.bf16.gmra.mrb[0].mxu0 %v1317
        %v1581 = vpop.f32.mrb[0].mxu0
        %v1582 = vadd.f32 %v702, %v1581
        %v1583 = vpop.f32.mrb[0].mxu0
        %v1584 = vadd.f32 %v702, %v1583
        %v1585 = vpop.f32.mrb[0].mxu0
        %v1586 = vadd.f32 %v707, %v1585
        %v1587 = vpop.f32.mrb[0].mxu0
        %v1588 = vadd.f32 %v707, %v1587
        %1589 = vmatprep.mubr.bf16.mxu0 0
        %1590 = vmatmul.mubr.bf16.gmra.mrb[0].mxu0 %v1318
        %v1591 = vpop.f32.mrb[0].mxu0
        %v1592 = vadd.f32 %v712, %v1591
        %v1593 = vpop.f32.mrb[0].mxu0
        %v1594 = vadd.f32 %v712, %v1593
        %v1595 = vpop.f32.mrb[0].mxu0
        %v1596 = vadd.f32 %v717, %v1595
        %v1597 = vpop.f32.mrb[0].mxu0
        %v1598 = vadd.f32 %v717, %v1597
        %1599 = vmatprep.mubr.bf16.mxu0 0
        %1600 = vmatmul.mubr.bf16.gmra.mrb[0].mxu0 %v1319
        %v1601 = vpop.f32.mrb[0].mxu0
        %v1602 = vadd.f32 %v722, %v1601
        %v1603 = vpop.f32.mrb[0].mxu0
        %v1604 = vadd.f32 %v722, %v1603
        %v1605 = vpop.f32.mrb[0].mxu0
        %v1606 = vadd.f32 %v727, %v1605
        %v1607 = vpop.f32.mrb[0].mxu0
        %v1608 = vadd.f32 %v727, %v1607
        %1609 = vmatprep.mubr.bf16.mxu0 0
        %1610 = vmatmul.mubr.bf16.gmra.mrb[0].mxu0 %v1320
        %v1611 = vpop.f32.mrb[0].mxu0
        %v1612 = vadd.f32 %v732, %v1611
        %v1613 = vpop.f32.mrb[0].mxu0
        %v1614 = vadd.f32 %v732, %v1613
        %v1615 = vpop.f32.mrb[0].mxu0
        %v1616 = vadd.f32 %v737, %v1615
        %v1617 = vpop.f32.mrb[0].mxu0
        %v1618 = vadd.f32 %v737, %v1617
        %1619 = vmatprep.mubr.bf16.mxu0 0
        %1620 = vmatmul.mubr.bf16.gmra.mrb[0].mxu0 %v1321
        %v1621 = vpop.f32.mrb[0].mxu0
        %v1622 = vadd.f32 %v742, %v1621
        %v1623 = vpop.f32.mrb[0].mxu0
        %v1624 = vadd.f32 %v742, %v1623
        %v1625 = vpop.f32.mrb[0].mxu0
        %v1626 = vadd.f32 %v747, %v1625
        %v1627 = vpop.f32.mrb[0].mxu0
        %v1628 = vadd.f32 %v747, %v1627
        %1629 = vmatprep.mubr.bf16.mxu0 0
        %1630 = vmatmul.mubr.bf16.gmra.mrb[0].mxu0 %v1322
        %v1631 = vpop.f32.mrb[0].mxu0
        %v1632 = vadd.f32 %v752, %v1631
        %v1633 = vpop.f32.mrb[0].mxu0
        %v1634 = vadd.f32 %v752, %v1633
        %v1635 = vpop.f32.mrb[0].mxu0
        %v1636 = vadd.f32 %v757, %v1635
        %v1637 = vpop.f32.mrb[0].mxu0
        %v1638 = vadd.f32 %v757, %v1637
        %1639 = vmatprep.mubr.bf16.mxu0 0
        %1640 = vmatmul.mubr.bf16.gmra.mrb[0].mxu0 %v1323
        %v1641 = vpop.f32.mrb[0].mxu0
        %v1642 = vadd.f32 %v762, %v1641
        %v1643 = vpop.f32.mrb[0].mxu0
        %v1644 = vadd.f32 %v762, %v1643
        %v1645 = vpop.f32.mrb[0].mxu0
        %v1646 = vadd.f32 %v767, %v1645
        %v1647 = vpop.f32.mrb[0].mxu0
        %v1648 = vadd.f32 %v767, %v1647
        %1649 = vmatprep.mubr.bf16.mxu0 0
        %1650 = vmatmul.mubr.bf16.gmra.mrb[0].mxu0 %v1324
        %v1651 = vpop.f32.mrb[0].mxu0
        %v1652 = vadd.f32 %v772, %v1651
        %v1653 = vpop.f32.mrb[0].mxu0
        %v1654 = vadd.f32 %v772, %v1653
        %v1655 = vpop.f32.mrb[0].mxu0
        %v1656 = vadd.f32 %v777, %v1655
        %v1657 = vpop.f32.mrb[0].mxu0
        %v1658 = vadd.f32 %v777, %v1657
        %1659 = vmatprep.mubr.bf16.mxu0 0
        %1660 = vmatmul.mubr.bf16.gmra.mrb[0].mxu0 %v1325
        %v1661 = vpop.f32.mrb[0].mxu0
        %v1662 = vadd.f32 %v782, %v1661
        %v1663 = vpop.f32.mrb[0].mxu0
        %v1664 = vadd.f32 %v782, %v1663
        %v1665 = vpop.f32.mrb[0].mxu0
        %v1666 = vadd.f32 %v787, %v1665
        %v1667 = vpop.f32.mrb[0].mxu0
        %v1668 = vadd.f32 %v787, %v1667
        %1669 = vmatprep.mubr.bf16.mxu0 0
        %1670 = vmatmul.mubr.bf16.gmra.mrb[0].mxu0 %v1326
        %v1671 = vpop.f32.mrb[0].mxu0
        %v1672 = vadd.f32 %v792, %v1671
        %v1673 = vpop.f32.mrb[0].mxu0
        %v1674 = vadd.f32 %v792, %v1673
        %v1675 = vpop.f32.mrb[0].mxu0
        %v1676 = vadd.f32 %v797, %v1675
        %v1677 = vpop.f32.mrb[0].mxu0
        %v1678 = vadd.f32 %v797, %v1677
        %1679 = vmatprep.mubr.bf16.mxu0 0
        %1680 = vmatmul.mubr.bf16.gmra.mrb[0].mxu0 %v1327
        %v1681 = vpop.f32.mrb[0].mxu0
        %v1682 = vadd.f32 %v802, %v1681
        %v1683 = vpop.f32.mrb[0].mxu0
        %v1684 = vadd.f32 %v802, %v1683
        %v1685 = vpop.f32.mrb[0].mxu0
        %v1686 = vadd.f32 %v807, %v1685
        %v1687 = vpop.f32.mrb[0].mxu0
        %v1688 = vadd.f32 %v807, %v1687
        %1689 = vmatprep.mubr.bf16.mxu0 0
        %1690 = vmatmul.mubr.bf16.gmra.mrb[0].mxu0 %v1328
        %v1691 = vpop.f32.mrb[0].mxu0
        %v1692 = vadd.f32 %v812, %v1691
        %v1693 = vpop.f32.mrb[0].mxu0
        %v1694 = vadd.f32 %v812, %v1693
        %v1695 = vpop.f32.mrb[0].mxu0
        %v1696 = vadd.f32 %v817, %v1695
        %v1697 = vpop.f32.mrb[0].mxu0
        %v1698 = vadd.f32 %v817, %v1697
        %1699 = vmatprep.mubr.bf16.mxu0 0
        %1700 = vmatmul.mubr.bf16.gmra.mrb[0].mxu0 %v1329
        %v1701 = vpop.f32.mrb[0].mxu0
        %v1702 = vadd.f32 %v822, %v1701
        %v1703 = vpop.f32.mrb[0].mxu0
        %v1704 = vadd.f32 %v822, %v1703
        %v1705 = vpop.f32.mrb[0].mxu0
        %v1706 = vadd.f32 %v827, %v1705
        %v1707 = vpop.f32.mrb[0].mxu0
        %v1708 = vadd.f32 %v827, %v1707
        %1709 = vmatprep.mubr.bf16.mxu0 0
        %1710 = vmatmul.mubr.bf16.gmra.mrb[0].mxu0 %v1330
        %v1711 = vpop.f32.mrb[0].mxu0
        %v1712 = vadd.f32 %v832, %v1711
        %v1713 = vpop.f32.mrb[0].mxu0
        %v1714 = vadd.f32 %v832, %v1713
        %v1715 = vpop.f32.mrb[0].mxu0
        %v1716 = vadd.f32 %v837, %v1715
        %v1717 = vpop.f32.mrb[0].mxu0
        %v1718 = vadd.f32 %v837, %v1717
        %1719 = vmatprep.mubr.bf16.mxu0 0
        %1720 = vmatmul.mubr.bf16.gmra.mrb[0].mxu0 %v1331
        %v1721 = vpop.f32.mrb[0].mxu0
        %v1722 = vadd.f32 %v842, %v1721
        %v1723 = vpop.f32.mrb[0].mxu0
        %v1724 = vadd.f32 %v842, %v1723
        %v1725 = vpop.f32.mrb[0].mxu0
        %v1726 = vadd.f32 %v847, %v1725
        %v1727 = vpop.f32.mrb[0].mxu0
        %v1728 = vadd.f32 %v847, %v1727
        %1729 = vmatprep.mubr.bf16.mxu0 0
        %1730 = vmatmul.mubr.bf16.gmra.mrb[0].mxu0 %v1332
        %v1731 = vpop.f32.mrb[0].mxu0
        %v1732 = vadd.f32 %v852, %v1731
        %v1733 = vpop.f32.mrb[0].mxu0
        %v1734 = vadd.f32 %v852, %v1733
        %v1735 = vpop.f32.mrb[0].mxu0
        %v1736 = vadd.f32 %v857, %v1735
        %v1737 = vpop.f32.mrb[0].mxu0
        %v1738 = vadd.f32 %v857, %v1737
        %1739 = vmatprep.mubr.bf16.mxu0 0
        %1740 = vmatmul.mubr.bf16.gmra.mrb[0].mxu0 %v1333
        %v1741 = vpop.f32.mrb[0].mxu0
        %v1742 = vadd.f32 %v862, %v1741
        %v1743 = vpop.f32.mrb[0].mxu0
        %v1744 = vadd.f32 %v862, %v1743
        %v1745 = vpop.f32.mrb[0].mxu0
        %v1746 = vadd.f32 %v867, %v1745
        %v1747 = vpop.f32.mrb[0].mxu0
        %v1748 = vadd.f32 %v867, %v1747
        %1749 = vmatprep.mubr.bf16.mxu0 0
        %1750 = vmatmul.mubr.bf16.gmra.mrb[0].mxu0 %v1334
        %v1751 = vpop.f32.mrb[0].mxu0
        %v1752 = vadd.f32 %v872, %v1751
        %v1753 = vpop.f32.mrb[0].mxu0
        %v1754 = vadd.f32 %v872, %v1753
        %v1755 = vpop.f32.mrb[0].mxu0
        %v1756 = vadd.f32 %v877, %v1755
        %v1757 = vpop.f32.mrb[0].mxu0
        %v1758 = vadd.f32 %v877, %v1757
        %1759 = vmatprep.mubr.bf16.mxu0 0
        %1760 = vmatmul.mubr.bf16.gmra.mrb[0].mxu0 %v1335
        %v1761 = vpop.f32.mrb[0].mxu0
        %v1762 = vadd.f32 %v882, %v1761
        %v1763 = vpop.f32.mrb[0].mxu0
        %v1764 = vadd.f32 %v882, %v1763
        %v1765 = vpop.f32.mrb[0].mxu0
        %v1766 = vadd.f32 %v887, %v1765
        %v1767 = vpop.f32.mrb[0].mxu0
        %v1768 = vadd.f32 %v887, %v1767
        %1769 = vmatprep.mubr.bf16.mxu0 0
        %1770 = vmatmul.mubr.bf16.gmra.mrb[0].mxu0 %v1336
        %v1771 = vpop.f32.mrb[0].mxu0
        %v1772 = vadd.f32 %v892, %v1771
        %v1773 = vpop.f32.mrb[0].mxu0
        %v1774 = vadd.f32 %v892, %v1773
        %v1775 = vpop.f32.mrb[0].mxu0
        %v1776 = vadd.f32 %v897, %v1775
        %v1777 = vpop.f32.mrb[0].mxu0
        %v1778 = vadd.f32 %v897, %v1777
        %1779 = vmatprep.mubr.bf16.mxu0 0
        %1780 = vmatmul.mubr.bf16.gmra.mrb[0].mxu0 %v1337
        %v1781 = vpop.f32.mrb[0].mxu0
        %v1782 = vadd.f32 %v902, %v1781
        %v1783 = vpop.f32.mrb[0].mxu0
        %v1784 = vadd.f32 %v902, %v1783
        %v1785 = vpop.f32.mrb[0].mxu0
        %v1786 = vadd.f32 %v907, %v1785
        %v1787 = vpop.f32.mrb[0].mxu0
        %v1788 = vadd.f32 %v907, %v1787
        %1789 = vmatprep.mubr.bf16.mxu0 0
        %1790 = vmatmul.mubr.bf16.gmra.mrb[0].mxu0 %v1338
        %v1791 = vpop.f32.mrb[0].mxu0
        %v1792 = vadd.f32 %v912, %v1791
        %v1793 = vpop.f32.mrb[0].mxu0
        %v1794 = vadd.f32 %v912, %v1793
        %v1795 = vpop.f32.mrb[0].mxu0
        %v1796 = vadd.f32 %v917, %v1795
        %v1797 = vpop.f32.mrb[0].mxu0
        %v1798 = vadd.f32 %v917, %v1797
        %1799 = vmatprep.mubr.bf16.mxu0 0
        %1800 = vmatmul.mubr.bf16.gmra.mrb[0].mxu0 %v1339
        %v1801 = vpop.f32.mrb[0].mxu0
        %v1802 = vadd.f32 %v922, %v1801
        %v1803 = vpop.f32.mrb[0].mxu0
        %v1804 = vadd.f32 %v922, %v1803
        %v1805 = vpop.f32.mrb[0].mxu0
        %v1806 = vadd.f32 %v927, %v1805
        %v1807 = vpop.f32.mrb[0].mxu0
        %v1808 = vadd.f32 %v927, %v1807
        %1809 = vmatprep.mubr.bf16.mxu0 0
        %1810 = vmatmul.mubr.bf16.gmra.mrb[0].mxu0 %v1340
        %v1811 = vpop.f32.mrb[0].mxu0
        %v1812 = vadd.f32 %v932, %v1811
        %v1813 = vpop.f32.mrb[0].mxu0
        %v1814 = vadd.f32 %v932, %v1813
        %v1815 = vpop.f32.mrb[0].mxu0
        %v1816 = vadd.f32 %v937, %v1815
        %v1817 = vpop.f32.mrb[0].mxu0
        %v1818 = vadd.f32 %v937, %v1817
        %1819 = vmatprep.mubr.bf16.mxu0 0
        %1820 = vmatmul.mubr.bf16.gmra.mrb[0].mxu0 %v1341
        %v1821 = vpop.f32.mrb[0].mxu0
        %v1822 = vadd.f32 %v942, %v1821
        %v1823 = vpop.f32.mrb[0].mxu0
        %v1824 = vadd.f32 %v942, %v1823
        %v1825 = vpop.f32.mrb[0].mxu0
        %v1826 = vadd.f32 %v947, %v1825
        %v1827 = vpop.f32.mrb[0].mxu0
        %v1828 = vadd.f32 %v947, %v1827
        %1829 = vmatprep.mubr.bf16.mxu0 0
        %1830 = vmatmul.mubr.bf16.gmra.mrb[0].mxu0 %v1342
        %v1831 = vpop.f32.mrb[0].mxu0
        %v1832 = vadd.f32 %v952, %v1831
        %v1833 = vpop.f32.mrb[0].mxu0
        %v1834 = vadd.f32 %v952, %v1833
        %v1835 = vpop.f32.mrb[0].mxu0
        %v1836 = vadd.f32 %v957, %v1835
        %v1837 = vpop.f32.mrb[0].mxu0
        %v1838 = vadd.f32 %v957, %v1837
        %1839 = vmatprep.mubr.bf16.mxu0 0
        %1840 = vmatmul.mubr.bf16.gmra.mrb[0].mxu0 %v1343
        %v1841 = vpop.f32.mrb[0].mxu0
        %v1842 = vadd.f32 %v962, %v1841
        %v1843 = vpop.f32.mrb[0].mxu0
        %v1844 = vadd.f32 %v962, %v1843
        %v1845 = vpop.f32.mrb[0].mxu0
        %v1846 = vadd.f32 %v967, %v1845
        %v1847 = vpop.f32.mrb[0].mxu0
        %v1848 = vadd.f32 %v967, %v1847
        %1849 = vmatprep.mubr.bf16.mxu0 0
        %1850 = vmatmul.mubr.bf16.gmra.mrb[0].mxu0 %v1344
        %v1851 = vpop.f32.mrb[0].mxu0
        %v1852 = vadd.f32 %v972, %v1851
        %v1853 = vpop.f32.mrb[0].mxu0
        %v1854 = vadd.f32 %v972, %v1853
        %v1855 = vpop.f32.mrb[0].mxu0
        %v1856 = vadd.f32 %v977, %v1855
        %v1857 = vpop.f32.mrb[0].mxu0
        %v1858 = vadd.f32 %v977, %v1857
        %1859 = vmatprep.mubr.bf16.mxu0 0
        %1860 = vmatmul.mubr.bf16.gmra.mrb[0].mxu0 %v1345
        %v1861 = vpop.f32.mrb[0].mxu0
        %v1862 = vadd.f32 %v982, %v1861
        %v1863 = vpop.f32.mrb[0].mxu0
        %v1864 = vadd.f32 %v982, %v1863
        %v1865 = vpop.f32.mrb[0].mxu0
        %v1866 = vadd.f32 %v987, %v1865
        %v1867 = vpop.f32.mrb[0].mxu0
        %v1868 = vadd.f32 %v987, %v1867
        %1869 = vmatprep.mubr.bf16.mxu0 0
        %1870 = vmatmul.mubr.bf16.gmra.mrb[0].mxu0 %v1346
        %v1871 = vpop.f32.mrb[0].mxu0
        %v1872 = vadd.f32 %v992, %v1871
        %v1873 = vpop.f32.mrb[0].mxu0
        %v1874 = vadd.f32 %v992, %v1873
        %v1875 = vpop.f32.mrb[0].mxu0
        %v1876 = vadd.f32 %v997, %v1875
        %v1877 = vpop.f32.mrb[0].mxu0
        %v1878 = vadd.f32 %v997, %v1877
        %1879 = vmatprep.mubr.bf16.mxu0 0
        %1880 = vmatmul.mubr.bf16.gmra.mrb[0].mxu0 %v1347
        %v1881 = vpop.f32.mrb[0].mxu0
        %v1882 = vadd.f32 %v1002, %v1881
        %v1883 = vpop.f32.mrb[0].mxu0
        %v1884 = vadd.f32 %v1002, %v1883
        %v1885 = vpop.f32.mrb[0].mxu0
        %v1886 = vadd.f32 %v1007, %v1885
        %v1887 = vpop.f32.mrb[0].mxu0
        %v1888 = vadd.f32 %v1007, %v1887
        %1889 = vmatprep.mubr.bf16.mxu0 0
        %1890 = vmatmul.mubr.bf16.gmra.mrb[0].mxu0 %v1348
        %v1891 = vpop.f32.mrb[0].mxu0
        %v1892 = vadd.f32 %v1012, %v1891
        %v1893 = vpop.f32.mrb[0].mxu0
        %v1894 = vadd.f32 %v1012, %v1893
        %v1895 = vpop.f32.mrb[0].mxu0
        %v1896 = vadd.f32 %v1017, %v1895
        %v1897 = vpop.f32.mrb[0].mxu0
        %v1898 = vadd.f32 %v1017, %v1897
        %1899 = vmatprep.mubr.bf16.mxu0 0
        %1900 = vmatmul.mubr.bf16.gmra.mrb[0].mxu0 %v1349
        %v1901 = vpop.f32.mrb[0].mxu0
        %v1902 = vadd.f32 %v1022, %v1901
        %v1903 = vpop.f32.mrb[0].mxu0
        %v1904 = vadd.f32 %v1022, %v1903
        %v1905 = vpop.f32.mrb[0].mxu0
        %v1906 = vadd.f32 %v1027, %v1905
        %v1907 = vpop.f32.mrb[0].mxu0
        %v1908 = vadd.f32 %v1027, %v1907
        %1909 = vmatprep.mubr.bf16.mxu0 0
        %1910 = vmatmul.mubr.bf16.gmra.mrb[0].mxu0 %v1350
        %v1911 = vpop.f32.mrb[0].mxu0
        %v1912 = vadd.f32 %v1032, %v1911
        %v1913 = vpop.f32.mrb[0].mxu0
        %v1914 = vadd.f32 %v1032, %v1913
        %v1915 = vpop.f32.mrb[0].mxu0
        %v1916 = vadd.f32 %v1037, %v1915
        %v1917 = vpop.f32.mrb[0].mxu0
        %v1918 = vadd.f32 %v1037, %v1917
        %1919 = vmatprep.mubr.bf16.mxu0 0
        %1920 = vmatmul.mubr.bf16.gmra.mrb[0].mxu0 %v1351
        %v1921 = vpop.f32.mrb[0].mxu0
        %v1922 = vadd.f32 %v1042, %v1921
        %v1923 = vpop.f32.mrb[0].mxu0
        %v1924 = vadd.f32 %v1042, %v1923
        %v1925 = vpop.f32.mrb[0].mxu0
        %v1926 = vadd.f32 %v1047, %v1925
        %v1927 = vpop.f32.mrb[0].mxu0
        %v1928 = vadd.f32 %v1047, %v1927
        %1929 = vmatprep.mubr.bf16.mxu0 0
        %1930 = vmatmul.mubr.bf16.gmra.mrb[0].mxu0 %v1352
        %v1931 = vpop.f32.mrb[0].mxu0
        %v1932 = vadd.f32 %v1052, %v1931
        %v1933 = vpop.f32.mrb[0].mxu0
        %v1934 = vadd.f32 %v1052, %v1933
        %v1935 = vpop.f32.mrb[0].mxu0
        %v1936 = vadd.f32 %v1057, %v1935
        %v1937 = vpop.f32.mrb[0].mxu0
        %v1938 = vadd.f32 %v1057, %v1937
        %1939 = vmatprep.mubr.bf16.mxu0 0
        %1940 = vmatmul.mubr.bf16.gmra.mrb[0].mxu0 %v1353
        %v1941 = vpop.f32.mrb[0].mxu0
        %v1942 = vadd.f32 %v1062, %v1941
        %v1943 = vpop.f32.mrb[0].mxu0
        %v1944 = vadd.f32 %v1062, %v1943
        %v1945 = vpop.f32.mrb[0].mxu0
        %v1946 = vadd.f32 %v1067, %v1945
        %v1947 = vpop.f32.mrb[0].mxu0
        %v1948 = vadd.f32 %v1067, %v1947
        %1949 = vmatprep.mubr.bf16.mxu0 0
        %1950 = vmatmul.mubr.bf16.gmra.mrb[0].mxu0 %v1354
        %v1951 = vpop.f32.mrb[0].mxu0
        %v1952 = vadd.f32 %v1072, %v1951
        %v1953 = vpop.f32.mrb[0].mxu0
        %v1954 = vadd.f32 %v1072, %v1953
        %v1955 = vpop.f32.mrb[0].mxu0
        %v1956 = vadd.f32 %v1077, %v1955
        %v1957 = vpop.f32.mrb[0].mxu0
        %v1958 = vadd.f32 %v1077, %v1957
        %1959 = vmatprep.mubr.bf16.mxu0 0
        %1960 = vmatmul.mubr.bf16.gmra.mrb[0].mxu0 %v1355
        %v1961 = vpop.f32.mrb[0].mxu0
        %v1962 = vadd.f32 %v1082, %v1961
        %v1963 = vpop.f32.mrb[0].mxu0
        %v1964 = vadd.f32 %v1082, %v1963
        %v1965 = vpop.f32.mrb[0].mxu0
        %v1966 = vadd.f32 %v1087, %v1965
        %v1967 = vpop.f32.mrb[0].mxu0
        %v1968 = vadd.f32 %v1087, %v1967
        %1969 = vmatprep.mubr.bf16.mxu0 0
        %1970 = vmatmul.mubr.bf16.gmra.mrb[0].mxu0 %v1356
        %v1971 = vpop.f32.mrb[0].mxu0
        %v1972 = vadd.f32 %v1092, %v1971
        %v1973 = vpop.f32.mrb[0].mxu0
        %v1974 = vadd.f32 %v1092, %v1973
        %v1975 = vpop.f32.mrb[0].mxu0
        %v1976 = vadd.f32 %v1097, %v1975
        %v1977 = vpop.f32.mrb[0].mxu0
        %v1978 = vadd.f32 %v1097, %v1977
        %1979 = vmatprep.mubr.bf16.mxu0 0
        %1980 = vmatmul.mubr.bf16.gmra.mrb[0].mxu0 %v1357
        %v1981 = vpop.f32.mrb[0].mxu0
        %v1982 = vadd.f32 %v1102, %v1981
        %v1983 = vpop.f32.mrb[0].mxu0
        %v1984 = vadd.f32 %v1102, %v1983
        %v1985 = vpop.f32.mrb[0].mxu0
        %v1986 = vadd.f32 %v1107, %v1985
        %v1987 = vpop.f32.mrb[0].mxu0
        %v1988 = vadd.f32 %v1107, %v1987
        %1989 = vmatprep.mubr.bf16.mxu0 0
        %1990 = vmatmul.mubr.bf16.gmra.mrb[0].mxu0 %v1358
        %v1991 = vpop.f32.mrb[0].mxu0
        %v1992 = vadd.f32 %v1112, %v1991
        %v1993 = vpop.f32.mrb[0].mxu0
        %v1994 = vadd.f32 %v1112, %v1993
        %v1995 = vpop.f32.mrb[0].mxu0
        %v1996 = vadd.f32 %v1117, %v1995
        %v1997 = vpop.f32.mrb[0].mxu0
        %v1998 = vadd.f32 %v1117, %v1997
        %1999 = vdwg.mxu0
        %v2000 = vmul.f32 %v1522, 0.5
        %v2001 = vmul.f32 %v1524, 0.5
        %v2002 = vmul.f32 %v1526, 0.5
        %v2003 = vmul.f32 %v1528, 0.5
        %v2004 = vmul.f32 %v1532, 0.5
        %v2005 = vmul.f32 %v1534, 0.5
        %v2006 = vmul.f32 %v1536, 0.5
        %v2007 = vmul.f32 %v1538, 0.5
        %v2008 = vmul.f32 %v1542, 0.5
        %v2009 = vmul.f32 %v1544, 0.5
        %v2010 = vmul.f32 %v1546, 0.5
        %v2011 = vmul.f32 %v1548, 0.5
        %v2012 = vmul.f32 %v1552, 0.5
        %v2013 = vmul.f32 %v1554, 0.5
        %v2014 = vmul.f32 %v1556, 0.5
        %v2015 = vmul.f32 %v1558, 0.5
        %v2016 = vmul.f32 %v1562, 0.5
        %v2017 = vmul.f32 %v1564, 0.5
        %v2018 = vmul.f32 %v1566, 0.5
        %v2019 = vmul.f32 %v1568, 0.5
        %v2020 = vmul.f32 %v1572, 0.5
        %v2021 = vmul.f32 %v1574, 0.5
        %v2022 = vmul.f32 %v1576, 0.5
        %v2023 = vmul.f32 %v1578, 0.5
        %v2024 = vmul.f32 %v1582, 0.5
        %v2025 = vmul.f32 %v1584, 0.5
        %v2026 = vmul.f32 %v1586, 0.5
        %v2027 = vmul.f32 %v1588, 0.5
        %v2028 = vmul.f32 %v1592, 0.5
        %v2029 = vmul.f32 %v1594, 0.5
        %v2030 = vmul.f32 %v1596, 0.5
        %v2031 = vmul.f32 %v1598, 0.5
        %v2032 = vtanh.pop %v2000
        %v2033 = vtanh.pop %v2001
        %v2034 = vtanh.pop %v2002
        %v2035 = vtanh.pop %v2003
        %v2036 = vtanh.pop %v2004
        %v2037 = vtanh.pop %v2005
        %v2038 = vtanh.pop %v2006
        %v2039 = vtanh.pop %v2007
        %v2040 = vtanh.pop %v2008
        %v2041 = vtanh.pop %v2009
        %v2042 = vtanh.pop %v2010
        %v2043 = vtanh.pop %v2011
        %v2044 = vtanh.pop %v2012
        %v2045 = vtanh.pop %v2013
        %v2046 = vtanh.pop %v2014
        %v2047 = vtanh.pop %v2015
        %v2048 = vtanh.pop %v2016
        %v2049 = vtanh.pop %v2017
        %v2050 = vtanh.pop %v2018
        %v2051 = vtanh.pop %v2019
        %v2052 = vtanh.pop %v2020
        %v2053 = vtanh.pop %v2021
        %v2054 = vtanh.pop %v2022
        %v2055 = vtanh.pop %v2023
        %v2056 = vtanh.pop %v2024
        %v2057 = vtanh.pop %v2025
        %v2058 = vtanh.pop %v2026
        %v2059 = vtanh.pop %v2027
        %v2060 = vtanh.pop %v2028
        %v2061 = vtanh.pop %v2029
        %v2062 = vtanh.pop %v2030
        %v2063 = vtanh.pop %v2031
        %v2064 = vmul.f32 %v2032, 0.5
        %v2065 = vmul.f32 %v2033, 0.5
        %v2066 = vmul.f32 %v2034, 0.5
        %v2067 = vmul.f32 %v2035, 0.5
        %v2068 = vmul.f32 %v2036, 0.5
        %v2069 = vmul.f32 %v2037, 0.5
        %v2070 = vmul.f32 %v2038, 0.5
        %v2071 = vmul.f32 %v2039, 0.5
        %v2072 = vmul.f32 %v2040, 0.5
        %v2073 = vmul.f32 %v2041, 0.5
        %v2074 = vmul.f32 %v2042, 0.5
        %v2075 = vmul.f32 %v2043, 0.5
        %v2076 = vmul.f32 %v2044, 0.5
        %v2077 = vmul.f32 %v2045, 0.5
        %v2078 = vmul.f32 %v2046, 0.5
        %v2079 = vmul.f32 %v2047, 0.5
        %v2080 = vmul.f32 %v2048, 0.5
        %v2081 = vmul.f32 %v2049, 0.5
        %v2082 = vmul.f32 %v2050, 0.5
        %v2083 = vmul.f32 %v2051, 0.5
        %v2084 = vmul.f32 %v2052, 0.5
        %v2085 = vmul.f32 %v2053, 0.5
        %v2086 = vmul.f32 %v2054, 0.5
        %v2087 = vmul.f32 %v2055, 0.5
        %v2088 = vmul.f32 %v2056, 0.5
        %v2089 = vmul.f32 %v2057, 0.5
        %v2090 = vmul.f32 %v2058, 0.5
        %v2091 = vmul.f32 %v2059, 0.5
        %v2092 = vmul.f32 %v2060, 0.5
        %v2093 = vmul.f32 %v2061, 0.5
        %v2094 = vmul.f32 %v2062, 0.5
        %v2095 = vmul.f32 %v2063, 0.5
        %v2096 = vadd.f32 %v2064, 0.5
        %v2097 = vadd.f32 %v2065, 0.5
        %v2098 = vadd.f32 %v2066, 0.5
        %v2099 = vadd.f32 %v2067, 0.5
        %v2100 = vadd.f32 %v2068, 0.5
        %v2101 = vadd.f32 %v2069, 0.5
        %v2102 = vadd.f32 %v2070, 0.5
        %v2103 = vadd.f32 %v2071, 0.5
        %v2104 = vadd.f32 %v2072, 0.5
        %v2105 = vadd.f32 %v2073, 0.5
        %v2106 = vadd.f32 %v2074, 0.5
        %v2107 = vadd.f32 %v2075, 0.5
        %v2108 = vadd.f32 %v2076, 0.5
        %v2109 = vadd.f32 %v2077, 0.5
        %v2110 = vadd.f32 %v2078, 0.5
        %v2111 = vadd.f32 %v2079, 0.5
        %v2112 = vadd.f32 %v2080, 0.5
        %v2113 = vadd.f32 %v2081, 0.5
        %v2114 = vadd.f32 %v2082, 0.5
        %v2115 = vadd.f32 %v2083, 0.5
        %v2116 = vadd.f32 %v2084, 0.5
        %v2117 = vadd.f32 %v2085, 0.5
        %v2118 = vadd.f32 %v2086, 0.5
        %v2119 = vadd.f32 %v2087, 0.5
        %v2120 = vadd.f32 %v2088, 0.5
        %v2121 = vadd.f32 %v2089, 0.5
        %v2122 = vadd.f32 %v2090, 0.5
        %v2123 = vadd.f32 %v2091, 0.5
        %v2124 = vadd.f32 %v2092, 0.5
        %v2125 = vadd.f32 %v2093, 0.5
        %v2126 = vadd.f32 %v2094, 0.5
        %v2127 = vadd.f32 %v2095, 0.5
        %v2128 = vtanh.pop %v1602
        %v2129 = vtanh.pop %v1604
        %v2130 = vtanh.pop %v1606
        %v2131 = vtanh.pop %v1608
        %v2132 = vtanh.pop %v1612
        %v2133 = vtanh.pop %v1614
        %v2134 = vtanh.pop %v1616
        %v2135 = vtanh.pop %v1618
        %v2136 = vtanh.pop %v1622
        %v2137 = vtanh.pop %v1624
        %v2138 = vtanh.pop %v1626
        %v2139 = vtanh.pop %v1628
        %v2140 = vtanh.pop %v1632
        %v2141 = vtanh.pop %v1634
        %v2142 = vtanh.pop %v1636
        %v2143 = vtanh.pop %v1638
        %v2144 = vtanh.pop %v1642
        %v2145 = vtanh.pop %v1644
        %v2146 = vtanh.pop %v1646
        %v2147 = vtanh.pop %v1648
        %v2148 = vtanh.pop %v1652
        %v2149 = vtanh.pop %v1654
        %v2150 = vtanh.pop %v1656
        %v2151 = vtanh.pop %v1658
        %v2152 = vtanh.pop %v1662
        %v2153 = vtanh.pop %v1664
        %v2154 = vtanh.pop %v1666
        %v2155 = vtanh.pop %v1668
        %v2156 = vtanh.pop %v1672
        %v2157 = vtanh.pop %v1674
        %v2158 = vtanh.pop %v1676
        %v2159 = vtanh.pop %v1678
        %v2160 = vmul.f32 %v1682, 0.5
        %v2161 = vmul.f32 %v1684, 0.5
        %v2162 = vmul.f32 %v1686, 0.5
        %v2163 = vmul.f32 %v1688, 0.5
        %v2164 = vmul.f32 %v1692, 0.5
        %v2165 = vmul.f32 %v1694, 0.5
        %v2166 = vmul.f32 %v1696, 0.5
        %v2167 = vmul.f32 %v1698, 0.5
        %v2168 = vmul.f32 %v1702, 0.5
        %v2169 = vmul.f32 %v1704, 0.5
        %v2170 = vmul.f32 %v1706, 0.5
        %v2171 = vmul.f32 %v1708, 0.5
        %v2172 = vmul.f32 %v1712, 0.5
        %v2173 = vmul.f32 %v1714, 0.5
        %v2174 = vmul.f32 %v1716, 0.5
        %v2175 = vmul.f32 %v1718, 0.5
        %v2176 = vmul.f32 %v1722, 0.5
        %v2177 = vmul.f32 %v1724, 0.5
        %v2178 = vmul.f32 %v1726, 0.5
        %v2179 = vmul.f32 %v1728, 0.5
        %v2180 = vmul.f32 %v1732, 0.5
        %v2181 = vmul.f32 %v1734, 0.5
        %v2182 = vmul.f32 %v1736, 0.5
        %v2183 = vmul.f32 %v1738, 0.5
        %v2184 = vmul.f32 %v1742, 0.5
        %v2185 = vmul.f32 %v1744, 0.5
        %v2186 = vmul.f32 %v1746, 0.5
        %v2187 = vmul.f32 %v1748, 0.5
        %v2188 = vmul.f32 %v1752, 0.5
        %v2189 = vmul.f32 %v1754, 0.5
        %v2190 = vmul.f32 %v1756, 0.5
        %v2191 = vmul.f32 %v1758, 0.5
        %v2192 = vtanh.pop %v2160
        %v2193 = vtanh.pop %v2161
        %v2194 = vtanh.pop %v2162
        %v2195 = vtanh.pop %v2163
        %v2196 = vtanh.pop %v2164
        %v2197 = vtanh.pop %v2165
        %v2198 = vtanh.pop %v2166
        %v2199 = vtanh.pop %v2167
        %v2200 = vtanh.pop %v2168
        %v2201 = vtanh.pop %v2169
        %v2202 = vtanh.pop %v2170
        %v2203 = vtanh.pop %v2171
        %v2204 = vtanh.pop %v2172
        %v2205 = vtanh.pop %v2173
        %v2206 = vtanh.pop %v2174
        %v2207 = vtanh.pop %v2175
        %v2208 = vtanh.pop %v2176
        %v2209 = vtanh.pop %v2177
        %v2210 = vtanh.pop %v2178
        %v2211 = vtanh.pop %v2179
        %v2212 = vtanh.pop %v2180
        %v2213 = vtanh.pop %v2181
        %v2214 = vtanh.pop %v2182
        %v2215 = vtanh.pop %v2183
        %v2216 = vtanh.pop %v2184
        %v2217 = vtanh.pop %v2185
        %v2218 = vtanh.pop %v2186
        %v2219 = vtanh.pop %v2187
        %v2220 = vtanh.pop %v2188
        %v2221 = vtanh.pop %v2189
        %v2222 = vtanh.pop %v2190
        %v2223 = vtanh.pop %v2191
        %v2224 = vmul.f32 %v2192, 0.5
        %v2225 = vmul.f32 %v2193, 0.5
        %v2226 = vmul.f32 %v2194, 0.5
        %v2227 = vmul.f32 %v2195, 0.5
        %v2228 = vmul.f32 %v2196, 0.5
        %v2229 = vmul.f32 %v2197, 0.5
        %v2230 = vmul.f32 %v2198, 0.5
        %v2231 = vmul.f32 %v2199, 0.5
        %v2232 = vmul.f32 %v2200, 0.5
        %v2233 = vmul.f32 %v2201, 0.5
        %v2234 = vmul.f32 %v2202, 0.5
        %v2235 = vmul.f32 %v2203, 0.5
        %v2236 = vmul.f32 %v2204, 0.5
        %v2237 = vmul.f32 %v2205, 0.5
        %v2238 = vmul.f32 %v2206, 0.5
        %v2239 = vmul.f32 %v2207, 0.5
        %v2240 = vmul.f32 %v2208, 0.5
        %v2241 = vmul.f32 %v2209, 0.5
        %v2242 = vmul.f32 %v2210, 0.5
        %v2243 = vmul.f32 %v2211, 0.5
        %v2244 = vmul.f32 %v2212, 0.5
        %v2245 = vmul.f32 %v2213, 0.5
        %v2246 = vmul.f32 %v2214, 0.5
        %v2247 = vmul.f32 %v2215, 0.5
        %v2248 = vmul.f32 %v2216, 0.5
        %v2249 = vmul.f32 %v2217, 0.5
        %v2250 = vmul.f32 %v2218, 0.5
        %v2251 = vmul.f32 %v2219, 0.5
        %v2252 = vmul.f32 %v2220, 0.5
        %v2253 = vmul.f32 %v2221, 0.5
        %v2254 = vmul.f32 %v2222, 0.5
        %v2255 = vmul.f32 %v2223, 0.5
        %v2256 = vadd.f32 %v2224, 0.5
        %v2257 = vadd.f32 %v2225, 0.5
        %v2258 = vadd.f32 %v2226, 0.5
        %v2259 = vadd.f32 %v2227, 0.5
        %v2260 = vadd.f32 %v2228, 0.5
        %v2261 = vadd.f32 %v2229, 0.5
        %v2262 = vadd.f32 %v2230, 0.5
        %v2263 = vadd.f32 %v2231, 0.5
        %v2264 = vadd.f32 %v2232, 0.5
        %v2265 = vadd.f32 %v2233, 0.5
        %v2266 = vadd.f32 %v2234, 0.5
        %v2267 = vadd.f32 %v2235, 0.5
        %v2268 = vadd.f32 %v2236, 0.5
        %v2269 = vadd.f32 %v2237, 0.5
        %v2270 = vadd.f32 %v2238, 0.5
        %v2271 = vadd.f32 %v2239, 0.5
        %v2272 = vadd.f32 %v2240, 0.5
        %v2273 = vadd.f32 %v2241, 0.5
        %v2274 = vadd.f32 %v2242, 0.5
        %v2275 = vadd.f32 %v2243, 0.5
        %v2276 = vadd.f32 %v2244, 0.5
        %v2277 = vadd.f32 %v2245, 0.5
        %v2278 = vadd.f32 %v2246, 0.5
        %v2279 = vadd.f32 %v2247, 0.5
        %v2280 = vadd.f32 %v2248, 0.5
        %v2281 = vadd.f32 %v2249, 0.5
        %v2282 = vadd.f32 %v2250, 0.5
        %v2283 = vadd.f32 %v2251, 0.5
        %v2284 = vadd.f32 %v2252, 0.5
        %v2285 = vadd.f32 %v2253, 0.5
        %v2286 = vadd.f32 %v2254, 0.5
        %v2287 = vadd.f32 %v2255, 0.5
        %v2288 = vmul.f32 %v2096, %v2128
        %v2289 = vmul.f32 %v2097, %v2129
        %v2290 = vmul.f32 %v2098, %v2130
        %v2291 = vmul.f32 %v2099, %v2131
        %v2292 = vmul.f32 %v2100, %v2132
        %v2293 = vmul.f32 %v2101, %v2133
        %v2294 = vmul.f32 %v2102, %v2134
        %v2295 = vmul.f32 %v2103, %v2135
        %v2296 = vmul.f32 %v2104, %v2136
        %v2297 = vmul.f32 %v2105, %v2137
        %v2298 = vmul.f32 %v2106, %v2138
        %v2299 = vmul.f32 %v2107, %v2139
        %v2300 = vmul.f32 %v2108, %v2140
        %v2301 = vmul.f32 %v2109, %v2141
        %v2302 = vmul.f32 %v2110, %v2142
        %v2303 = vmul.f32 %v2111, %v2143
        %v2304 = vmul.f32 %v2112, %v2144
        %v2305 = vmul.f32 %v2113, %v2145
        %v2306 = vmul.f32 %v2114, %v2146
        %v2307 = vmul.f32 %v2115, %v2147
        %v2308 = vmul.f32 %v2116, %v2148
        %v2309 = vmul.f32 %v2117, %v2149
        %v2310 = vmul.f32 %v2118, %v2150
        %v2311 = vmul.f32 %v2119, %v2151
        %v2312 = vmul.f32 %v2120, %v2152
        %v2313 = vmul.f32 %v2121, %v2153
        %v2314 = vmul.f32 %v2122, %v2154
        %v2315 = vmul.f32 %v2123, %v2155
        %v2316 = vmul.f32 %v2124, %v2156
        %v2317 = vmul.f32 %v2125, %v2157
        %v2318 = vmul.f32 %v2126, %v2158
        %v2319 = vmul.f32 %v2127, %v2159
        %v2320 = vtanh.pop %v2288
        %v2321 = vtanh.pop %v2289
        %v2322 = vtanh.pop %v2290
        %v2323 = vtanh.pop %v2291
        %v2324 = vtanh.pop %v2292
        %v2325 = vtanh.pop %v2293
        %v2326 = vtanh.pop %v2294
        %v2327 = vtanh.pop %v2295
        %v2328 = vtanh.pop %v2296
        %v2329 = vtanh.pop %v2297
        %v2330 = vtanh.pop %v2298
        %v2331 = vtanh.pop %v2299
        %v2332 = vtanh.pop %v2300
        %v2333 = vtanh.pop %v2301
        %v2334 = vtanh.pop %v2302
        %v2335 = vtanh.pop %v2303
        %v2336 = vtanh.pop %v2304
        %v2337 = vtanh.pop %v2305
        %v2338 = vtanh.pop %v2306
        %v2339 = vtanh.pop %v2307
        %v2340 = vtanh.pop %v2308
        %v2341 = vtanh.pop %v2309
        %v2342 = vtanh.pop %v2310
        %v2343 = vtanh.pop %v2311
        %v2344 = vtanh.pop %v2312
        %v2345 = vtanh.pop %v2313
        %v2346 = vtanh.pop %v2314
        %v2347 = vtanh.pop %v2315
        %v2348 = vtanh.pop %v2316
        %v2349 = vtanh.pop %v2317
        %v2350 = vtanh.pop %v2318
        %v2351 = vtanh.pop %v2319
        %v2352 = vmul.f32 %v2256, %v2320
        %v2353 = vmul.f32 %v2257, %v2321
        %v2354 = vmul.f32 %v2258, %v2322
        %v2355 = vmul.f32 %v2259, %v2323
        %v2356 = vmul.f32 %v2260, %v2324
        %v2357 = vmul.f32 %v2261, %v2325
        %v2358 = vmul.f32 %v2262, %v2326
        %v2359 = vmul.f32 %v2263, %v2327
        %v2360 = vmul.f32 %v2264, %v2328
        %v2361 = vmul.f32 %v2265, %v2329
        %v2362 = vmul.f32 %v2266, %v2330
        %v2363 = vmul.f32 %v2267, %v2331
        %v2364 = vmul.f32 %v2268, %v2332
        %v2365 = vmul.f32 %v2269, %v2333
        %v2366 = vmul.f32 %v2270, %v2334
        %v2367 = vmul.f32 %v2271, %v2335
        %v2368 = vmul.f32 %v2272, %v2336
        %v2369 = vmul.f32 %v2273, %v2337
        %v2370 = vmul.f32 %v2274, %v2338
        %v2371 = vmul.f32 %v2275, %v2339
        %v2372 = vmul.f32 %v2276, %v2340
        %v2373 = vmul.f32 %v2277, %v2341
        %v2374 = vmul.f32 %v2278, %v2342
        %v2375 = vmul.f32 %v2279, %v2343
        %v2376 = vmul.f32 %v2280, %v2344
        %v2377 = vmul.f32 %v2281, %v2345
        %v2378 = vmul.f32 %v2282, %v2346
        %v2379 = vmul.f32 %v2283, %v2347
        %v2380 = vmul.f32 %v2284, %v2348
        %v2381 = vmul.f32 %v2285, %v2349
        %v2382 = vmul.f32 %v2286, %v2350
        %v2383 = vmul.f32 %v2287, %v2351
        %v2384 = vmul.f32 %v1762, 0.5
        %v2385 = vmul.f32 %v1764, 0.5
        %v2386 = vmul.f32 %v1766, 0.5
        %v2387 = vmul.f32 %v1768, 0.5
        %v2388 = vmul.f32 %v1772, 0.5
        %v2389 = vmul.f32 %v1774, 0.5
        %v2390 = vmul.f32 %v1776, 0.5
        %v2391 = vmul.f32 %v1778, 0.5
        %v2392 = vmul.f32 %v1782, 0.5
        %v2393 = vmul.f32 %v1784, 0.5
        %v2394 = vmul.f32 %v1786, 0.5
        %v2395 = vmul.f32 %v1788, 0.5
        %v2396 = vmul.f32 %v1792, 0.5
        %v2397 = vmul.f32 %v1794, 0.5
        %v2398 = vmul.f32 %v1796, 0.5
        %v2399 = vmul.f32 %v1798, 0.5
        %v2400 = vmul.f32 %v1802, 0.5
        %v2401 = vmul.f32 %v1804, 0.5
        %v2402 = vmul.f32 %v1806, 0.5
        %v2403 = vmul.f32 %v1808, 0.5
        %v2404 = vmul.f32 %v1812, 0.5
        %v2405 = vmul.f32 %v1814, 0.5
        %v2406 = vmul.f32 %v1816, 0.5
        %v2407 = vmul.f32 %v1818, 0.5
        %v2408 = vmul.f32 %v1822, 0.5
        %v2409 = vmul.f32 %v1824, 0.5
        %v2410 = vmul.f32 %v1826, 0.5
        %v2411 = vmul.f32 %v1828, 0.5
        %v2412 = vmul.f32 %v1832, 0.5
        %v2413 = vmul.f32 %v1834, 0.5
        %v2414 = vmul.f32 %v1836, 0.5
        %v2415 = vmul.f32 %v1838, 0.5
        %v2416 = vtanh.pop %v2384
        %v2417 = vtanh.pop %v2385
        %v2418 = vtanh.pop %v2386
        %v2419 = vtanh.pop %v2387
        %v2420 = vtanh.pop %v2388
        %v2421 = vtanh.pop %v2389
        %v2422 = vtanh.pop %v2390
        %v2423 = vtanh.pop %v2391
        %v2424 = vtanh.pop %v2392
        %v2425 = vtanh.pop %v2393
        %v2426 = vtanh.pop %v2394
        %v2427 = vtanh.pop %v2395
        %v2428 = vtanh.pop %v2396
        %v2429 = vtanh.pop %v2397
        %v2430 = vtanh.pop %v2398
        %v2431 = vtanh.pop %v2399
        %v2432 = vtanh.pop %v2400
        %v2433 = vtanh.pop %v2401
        %v2434 = vtanh.pop %v2402
        %v2435 = vtanh.pop %v2403
        %v2436 = vtanh.pop %v2404
        %v2437 = vtanh.pop %v2405
        %v2438 = vtanh.pop %v2406
        %v2439 = vtanh.pop %v2407
        %v2440 = vtanh.pop %v2408
        %v2441 = vtanh.pop %v2409
        %v2442 = vtanh.pop %v2410
        %v2443 = vtanh.pop %v2411
        %v2444 = vtanh.pop %v2412
        %v2445 = vtanh.pop %v2413
        %v2446 = vtanh.pop %v2414
        %v2447 = vtanh.pop %v2415
        %v2448 = vmul.f32 %v2416, 0.5
        %v2449 = vmul.f32 %v2417, 0.5
        %v2450 = vmul.f32 %v2418, 0.5
        %v2451 = vmul.f32 %v2419, 0.5
        %v2452 = vmul.f32 %v2420, 0.5
        %v2453 = vmul.f32 %v2421, 0.5
        %v2454 = vmul.f32 %v2422, 0.5
        %v2455 = vmul.f32 %v2423, 0.5
        %v2456 = vmul.f32 %v2424, 0.5
        %v2457 = vmul.f32 %v2425, 0.5
        %v2458 = vmul.f32 %v2426, 0.5
        %v2459 = vmul.f32 %v2427, 0.5
        %v2460 = vmul.f32 %v2428, 0.5
        %v2461 = vmul.f32 %v2429, 0.5
        %v2462 = vmul.f32 %v2430, 0.5
        %v2463 = vmul.f32 %v2431, 0.5
        %v2464 = vmul.f32 %v2432, 0.5
        %v2465 = vmul.f32 %v2433, 0.5
        %v2466 = vmul.f32 %v2434, 0.5
        %v2467 = vmul.f32 %v2435, 0.5
        %v2468 = vmul.f32 %v2436, 0.5
        %v2469 = vmul.f32 %v2437, 0.5
        %v2470 = vmul.f32 %v2438, 0.5
        %v2471 = vmul.f32 %v2439, 0.5
        %v2472 = vmul.f32 %v2440, 0.5
        %v2473 = vmul.f32 %v2441, 0.5
        %v2474 = vmul.f32 %v2442, 0.5
        %v2475 = vmul.f32 %v2443, 0.5
        %v2476 = vmul.f32 %v2444, 0.5
        %v2477 = vmul.f32 %v2445, 0.5
        %v2478 = vmul.f32 %v2446, 0.5
        %v2479 = vmul.f32 %v2447, 0.5
        %v2480 = vadd.f32 %v2448, 0.5
        %v2481 = vadd.f32 %v2449, 0.5
        %v2482 = vadd.f32 %v2450, 0.5
        %v2483 = vadd.f32 %v2451, 0.5
        %v2484 = vadd.f32 %v2452, 0.5
        %v2485 = vadd.f32 %v2453, 0.5
        %v2486 = vadd.f32 %v2454, 0.5
        %v2487 = vadd.f32 %v2455, 0.5
        %v2488 = vadd.f32 %v2456, 0.5
        %v2489 = vadd.f32 %v2457, 0.5
        %v2490 = vadd.f32 %v2458, 0.5
        %v2491 = vadd.f32 %v2459, 0.5
        %v2492 = vadd.f32 %v2460, 0.5
        %v2493 = vadd.f32 %v2461, 0.5
        %v2494 = vadd.f32 %v2462, 0.5
        %v2495 = vadd.f32 %v2463, 0.5
        %v2496 = vadd.f32 %v2464, 0.5
        %v2497 = vadd.f32 %v2465, 0.5
        %v2498 = vadd.f32 %v2466, 0.5
        %v2499 = vadd.f32 %v2467, 0.5
        %v2500 = vadd.f32 %v2468, 0.5
        %v2501 = vadd.f32 %v2469, 0.5
        %v2502 = vadd.f32 %v2470, 0.5
        %v2503 = vadd.f32 %v2471, 0.5
        %v2504 = vadd.f32 %v2472, 0.5
        %v2505 = vadd.f32 %v2473, 0.5
        %v2506 = vadd.f32 %v2474, 0.5
        %v2507 = vadd.f32 %v2475, 0.5
        %v2508 = vadd.f32 %v2476, 0.5
        %v2509 = vadd.f32 %v2477, 0.5
        %v2510 = vadd.f32 %v2478, 0.5
        %v2511 = vadd.f32 %v2479, 0.5
        %v2512 = vtanh.pop %v1842
        %v2513 = vtanh.pop %v1844
        %v2514 = vtanh.pop %v1846
        %v2515 = vtanh.pop %v1848
        %v2516 = vtanh.pop %v1852
        %v2517 = vtanh.pop %v1854
        %v2518 = vtanh.pop %v1856
        %v2519 = vtanh.pop %v1858
        %v2520 = vtanh.pop %v1862
        %v2521 = vtanh.pop %v1864
        %v2522 = vtanh.pop %v1866
        %v2523 = vtanh.pop %v1868
        %v2524 = vtanh.pop %v1872
        %v2525 = vtanh.pop %v1874
        %v2526 = vtanh.pop %v1876
        %v2527 = vtanh.pop %v1878
        %v2528 = vtanh.pop %v1882
        %v2529 = vtanh.pop %v1884
        %v2530 = vtanh.pop %v1886
        %v2531 = vtanh.pop %v1888
        %v2532 = vtanh.pop %v1892
        %v2533 = vtanh.pop %v1894
        %v2534 = vtanh.pop %v1896
        %v2535 = vtanh.pop %v1898
        %v2536 = vtanh.pop %v1902
        %v2537 = vtanh.pop %v1904
        %v2538 = vtanh.pop %v1906
        %v2539 = vtanh.pop %v1908
        %v2540 = vtanh.pop %v1912
        %v2541 = vtanh.pop %v1914
        %v2542 = vtanh.pop %v1916
        %v2543 = vtanh.pop %v1918
        %v2544 = vmul.f32 %v1922, 0.5
        %v2545 = vmul.f32 %v1924, 0.5
        %v2546 = vmul.f32 %v1926, 0.5
        %v2547 = vmul.f32 %v1928, 0.5
        %v2548 = vmul.f32 %v1932, 0.5
        %v2549 = vmul.f32 %v1934, 0.5
        %v2550 = vmul.f32 %v1936, 0.5
        %v2551 = vmul.f32 %v1938, 0.5
        %v2552 = vmul.f32 %v1942, 0.5
        %v2553 = vmul.f32 %v1944, 0.5
        %v2554 = vmul.f32 %v1946, 0.5
        %v2555 = vmul.f32 %v1948, 0.5
        %v2556 = vmul.f32 %v1952, 0.5
        %v2557 = vmul.f32 %v1954, 0.5
        %v2558 = vmul.f32 %v1956, 0.5
        %v2559 = vmul.f32 %v1958, 0.5
        %v2560 = vmul.f32 %v1962, 0.5
        %v2561 = vmul.f32 %v1964, 0.5
        %v2562 = vmul.f32 %v1966, 0.5
        %v2563 = vmul.f32 %v1968, 0.5
        %v2564 = vmul.f32 %v1972, 0.5
        %v2565 = vmul.f32 %v1974, 0.5
        %v2566 = vmul.f32 %v1976, 0.5
        %v2567 = vmul.f32 %v1978, 0.5
        %v2568 = vmul.f32 %v1982, 0.5
        %v2569 = vmul.f32 %v1984, 0.5
        %v2570 = vmul.f32 %v1986, 0.5
        %v2571 = vmul.f32 %v1988, 0.5
        %v2572 = vmul.f32 %v1992, 0.5
        %v2573 = vmul.f32 %v1994, 0.5
        %v2574 = vmul.f32 %v1996, 0.5
        %v2575 = vmul.f32 %v1998, 0.5
        %v2576 = vtanh.pop %v2544
        %v2577 = vtanh.pop %v2545
        %v2578 = vtanh.pop %v2546
        %v2579 = vtanh.pop %v2547
        %v2580 = vtanh.pop %v2548
        %v2581 = vtanh.pop %v2549
        %v2582 = vtanh.pop %v2550
        %v2583 = vtanh.pop %v2551
        %v2584 = vtanh.pop %v2552
        %v2585 = vtanh.pop %v2553
        %v2586 = vtanh.pop %v2554
        %v2587 = vtanh.pop %v2555
        %v2588 = vtanh.pop %v2556
        %v2589 = vtanh.pop %v2557
        %v2590 = vtanh.pop %v2558
        %v2591 = vtanh.pop %v2559
        %v2592 = vtanh.pop %v2560
        %v2593 = vtanh.pop %v2561
        %v2594 = vtanh.pop %v2562
        %v2595 = vtanh.pop %v2563
        %v2596 = vtanh.pop %v2564
        %v2597 = vtanh.pop %v2565
        %v2598 = vtanh.pop %v2566
        %v2599 = vtanh.pop %v2567
        %v2600 = vtanh.pop %v2568
        %v2601 = vtanh.pop %v2569
        %v2602 = vtanh.pop %v2570
        %v2603 = vtanh.pop %v2571
        %v2604 = vtanh.pop %v2572
        %v2605 = vtanh.pop %v2573
        %v2606 = vtanh.pop %v2574
        %v2607 = vtanh.pop %v2575
        %v2608 = vmul.f32 %v2576, 0.5
        %v2609 = vmul.f32 %v2577, 0.5
        %v2610 = vmul.f32 %v2578, 0.5
        %v2611 = vmul.f32 %v2579, 0.5
        %v2612 = vmul.f32 %v2580, 0.5
        %v2613 = vmul.f32 %v2581, 0.5
        %v2614 = vmul.f32 %v2582, 0.5
        %v2615 = vmul.f32 %v2583, 0.5
        %v2616 = vmul.f32 %v2584, 0.5
        %v2617 = vmul.f32 %v2585, 0.5
        %v2618 = vmul.f32 %v2586, 0.5
        %v2619 = vmul.f32 %v2587, 0.5
        %v2620 = vmul.f32 %v2588, 0.5
        %v2621 = vmul.f32 %v2589, 0.5
        %v2622 = vmul.f32 %v2590, 0.5
        %v2623 = vmul.f32 %v2591, 0.5
        %v2624 = vmul.f32 %v2592, 0.5
        %v2625 = vmul.f32 %v2593, 0.5
        %v2626 = vmul.f32 %v2594, 0.5
        %v2627 = vmul.f32 %v2595, 0.5
        %v2628 = vmul.f32 %v2596, 0.5
        %v2629 = vmul.f32 %v2597, 0.5
        %v2630 = vmul.f32 %v2598, 0.5
        %v2631 = vmul.f32 %v2599, 0.5
        %v2632 = vmul.f32 %v2600, 0.5
        %v2633 = vmul.f32 %v2601, 0.5
        %v2634 = vmul.f32 %v2602, 0.5
        %v2635 = vmul.f32 %v2603, 0.5
        %v2636 = vmul.f32 %v2604, 0.5
        %v2637 = vmul.f32 %v2605, 0.5
        %v2638 = vmul.f32 %v2606, 0.5
        %v2639 = vmul.f32 %v2607, 0.5
        %v2640 = vadd.f32 %v2608, 0.5
        %v2641 = vadd.f32 %v2609, 0.5
        %v2642 = vadd.f32 %v2610, 0.5
        %v2643 = vadd.f32 %v2611, 0.5
        %v2644 = vadd.f32 %v2612, 0.5
        %v2645 = vadd.f32 %v2613, 0.5
        %v2646 = vadd.f32 %v2614, 0.5
        %v2647 = vadd.f32 %v2615, 0.5
        %v2648 = vadd.f32 %v2616, 0.5
        %v2649 = vadd.f32 %v2617, 0.5
        %v2650 = vadd.f32 %v2618, 0.5
        %v2651 = vadd.f32 %v2619, 0.5
        %v2652 = vadd.f32 %v2620, 0.5
        %v2653 = vadd.f32 %v2621, 0.5
        %v2654 = vadd.f32 %v2622, 0.5
        %v2655 = vadd.f32 %v2623, 0.5
        %v2656 = vadd.f32 %v2624, 0.5
        %v2657 = vadd.f32 %v2625, 0.5
        %v2658 = vadd.f32 %v2626, 0.5
        %v2659 = vadd.f32 %v2627, 0.5
        %v2660 = vadd.f32 %v2628, 0.5
        %v2661 = vadd.f32 %v2629, 0.5
        %v2662 = vadd.f32 %v2630, 0.5
        %v2663 = vadd.f32 %v2631, 0.5
        %v2664 = vadd.f32 %v2632, 0.5
        %v2665 = vadd.f32 %v2633, 0.5
        %v2666 = vadd.f32 %v2634, 0.5
        %v2667 = vadd.f32 %v2635, 0.5
        %v2668 = vadd.f32 %v2636, 0.5
        %v2669 = vadd.f32 %v2637, 0.5
        %v2670 = vadd.f32 %v2638, 0.5
        %v2671 = vadd.f32 %v2639, 0.5
        %v2672 = vmul.f32 %v2480, %v2512
        %v2673 = vmul.f32 %v2481, %v2513
        %v2674 = vmul.f32 %v2482, %v2514
        %v2675 = vmul.f32 %v2483, %v2515
        %v2676 = vmul.f32 %v2484, %v2516
        %v2677 = vmul.f32 %v2485, %v2517
        %v2678 = vmul.f32 %v2486, %v2518
        %v2679 = vmul.f32 %v2487, %v2519
        %v2680 = vmul.f32 %v2488, %v2520
        %v2681 = vmul.f32 %v2489, %v2521
        %v2682 = vmul.f32 %v2490, %v2522
        %v2683 = vmul.f32 %v2491, %v2523
        %v2684 = vmul.f32 %v2492, %v2524
        %v2685 = vmul.f32 %v2493, %v2525
        %v2686 = vmul.f32 %v2494, %v2526
        %v2687 = vmul.f32 %v2495, %v2527
        %v2688 = vmul.f32 %v2496, %v2528
        %v2689 = vmul.f32 %v2497, %v2529
        %v2690 = vmul.f32 %v2498, %v2530
        %v2691 = vmul.f32 %v2499, %v2531
        %v2692 = vmul.f32 %v2500, %v2532
        %v2693 = vmul.f32 %v2501, %v2533
        %v2694 = vmul.f32 %v2502, %v2534
        %v2695 = vmul.f32 %v2503, %v2535
        %v2696 = vmul.f32 %v2504, %v2536
        %v2697 = vmul.f32 %v2505, %v2537
        %v2698 = vmul.f32 %v2506, %v2538
        %v2699 = vmul.f32 %v2507, %v2539
        %v2700 = vmul.f32 %v2508, %v2540
        %v2701 = vmul.f32 %v2509, %v2541
        %v2702 = vmul.f32 %v2510, %v2542
        %v2703 = vmul.f32 %v2511, %v2543
        %v2704 = vtanh.pop %v2672
        %v2705 = vtanh.pop %v2673
        %v2706 = vtanh.pop %v2674
        %v2707 = vtanh.pop %v2675
        %v2708 = vtanh.pop %v2676
        %v2709 = vtanh.pop %v2677
        %v2710 = vtanh.pop %v2678
        %v2711 = vtanh.pop %v2679
        %v2712 = vtanh.pop %v2680
        %v2713 = vtanh.pop %v2681
        %v2714 = vtanh.pop %v2682
        %v2715 = vtanh.pop %v2683
        %v2716 = vtanh.pop %v2684
        %v2717 = vtanh.pop %v2685
        %v2718 = vtanh.pop %v2686
        %v2719 = vtanh.pop %v2687
        %v2720 = vtanh.pop %v2688
        %v2721 = vtanh.pop %v2689
        %v2722 = vtanh.pop %v2690
        %v2723 = vtanh.pop %v2691
        %v2724 = vtanh.pop %v2692
        %v2725 = vtanh.pop %v2693
        %v2726 = vtanh.pop %v2694
        %v2727 = vtanh.pop %v2695
        %v2728 = vtanh.pop %v2696
        %v2729 = vtanh.pop %v2697
        %v2730 = vtanh.pop %v2698
        %v2731 = vtanh.pop %v2699
        %v2732 = vtanh.pop %v2700
        %v2733 = vtanh.pop %v2701
        %v2734 = vtanh.pop %v2702
        %v2735 = vtanh.pop %v2703
        %v2736 = vmul.f32 %v2640, %v2704
        %v2737 = vmul.f32 %v2641, %v2705
        %v2738 = vmul.f32 %v2642, %v2706
        %v2739 = vmul.f32 %v2643, %v2707
        %v2740 = vmul.f32 %v2644, %v2708
        %v2741 = vmul.f32 %v2645, %v2709
        %v2742 = vmul.f32 %v2646, %v2710
        %v2743 = vmul.f32 %v2647, %v2711
        %v2744 = vmul.f32 %v2648, %v2712
        %v2745 = vmul.f32 %v2649, %v2713
        %v2746 = vmul.f32 %v2650, %v2714
        %v2747 = vmul.f32 %v2651, %v2715
        %v2748 = vmul.f32 %v2652, %v2716
        %v2749 = vmul.f32 %v2653, %v2717
        %v2750 = vmul.f32 %v2654, %v2718
        %v2751 = vmul.f32 %v2655, %v2719
        %v2752 = vmul.f32 %v2656, %v2720
        %v2753 = vmul.f32 %v2657, %v2721
        %v2754 = vmul.f32 %v2658, %v2722
        %v2755 = vmul.f32 %v2659, %v2723
        %v2756 = vmul.f32 %v2660, %v2724
        %v2757 = vmul.f32 %v2661, %v2725
        %v2758 = vmul.f32 %v2662, %v2726
        %v2759 = vmul.f32 %v2663, %v2727
        %v2760 = vmul.f32 %v2664, %v2728
        %v2761 = vmul.f32 %v2665, %v2729
        %v2762 = vmul.f32 %v2666, %v2730
        %v2763 = vmul.f32 %v2667, %v2731
        %v2764 = vmul.f32 %v2668, %v2732
        %v2765 = vmul.f32 %v2669, %v2733
        %v2766 = vmul.f32 %v2670, %v2734
        %v2767 = vmul.f32 %v2671, %v2735
        %v2768 = vld [vmem:[%s3] sm:$0xf]
        %v2769 = vld [vmem:[%s3 + $0x4] sm:$0xf]
        %v2770 = vld [vmem:[%s3 + $0x8] sm:$0xf]
        %v2771 = vld [vmem:[%s3 + $0xc] sm:$0xf]
        %v2772 = vld [vmem:[%s3 + $0x10] sm:$0xf]
        %v2773 = vld [vmem:[%s3 + $0x14] sm:$0xf]
        %v2774 = vld [vmem:[%s3 + $0x18] sm:$0xf]
        %v2775 = vld [vmem:[%s3 + $0x1c] sm:$0xf]
        %v2776 = vld [vmem:[%s3 + $0x20] sm:$0xf]
        %v2777 = vld [vmem:[%s3 + $0x24] sm:$0xf]
        %v2778 = vld [vmem:[%s3 + $0x28] sm:$0xf]
        %v2779 = vld [vmem:[%s3 + $0x2c] sm:$0xf]
        %v2780 = vld [vmem:[%s3 + $0x30] sm:$0xf]
        %v2781 = vld [vmem:[%s3 + $0x34] sm:$0xf]
        %v2782 = vld [vmem:[%s3 + $0x38] sm:$0xf]
        %v2783 = vld [vmem:[%s3 + $0x3c] sm:$0xf]
        %v2784 = vld [vmem:[%s3 + $0x40] sm:$0xf]
        %v2785 = vld [vmem:[%s3 + $0x44] sm:$0xf]
        %v2786 = vld [vmem:[%s3 + $0x48] sm:$0xf]
        %v2787 = vld [vmem:[%s3 + $0x4c] sm:$0xf]
        %v2788 = vld [vmem:[%s3 + $0x50] sm:$0xf]
        %v2789 = vld [vmem:[%s3 + $0x54] sm:$0xf]
        %v2790 = vld [vmem:[%s3 + $0x58] sm:$0xf]
        %v2791 = vld [vmem:[%s3 + $0x5c] sm:$0xf]
        %v2792 = vld [vmem:[%s3 + $0x60] sm:$0xf]
        %v2793 = vld [vmem:[%s3 + $0x64] sm:$0xf]
        %v2794 = vld [vmem:[%s3 + $0x68] sm:$0xf]
        %v2795 = vld [vmem:[%s3 + $0x6c] sm:$0xf]
        %v2796 = vld [vmem:[%s3 + $0x70] sm:$0xf]
        %v2797 = vld [vmem:[%s3 + $0x74] sm:$0xf]
        %v2798 = vld [vmem:[%s3 + $0x78] sm:$0xf]
        %v2799 = vld [vmem:[%s3 + $0x7c] sm:$0xf]
        %v2800 = vld [vmem:[%s3 + $0x80] sm:$0xf]
        %v2801 = vld [vmem:[%s3 + $0x84] sm:$0xf]
        %v2802 = vld [vmem:[%s3 + $0x88] sm:$0xf]
        %v2803 = vld [vmem:[%s3 + $0x8c] sm:$0xf]
        %v2804 = vld [vmem:[%s3 + $0x90] sm:$0xf]
        %v2805 = vld [vmem:[%s3 + $0x94] sm:$0xf]
        %v2806 = vld [vmem:[%s3 + $0x98] sm:$0xf]
        %v2807 = vld [vmem:[%s3 + $0x9c] sm:$0xf]
        %v2808 = vld [vmem:[%s3 + $0xa0] sm:$0xf]
        %v2809 = vld [vmem:[%s3 + $0xa4] sm:$0xf]
        %v2810 = vld [vmem:[%s3 + $0xa8] sm:$0xf]
        %v2811 = vld [vmem:[%s3 + $0xac] sm:$0xf]
        %v2812 = vld [vmem:[%s3 + $0xb0] sm:$0xf]
        %v2813 = vld [vmem:[%s3 + $0xb4] sm:$0xf]
        %v2814 = vld [vmem:[%s3 + $0xb8] sm:$0xf]
        %v2815 = vld [vmem:[%s3 + $0xbc] sm:$0xf]
        %v2816 = vld [vmem:[%s3 + $0xc0] sm:$0xf]
        %v2817 = vld [vmem:[%s3 + $0xc4] sm:$0xf]
        %v2818 = vld [vmem:[%s3 + $0xc8] sm:$0xf]
        %v2819 = vld [vmem:[%s3 + $0xcc] sm:$0xf]
        %v2820 = vld [vmem:[%s3 + $0xd0] sm:$0xf]
        %v2821 = vld [vmem:[%s3 + $0xd4] sm:$0xf]
        %v2822 = vld [vmem:[%s3 + $0xd8] sm:$0xf]
        %v2823 = vld [vmem:[%s3 + $0xdc] sm:$0xf]
        %v2824 = vld [vmem:[%s3 + $0xe0] sm:$0xf]
        %v2825 = vld [vmem:[%s3 + $0xe4] sm:$0xf]
        %v2826 = vld [vmem:[%s3 + $0xe8] sm:$0xf]
        %v2827 = vld [vmem:[%s3 + $0xec] sm:$0xf]
        %v2828 = vld [vmem:[%s3 + $0xf0] sm:$0xf]
        %v2829 = vld [vmem:[%s3 + $0xf4] sm:$0xf]
        %v2830 = vld [vmem:[%s3 + $0xf8] sm:$0xf]
        %v2831 = vld [vmem:[%s3 + $0xfc] sm:$0xf]
        %v2832 = vld [vmem:[%s3 + $0x100] sm:$0xf]
        %v2833 = vld [vmem:[%s3 + $0x104] sm:$0xf]
        %v2834 = vld [vmem:[%s3 + $0x108] sm:$0xf]
        %v2835 = vld [vmem:[%s3 + $0x10c] sm:$0xf]
        %v2836 = vld [vmem:[%s3 + $0x110] sm:$0xf]
        %v2837 = vld [vmem:[%s3 + $0x114] sm:$0xf]
        %v2838 = vld [vmem:[%s3 + $0x118] sm:$0xf]
        %v2839 = vld [vmem:[%s3 + $0x11c] sm:$0xf]
        %v2840 = vld [vmem:[%s3 + $0x120] sm:$0xf]
        %v2841 = vld [vmem:[%s3 + $0x124] sm:$0xf]
        %v2842 = vld [vmem:[%s3 + $0x128] sm:$0xf]
        %v2843 = vld [vmem:[%s3 + $0x12c] sm:$0xf]
        %v2844 = vld [vmem:[%s3 + $0x130] sm:$0xf]
        %v2845 = vld [vmem:[%s3 + $0x134] sm:$0xf]
        %v2846 = vld [vmem:[%s3 + $0x138] sm:$0xf]
        %v2847 = vld [vmem:[%s3 + $0x13c] sm:$0xf]
        %v2848 = vld [vmem:[%s3 + $0x140] sm:$0xf]
        %v2849 = vld [vmem:[%s3 + $0x144] sm:$0xf]
        %v2850 = vld [vmem:[%s3 + $0x148] sm:$0xf]
        %v2851 = vld [vmem:[%s3 + $0x14c] sm:$0xf]
        %v2852 = vld [vmem:[%s3 + $0x150] sm:$0xf]
        %v2853 = vld [vmem:[%s3 + $0x154] sm:$0xf]
        %v2854 = vld [vmem:[%s3 + $0x158] sm:$0xf]
        %v2855 = vld [vmem:[%s3 + $0x15c] sm:$0xf]
        %v2856 = vld [vmem:[%s3 + $0x160] sm:$0xf]
        %v2857 = vld [vmem:[%s3 + $0x164] sm:$0xf]
        %v2858 = vld [vmem:[%s3 + $0x168] sm:$0xf]
        %v2859 = vld [vmem:[%s3 + $0x16c] sm:$0xf]
        %v2860 = vld [vmem:[%s3 + $0x170] sm:$0xf]
        %v2861 = vld [vmem:[%s3 + $0x174] sm:$0xf]
        %v2862 = vld [vmem:[%s3 + $0x178] sm:$0xf]
        %v2863 = vld [vmem:[%s3 + $0x17c] sm:$0xf]
        %v2864 = vpack.c.bf16 %v2354, %v2352
        %v2865 = vpack.c.bf16 %v2355, %v2353
        %v2866 = vpack.c.bf16 %v2358, %v2356
        %v2867 = vpack.c.bf16 %v2359, %v2357
        %v2868 = vpack.c.bf16 %v2362, %v2360
        %v2869 = vpack.c.bf16 %v2363, %v2361
        %v2870 = vpack.c.bf16 %v2366, %v2364
        %v2871 = vpack.c.bf16 %v2367, %v2365
        %v2872 = vpack.c.bf16 %v2370, %v2368
        %v2873 = vpack.c.bf16 %v2371, %v2369
        %v2874 = vpack.c.bf16 %v2374, %v2372
        %v2875 = vpack.c.bf16 %v2375, %v2373
        %v2876 = vpack.c.bf16 %v2378, %v2376
        %v2877 = vpack.c.bf16 %v2379, %v2377
        %v2878 = vpack.c.bf16 %v2382, %v2380
        %v2879 = vpack.c.bf16 %v2383, %v2381
        %v2880 = vld [vmem:[%s4] sm:$0xf]
        %v2881 = vld [vmem:[%s4 + $0x4] sm:$0xf]
        %v2882 = vld [vmem:[%s4 + $0x8] sm:$0xf]
        %v2883 = vld [vmem:[%s4 + $0xc] sm:$0xf]
        %v2884 = vld [vmem:[%s4 + $0x10] sm:$0xf]
        %v2885 = vld [vmem:[%s4 + $0x14] sm:$0xf]
        %v2886 = vld [vmem:[%s4 + $0x18] sm:$0xf]
        %v2887 = vld [vmem:[%s4 + $0x1c] sm:$0xf]
        %v2888 = vld [vmem:[%s4 + $0x20] sm:$0xf]
        %v2889 = vld [vmem:[%s4 + $0x24] sm:$0xf]
        %v2890 = vld [vmem:[%s4 + $0x28] sm:$0xf]
        %v2891 = vld [vmem:[%s4 + $0x2c] sm:$0xf]
        %v2892 = vld [vmem:[%s4 + $0x30] sm:$0xf]
        %v2893 = vld [vmem:[%s4 + $0x34] sm:$0xf]
        %v2894 = vld [vmem:[%s4 + $0x38] sm:$0xf]
        %v2895 = vld [vmem:[%s4 + $0x3c] sm:$0xf]
        %v2896 = vld [vmem:[%s4 + $0x40] sm:$0xf]
        %v2897 = vld [vmem:[%s4 + $0x44] sm:$0xf]
        %v2898 = vld [vmem:[%s4 + $0x48] sm:$0xf]
        %v2899 = vld [vmem:[%s4 + $0x4c] sm:$0xf]
        %v2900 = vld [vmem:[%s4 + $0x50] sm:$0xf]
        %v2901 = vld [vmem:[%s4 + $0x54] sm:$0xf]
        %v2902 = vld [vmem:[%s4 + $0x58] sm:$0xf]
        %v2903 = vld [vmem:[%s4 + $0x5c] sm:$0xf]
        %v2904 = vld [vmem:[%s4 + $0x60] sm:$0xf]
        %v2905 = vld [vmem:[%s4 + $0x64] sm:$0xf]
        %v2906 = vld [vmem:[%s4 + $0x68] sm:$0xf]
        %v2907 = vld [vmem:[%s4 + $0x6c] sm:$0xf]
        %v2908 = vld [vmem:[%s4 + $0x70] sm:$0xf]
        %v2909 = vld [vmem:[%s4 + $0x74] sm:$0xf]
        %v2910 = vld [vmem:[%s4 + $0x78] sm:$0xf]
        %v2911 = vld [vmem:[%s4 + $0x7c] sm:$0xf]
        %v2912 = vld [vmem:[%s4 + $0x80] sm:$0xf]
        %v2913 = vld [vmem:[%s4 + $0x84] sm:$0xf]
        %v2914 = vld [vmem:[%s4 + $0x88] sm:$0xf]
        %v2915 = vld [vmem:[%s4 + $0x8c] sm:$0xf]
        %v2916 = vld [vmem:[%s4 + $0x90] sm:$0xf]
        %v2917 = vld [vmem:[%s4 + $0x94] sm:$0xf]
        %v2918 = vld [vmem:[%s4 + $0x98] sm:$0xf]
        %v2919 = vld [vmem:[%s4 + $0x9c] sm:$0xf]
        %v2920 = vld [vmem:[%s4 + $0xa0] sm:$0xf]
        %v2921 = vld [vmem:[%s4 + $0xa4] sm:$0xf]
        %v2922 = vld [vmem:[%s4 + $0xa8] sm:$0xf]
        %v2923 = vld [vmem:[%s4 + $0xac] sm:$0xf]
        %v2924 = vld [vmem:[%s4 + $0xb0] sm:$0xf]
        %v2925 = vld [vmem:[%s4 + $0xb4] sm:$0xf]
        %v2926 = vld [vmem:[%s4 + $0xb8] sm:$0xf]
        %v2927 = vld [vmem:[%s4 + $0xbc] sm:$0xf]
        %v2928 = vld [vmem:[%s4 + $0xc0] sm:$0xf]
        %v2929 = vld [vmem:[%s4 + $0xc4] sm:$0xf]
        %v2930 = vld [vmem:[%s4 + $0xc8] sm:$0xf]
        %v2931 = vld [vmem:[%s4 + $0xcc] sm:$0xf]
        %v2932 = vld [vmem:[%s4 + $0xd0] sm:$0xf]
        %v2933 = vld [vmem:[%s4 + $0xd4] sm:$0xf]
        %v2934 = vld [vmem:[%s4 + $0xd8] sm:$0xf]
        %v2935 = vld [vmem:[%s4 + $0xdc] sm:$0xf]
        %v2936 = vld [vmem:[%s4 + $0xe0] sm:$0xf]
        %v2937 = vld [vmem:[%s4 + $0xe4] sm:$0xf]
        %v2938 = vld [vmem:[%s4 + $0xe8] sm:$0xf]
        %v2939 = vld [vmem:[%s4 + $0xec] sm:$0xf]
        %v2940 = vld [vmem:[%s4 + $0xf0] sm:$0xf]
        %v2941 = vld [vmem:[%s4 + $0xf4] sm:$0xf]
        %v2942 = vld [vmem:[%s4 + $0xf8] sm:$0xf]
        %v2943 = vld [vmem:[%s4 + $0xfc] sm:$0xf]
        %v2944 = vld [vmem:[%s4 + $0x100] sm:$0xf]
        %v2945 = vld [vmem:[%s4 + $0x104] sm:$0xf]
        %v2946 = vld [vmem:[%s4 + $0x108] sm:$0xf]
        %v2947 = vld [vmem:[%s4 + $0x10c] sm:$0xf]
        %v2948 = vld [vmem:[%s4 + $0x110] sm:$0xf]
        %v2949 = vld [vmem:[%s4 + $0x114] sm:$0xf]
        %v2950 = vld [vmem:[%s4 + $0x118] sm:$0xf]
        %v2951 = vld [vmem:[%s4 + $0x11c] sm:$0xf]
        %v2952 = vld [vmem:[%s4 + $0x120] sm:$0xf]
        %v2953 = vld [vmem:[%s4 + $0x124] sm:$0xf]
        %v2954 = vld [vmem:[%s4 + $0x128] sm:$0xf]
        %v2955 = vld [vmem:[%s4 + $0x12c] sm:$0xf]
        %v2956 = vld [vmem:[%s4 + $0x130] sm:$0xf]
        %v2957 = vld [vmem:[%s4 + $0x134] sm:$0xf]
        %v2958 = vld [vmem:[%s4 + $0x138] sm:$0xf]
        %v2959 = vld [vmem:[%s4 + $0x13c] sm:$0xf]
        %v2960 = vld [vmem:[%s4 + $0x140] sm:$0xf]
        %v2961 = vld [vmem:[%s4 + $0x144] sm:$0xf]
        %v2962 = vld [vmem:[%s4 + $0x148] sm:$0xf]
        %v2963 = vld [vmem:[%s4 + $0x14c] sm:$0xf]
        %v2964 = vld [vmem:[%s4 + $0x150] sm:$0xf]
        %v2965 = vld [vmem:[%s4 + $0x154] sm:$0xf]
        %v2966 = vld [vmem:[%s4 + $0x158] sm:$0xf]
        %v2967 = vld [vmem:[%s4 + $0x15c] sm:$0xf]
        %v2968 = vld [vmem:[%s4 + $0x160] sm:$0xf]
        %v2969 = vld [vmem:[%s4 + $0x164] sm:$0xf]
        %v2970 = vld [vmem:[%s4 + $0x168] sm:$0xf]
        %v2971 = vld [vmem:[%s4 + $0x16c] sm:$0xf]
        %v2972 = vld [vmem:[%s4 + $0x170] sm:$0xf]
        %v2973 = vld [vmem:[%s4 + $0x174] sm:$0xf]
        %v2974 = vld [vmem:[%s4 + $0x178] sm:$0xf]
        %v2975 = vld [vmem:[%s4 + $0x17c] sm:$0xf]
        %v2976 = vpack.c.bf16 %v2738, %v2736
        %v2977 = vpack.c.bf16 %v2739, %v2737
        %v2978 = vpack.c.bf16 %v2742, %v2740
        %v2979 = vpack.c.bf16 %v2743, %v2741
        %v2980 = vpack.c.bf16 %v2746, %v2744
        %v2981 = vpack.c.bf16 %v2747, %v2745
        %v2982 = vpack.c.bf16 %v2750, %v2748
        %v2983 = vpack.c.bf16 %v2751, %v2749
        %v2984 = vpack.c.bf16 %v2754, %v2752
        %v2985 = vpack.c.bf16 %v2755, %v2753
        %v2986 = vpack.c.bf16 %v2758, %v2756
        %v2987 = vpack.c.bf16 %v2759, %v2757
        %v2988 = vpack.c.bf16 %v2762, %v2760
        %v2989 = vpack.c.bf16 %v2763, %v2761
        %v2990 = vpack.c.bf16 %v2766, %v2764
        %v2991 = vpack.c.bf16 %v2767, %v2765
        %v3088 = vunpack.c.l.b16 %v2880
        %v3089 = vunpack.c.l.b16 %v2881
        %v3090 = vunpack.c.l.b16 %v2882
        %v3091 = vunpack.c.l.b16 %v2883
        %v3092 = vunpack.c.l.b16 %v2884
        %v3093 = vunpack.c.l.b16 %v2885
        %v3094 = vunpack.c.l.b16 %v2886
        %v3095 = vunpack.c.l.b16 %v2887
        %v3096 = vunpack.c.l.b16 %v2888
        %v3097 = vunpack.c.l.b16 %v2889
        %v3098 = vunpack.c.l.b16 %v2890
        %v3099 = vunpack.c.l.b16 %v2891
        %v3100 = vunpack.c.l.b16 %v2892
        %v3101 = vunpack.c.l.b16 %v2893
        %v3102 = vunpack.c.l.b16 %v2894
        %v3103 = vunpack.c.l.b16 %v2895
        %v3104 = vunpack.c.l.b16 %v2896
        %v3105 = vunpack.c.l.b16 %v2897
        %v3106 = vunpack.c.l.b16 %v2898
        %v3107 = vunpack.c.l.b16 %v2899
        %v3108 = vunpack.c.l.b16 %v2900
        %v3109 = vunpack.c.l.b16 %v2901
        %v3110 = vunpack.c.l.b16 %v2902
        %v3111 = vunpack.c.l.b16 %v2903
        %v3112 = vunpack.c.l.b16 %v2904
        %v3113 = vunpack.c.l.b16 %v2905
        %v3114 = vunpack.c.l.b16 %v2906
        %v3115 = vunpack.c.l.b16 %v2907
        %v3116 = vunpack.c.l.b16 %v2908
        %v3117 = vunpack.c.l.b16 %v2909
        %v3118 = vunpack.c.l.b16 %v2910
        %v3119 = vunpack.c.l.b16 %v2911
        %v3120 = vunpack.c.l.b16 %v2912
        %v3121 = vunpack.c.l.b16 %v2913
        %v3122 = vunpack.c.l.b16 %v2914
        %v3123 = vunpack.c.l.b16 %v2915
        %v3124 = vunpack.c.l.b16 %v2916
        %v3125 = vunpack.c.l.b16 %v2917
        %v3126 = vunpack.c.l.b16 %v2918
        %v3127 = vunpack.c.l.b16 %v2919
        %v3128 = vunpack.c.l.b16 %v2920
        %v3129 = vunpack.c.l.b16 %v2921
        %v3130 = vunpack.c.l.b16 %v2922
        %v3131 = vunpack.c.l.b16 %v2923
        %v3132 = vunpack.c.l.b16 %v2924
        %v3133 = vunpack.c.l.b16 %v2925
        %v3134 = vunpack.c.l.b16 %v2926
        %v3135 = vunpack.c.l.b16 %v2927
        %v3136 = vunpack.c.l.b16 %v2928
        %v3137 = vunpack.c.l.b16 %v2929
        %v3138 = vunpack.c.l.b16 %v2930
        %v3139 = vunpack.c.l.b16 %v2931
        %v3140 = vunpack.c.l.b16 %v2932
        %v3141 = vunpack.c.l.b16 %v2933
        %v3142 = vunpack.c.l.b16 %v2934
        %v3143 = vunpack.c.l.b16 %v2935
        %v3144 = vunpack.c.l.b16 %v2936
        %v3145 = vunpack.c.l.b16 %v2937
        %v3146 = vunpack.c.l.b16 %v2938
        %v3147 = vunpack.c.l.b16 %v2939
        %v3148 = vunpack.c.l.b16 %v2940
        %v3149 = vunpack.c.l.b16 %v2941
        %v3150 = vunpack.c.l.b16 %v2942
        %v3151 = vunpack.c.l.b16 %v2943
        %v3152 = vunpack.c.l.b16 %v2944
        %v3153 = vunpack.c.l.b16 %v2945
        %v3154 = vunpack.c.l.b16 %v2946
        %v3155 = vunpack.c.l.b16 %v2947
        %v3156 = vunpack.c.l.b16 %v2948
        %v3157 = vunpack.c.l.b16 %v2949
        %v3158 = vunpack.c.l.b16 %v2950
        %v3159 = vunpack.c.l.b16 %v2951
        %v3160 = vunpack.c.l.b16 %v2952
        %v3161 = vunpack.c.l.b16 %v2953
        %v3162 = vunpack.c.l.b16 %v2954
        %v3163 = vunpack.c.l.b16 %v2955
        %v3164 = vunpack.c.l.b16 %v2956
        %v3165 = vunpack.c.l.b16 %v2957
        %v3166 = vunpack.c.l.b16 %v2958
        %v3167 = vunpack.c.l.b16 %v2959
        %v3168 = vunpack.c.l.b16 %v2960
        %v3169 = vunpack.c.l.b16 %v2961
        %v3170 = vunpack.c.l.b16 %v2962
        %v3171 = vunpack.c.l.b16 %v2963
        %v3172 = vunpack.c.l.b16 %v2964
        %v3173 = vunpack.c.l.b16 %v2965
        %v3174 = vunpack.c.l.b16 %v2966
        %v3175 = vunpack.c.l.b16 %v2967
        %v3176 = vunpack.c.l.b16 %v2968
        %v3177 = vunpack.c.l.b16 %v2969
        %v3178 = vunpack.c.l.b16 %v2970
        %v3179 = vunpack.c.l.b16 %v2971
        %v3180 = vunpack.c.l.b16 %v2972
        %v3181 = vunpack.c.l.b16 %v2973
        %v3182 = vunpack.c.l.b16 %v2974
        %v3183 = vunpack.c.l.b16 %v2975
        %v3184 = vpack.c.b16 %v3089, %v3088
        %v3185 = vpack.c.b16 %v3091, %v3090
        %v3186 = vpack.c.b16 %v3093, %v3092
        %v3187 = vpack.c.b16 %v3095, %v3094
        %v3188 = vpack.c.b16 %v3097, %v3096
        %v3189 = vpack.c.b16 %v3099, %v3098
        %v3190 = vpack.c.b16 %v3101, %v3100
        %v3191 = vpack.c.b16 %v3103, %v3102
        %v3192 = vpack.c.b16 %v3105, %v3104
        %v3193 = vpack.c.b16 %v3107, %v3106
        %v3194 = vpack.c.b16 %v3109, %v3108
        %v3195 = vpack.c.b16 %v3111, %v3110
        %v3196 = vpack.c.b16 %v3113, %v3112
        %v3197 = vpack.c.b16 %v3115, %v3114
        %v3198 = vpack.c.b16 %v3117, %v3116
        %v3199 = vpack.c.b16 %v3119, %v3118
        %v3200 = vpack.c.b16 %v3121, %v3120
        %v3201 = vpack.c.b16 %v3123, %v3122
        %v3202 = vpack.c.b16 %v3125, %v3124
        %v3203 = vpack.c.b16 %v3127, %v3126
        %v3204 = vpack.c.b16 %v3129, %v3128
        %v3205 = vpack.c.b16 %v3131, %v3130
        %v3206 = vpack.c.b16 %v3133, %v3132
        %v3207 = vpack.c.b16 %v3135, %v3134
        %v3208 = vpack.c.b16 %v3137, %v3136
        %v3209 = vpack.c.b16 %v3139, %v3138
        %v3210 = vpack.c.b16 %v3141, %v3140
        %v3211 = vpack.c.b16 %v3143, %v3142
        %v3212 = vpack.c.b16 %v3145, %v3144
        %v3213 = vpack.c.b16 %v3147, %v3146
        %v3214 = vpack.c.b16 %v3149, %v3148
        %v3215 = vpack.c.b16 %v3151, %v3150
        %v3216 = vpack.c.b16 %v3153, %v3152
        %v3217 = vpack.c.b16 %v3155, %v3154
        %v3218 = vpack.c.b16 %v3157, %v3156
        %v3219 = vpack.c.b16 %v3159, %v3158
        %v3220 = vpack.c.b16 %v3161, %v3160
        %v3221 = vpack.c.b16 %v3163, %v3162
        %v3222 = vpack.c.b16 %v3165, %v3164
        %v3223 = vpack.c.b16 %v3167, %v3166
        %v3224 = vpack.c.b16 %v3169, %v3168
        %v3225 = vpack.c.b16 %v3171, %v3170
        %v3226 = vpack.c.b16 %v3173, %v3172
        %v3227 = vpack.c.b16 %v3175, %v3174
        %v3228 = vpack.c.b16 %v3177, %v3176
        %v3229 = vpack.c.b16 %v3179, %v3178
        %v3230 = vpack.c.b16 %v3181, %v3180
        %v3231 = vpack.c.b16 %v3183, %v3182
        %3280 = vmatprep.subr.bf16.mxu0 %v2977
        %3281 = vmatpush1.bf16.msra.mxu0 %v2976
        %3282 = vmatprep.subr.bf16.mxu0 %v2979
        %3283 = vmatpush1.bf16.msra.mxu0 %v2978
        %3284 = vmatprep.subr.bf16.mxu0 %v2981
        %3285 = vmatpush1.bf16.msra.mxu0 %v2980
        %3286 = vmatprep.subr.bf16.mxu0 %v2983
        %3287 = vmatpush1.bf16.msra.mxu0 %v2982
        %3288 = vmatprep.subr.bf16.mxu0 %v2985
        %3289 = vmatpush1.bf16.msra.mxu0 %v2984
        %3290 = vmatprep.subr.bf16.mxu0 %v2987
        %3291 = vmatpush1.bf16.msra.mxu0 %v2986
        %3292 = vmatprep.subr.bf16.mxu0 %v2989
        %3293 = vmatpush1.bf16.msra.mxu0 %v2988
        %3294 = vmatprep.subr.bf16.mxu0 %v2991
        %3295 = vmatpush1.bf16.msra.mxu0 %v2990
        %3296 = vmatprep.subr.bf16.mxu0 0
        %3297 = vmatpush1.bf16.msra.mxu0 0
        %3298 = vmatprep.subr.bf16.mxu0 0
        %3299 = vmatpush1.bf16.msra.mxu0 0
        %3300 = vmatprep.subr.bf16.mxu0 0
        %3301 = vmatpush1.bf16.msra.mxu0 0
        %3302 = vmatprep.subr.bf16.mxu0 0
        %3303 = vmatpush1.bf16.msra.mxu0 0
        %3304 = vmatprep.subr.bf16.mxu0 0
        %3305 = vmatpush1.bf16.msra.mxu0 0
        %3306 = vmatprep.subr.bf16.mxu0 0
        %3307 = vmatpush1.bf16.msra.mxu0 0
        %3308 = vmatprep.subr.bf16.mxu0 0
        %3309 = vmatpush1.bf16.msra.mxu0 0
        %3310 = vmatprep.subr.bf16.mxu0 0
        %3311 = vmatpush1.bf16.msra.mxu0 0
        %3312 = vmatprep.mubr.bf16.mxu0 0
        %3313 = vmatmul.mubr.bf16.gmra.mrb[0].mxu0 %v3184
        %v3314 = vpop.f32.mrb[0].mxu0
        %v3315 = vadd.f32 0.0, %v3314
        %v3316 = vpop.f32.mrb[0].mxu0
        %v3317 = vadd.f32 0.0, %v3316
        %v3318 = vpop.f32.mrb[0].mxu0
        %v3319 = vadd.f32 0.0, %v3318
        %v3320 = vpop.f32.mrb[0].mxu0
        %v3321 = vadd.f32 0.0, %v3320
        %3322 = vmatprep.mubr.bf16.mxu0 0
        %3323 = vmatmul.mubr.bf16.gmra.mrb[0].mxu0 %v3185
        %v3324 = vpop.f32.mrb[0].mxu0
        %v3325 = vadd.f32 0.0, %v3324
        %v3326 = vpop.f32.mrb[0].mxu0
        %v3327 = vadd.f32 0.0, %v3326
        %v3328 = vpop.f32.mrb[0].mxu0
        %v3329 = vadd.f32 0.0, %v3328
        %v3330 = vpop.f32.mrb[0].mxu0
        %v3331 = vadd.f32 0.0, %v3330
        %3332 = vmatprep.mubr.bf16.mxu0 0
        %3333 = vmatmul.mubr.bf16.gmra.mrb[0].mxu0 %v3186
        %v3334 = vpop.f32.mrb[0].mxu0
        %v3335 = vadd.f32 0.0, %v3334
        %v3336 = vpop.f32.mrb[0].mxu0
        %v3337 = vadd.f32 0.0, %v3336
        %v3338 = vpop.f32.mrb[0].mxu0
        %v3339 = vadd.f32 0.0, %v3338
        %v3340 = vpop.f32.mrb[0].mxu0
        %v3341 = vadd.f32 0.0, %v3340
        %3342 = vmatprep.mubr.bf16.mxu0 0
        %3343 = vmatmul.mubr.bf16.gmra.mrb[0].mxu0 %v3187
        %v3344 = vpop.f32.mrb[0].mxu0
        %v3345 = vadd.f32 0.0, %v3344
        %v3346 = vpop.f32.mrb[0].mxu0
        %v3347 = vadd.f32 0.0, %v3346
        %v3348 = vpop.f32.mrb[0].mxu0
        %v3349 = vadd.f32 0.0, %v3348
        %v3350 = vpop.f32.mrb[0].mxu0
        %v3351 = vadd.f32 0.0, %v3350
        %3352 = vmatprep.mubr.bf16.mxu0 0
        %3353 = vmatmul.mubr.bf16.gmra.mrb[0].mxu0 %v3188
        %v3354 = vpop.f32.mrb[0].mxu0
        %v3355 = vadd.f32 0.0, %v3354
        %v3356 = vpop.f32.mrb[0].mxu0
        %v3357 = vadd.f32 0.0, %v3356
        %v3358 = vpop.f32.mrb[0].mxu0
        %v3359 = vadd.f32 0.0, %v3358
        %v3360 = vpop.f32.mrb[0].mxu0
        %v3361 = vadd.f32 0.0, %v3360
        %3362 = vmatprep.mubr.bf16.mxu0 0
        %3363 = vmatmul.mubr.bf16.gmra.mrb[0].mxu0 %v3189
        %v3364 = vpop.f32.mrb[0].mxu0
        %v3365 = vadd.f32 0.0, %v3364
        %v3366 = vpop.f32.mrb[0].mxu0
        %v3367 = vadd.f32 0.0, %v3366
        %v3368 = vpop.f32.mrb[0].mxu0
        %v3369 = vadd.f32 0.0, %v3368
        %v3370 = vpop.f32.mrb[0].mxu0
        %v3371 = vadd.f32 0.0, %v3370
        %3372 = vmatprep.mubr.bf16.mxu0 0
        %3373 = vmatmul.mubr.bf16.gmra.mrb[0].mxu0 %v3190
        %v3374 = vpop.f32.mrb[0].mxu0
        %v3375 = vadd.f32 0.0, %v3374
        %v3376 = vpop.f32.mrb[0].mxu0
        %v3377 = vadd.f32 0.0, %v3376
        %v3378 = vpop.f32.mrb[0].mxu0
        %v3379 = vadd.f32 0.0, %v3378
        %v3380 = vpop.f32.mrb[0].mxu0
        %v3381 = vadd.f32 0.0, %v3380
        %3382 = vmatprep.mubr.bf16.mxu0 0
        %3383 = vmatmul.mubr.bf16.gmra.mrb[0].mxu0 %v3191
        %v3384 = vpop.f32.mrb[0].mxu0
        %v3385 = vadd.f32 0.0, %v3384
        %v3386 = vpop.f32.mrb[0].mxu0
        %v3387 = vadd.f32 0.0, %v3386
        %v3388 = vpop.f32.mrb[0].mxu0
        %v3389 = vadd.f32 0.0, %v3388
        %v3390 = vpop.f32.mrb[0].mxu0
        %v3391 = vadd.f32 0.0, %v3390
        %3392 = vmatprep.mubr.bf16.mxu0 0
        %3393 = vmatmul.mubr.bf16.gmra.mrb[0].mxu0 %v3192
        %v3394 = vpop.f32.mrb[0].mxu0
        %v3395 = vadd.f32 0.0, %v3394
        %v3396 = vpop.f32.mrb[0].mxu0
        %v3397 = vadd.f32 0.0, %v3396
        %v3398 = vpop.f32.mrb[0].mxu0
        %v3399 = vadd.f32 0.0, %v3398
        %v3400 = vpop.f32.mrb[0].mxu0
        %v3401 = vadd.f32 0.0, %v3400
        %3402 = vmatprep.mubr.bf16.mxu0 0
        %3403 = vmatmul.mubr.bf16.gmra.mrb[0].mxu0 %v3193
        %v3404 = vpop.f32.mrb[0].mxu0
        %v3405 = vadd.f32 0.0, %v3404
        %v3406 = vpop.f32.mrb[0].mxu0
        %v3407 = vadd.f32 0.0, %v3406
        %v3408 = vpop.f32.mrb[0].mxu0
        %v3409 = vadd.f32 0.0, %v3408
        %v3410 = vpop.f32.mrb[0].mxu0
        %v3411 = vadd.f32 0.0, %v3410
        %3412 = vmatprep.mubr.bf16.mxu0 0
        %3413 = vmatmul.mubr.bf16.gmra.mrb[0].mxu0 %v3194
        %v3414 = vpop.f32.mrb[0].mxu0
        %v3415 = vadd.f32 0.0, %v3414
        %v3416 = vpop.f32.mrb[0].mxu0
        %v3417 = vadd.f32 0.0, %v3416
        %v3418 = vpop.f32.mrb[0].mxu0
        %v3419 = vadd.f32 0.0, %v3418
        %v3420 = vpop.f32.mrb[0].mxu0
        %v3421 = vadd.f32 0.0, %v3420
        %3422 = vmatprep.mubr.bf16.mxu0 0
        %3423 = vmatmul.mubr.bf16.gmra.mrb[0].mxu0 %v3195
        %v3424 = vpop.f32.mrb[0].mxu0
        %v3425 = vadd.f32 0.0, %v3424
        %v3426 = vpop.f32.mrb[0].mxu0
        %v3427 = vadd.f32 0.0, %v3426
        %v3428 = vpop.f32.mrb[0].mxu0
        %v3429 = vadd.f32 0.0, %v3428
        %v3430 = vpop.f32.mrb[0].mxu0
        %v3431 = vadd.f32 0.0, %v3430
        %3432 = vmatprep.mubr.bf16.mxu0 0
        %3433 = vmatmul.mubr.bf16.gmra.mrb[0].mxu0 %v3196
        %v3434 = vpop.f32.mrb[0].mxu0
        %v3435 = vadd.f32 0.0, %v3434
        %v3436 = vpop.f32.mrb[0].mxu0
        %v3437 = vadd.f32 0.0, %v3436
        %v3438 = vpop.f32.mrb[0].mxu0
        %v3439 = vadd.f32 0.0, %v3438
        %v3440 = vpop.f32.mrb[0].mxu0
        %v3441 = vadd.f32 0.0, %v3440
        %3442 = vmatprep.mubr.bf16.mxu0 0
        %3443 = vmatmul.mubr.bf16.gmra.mrb[0].mxu0 %v3197
        %v3444 = vpop.f32.mrb[0].mxu0
        %v3445 = vadd.f32 0.0, %v3444
        %v3446 = vpop.f32.mrb[0].mxu0
        %v3447 = vadd.f32 0.0, %v3446
        %v3448 = vpop.f32.mrb[0].mxu0
        %v3449 = vadd.f32 0.0, %v3448
        %v3450 = vpop.f32.mrb[0].mxu0
        %v3451 = vadd.f32 0.0, %v3450
        %3452 = vmatprep.mubr.bf16.mxu0 0
        %3453 = vmatmul.mubr.bf16.gmra.mrb[0].mxu0 %v3198
        %v3454 = vpop.f32.mrb[0].mxu0
        %v3455 = vadd.f32 0.0, %v3454
        %v3456 = vpop.f32.mrb[0].mxu0
        %v3457 = vadd.f32 0.0, %v3456
        %v3458 = vpop.f32.mrb[0].mxu0
        %v3459 = vadd.f32 0.0, %v3458
        %v3460 = vpop.f32.mrb[0].mxu0
        %v3461 = vadd.f32 0.0, %v3460
        %3462 = vmatprep.mubr.bf16.mxu0 0
        %3463 = vmatmul.mubr.bf16.gmra.mrb[0].mxu0 %v3199
        %v3464 = vpop.f32.mrb[0].mxu0
        %v3465 = vadd.f32 0.0, %v3464
        %v3466 = vpop.f32.mrb[0].mxu0
        %v3467 = vadd.f32 0.0, %v3466
        %v3468 = vpop.f32.mrb[0].mxu0
        %v3469 = vadd.f32 0.0, %v3468
        %v3470 = vpop.f32.mrb[0].mxu0
        %v3471 = vadd.f32 0.0, %v3470
        %3472 = vmatprep.mubr.bf16.mxu0 0
        %3473 = vmatmul.mubr.bf16.gmra.mrb[0].mxu0 %v3200
        %v3474 = vpop.f32.mrb[0].mxu0
        %v3475 = vadd.f32 0.0, %v3474
        %v3476 = vpop.f32.mrb[0].mxu0
        %v3477 = vadd.f32 0.0, %v3476
        %v3478 = vpop.f32.mrb[0].mxu0
        %v3479 = vadd.f32 0.0, %v3478
        %v3480 = vpop.f32.mrb[0].mxu0
        %v3481 = vadd.f32 0.0, %v3480
        %3482 = vmatprep.mubr.bf16.mxu0 0
        %3483 = vmatmul.mubr.bf16.gmra.mrb[0].mxu0 %v3201
        %v3484 = vpop.f32.mrb[0].mxu0
        %v3485 = vadd.f32 0.0, %v3484
        %v3486 = vpop.f32.mrb[0].mxu0
        %v3487 = vadd.f32 0.0, %v3486
        %v3488 = vpop.f32.mrb[0].mxu0
        %v3489 = vadd.f32 0.0, %v3488
        %v3490 = vpop.f32.mrb[0].mxu0
        %v3491 = vadd.f32 0.0, %v3490
        %3492 = vmatprep.mubr.bf16.mxu0 0
        %3493 = vmatmul.mubr.bf16.gmra.mrb[0].mxu0 %v3202
        %v3494 = vpop.f32.mrb[0].mxu0
        %v3495 = vadd.f32 0.0, %v3494
        %v3496 = vpop.f32.mrb[0].mxu0
        %v3497 = vadd.f32 0.0, %v3496
        %v3498 = vpop.f32.mrb[0].mxu0
        %v3499 = vadd.f32 0.0, %v3498
        %v3500 = vpop.f32.mrb[0].mxu0
        %v3501 = vadd.f32 0.0, %v3500
        %3502 = vmatprep.mubr.bf16.mxu0 0
        %3503 = vmatmul.mubr.bf16.gmra.mrb[0].mxu0 %v3203
        %v3504 = vpop.f32.mrb[0].mxu0
        %v3505 = vadd.f32 0.0, %v3504
        %v3506 = vpop.f32.mrb[0].mxu0
        %v3507 = vadd.f32 0.0, %v3506
        %v3508 = vpop.f32.mrb[0].mxu0
        %v3509 = vadd.f32 0.0, %v3508
        %v3510 = vpop.f32.mrb[0].mxu0
        %v3511 = vadd.f32 0.0, %v3510
        %3512 = vmatprep.mubr.bf16.mxu0 0
        %3513 = vmatmul.mubr.bf16.gmra.mrb[0].mxu0 %v3204
        %v3514 = vpop.f32.mrb[0].mxu0
        %v3515 = vadd.f32 0.0, %v3514
        %v3516 = vpop.f32.mrb[0].mxu0
        %v3517 = vadd.f32 0.0, %v3516
        %v3518 = vpop.f32.mrb[0].mxu0
        %v3519 = vadd.f32 0.0, %v3518
        %v3520 = vpop.f32.mrb[0].mxu0
        %v3521 = vadd.f32 0.0, %v3520
        %3522 = vmatprep.mubr.bf16.mxu0 0
        %3523 = vmatmul.mubr.bf16.gmra.mrb[0].mxu0 %v3205
        %v3524 = vpop.f32.mrb[0].mxu0
        %v3525 = vadd.f32 0.0, %v3524
        %v3526 = vpop.f32.mrb[0].mxu0
        %v3527 = vadd.f32 0.0, %v3526
        %v3528 = vpop.f32.mrb[0].mxu0
        %v3529 = vadd.f32 0.0, %v3528
        %v3530 = vpop.f32.mrb[0].mxu0
        %v3531 = vadd.f32 0.0, %v3530
        %3532 = vmatprep.mubr.bf16.mxu0 0
        %3533 = vmatmul.mubr.bf16.gmra.mrb[0].mxu0 %v3206
        %v3534 = vpop.f32.mrb[0].mxu0
        %v3535 = vadd.f32 0.0, %v3534
        %v3536 = vpop.f32.mrb[0].mxu0
        %v3537 = vadd.f32 0.0, %v3536
        %v3538 = vpop.f32.mrb[0].mxu0
        %v3539 = vadd.f32 0.0, %v3538
        %v3540 = vpop.f32.mrb[0].mxu0
        %v3541 = vadd.f32 0.0, %v3540
        %3542 = vmatprep.mubr.bf16.mxu0 0
        %3543 = vmatmul.mubr.bf16.gmra.mrb[0].mxu0 %v3207
        %v3544 = vpop.f32.mrb[0].mxu0
        %v3545 = vadd.f32 0.0, %v3544
        %v3546 = vpop.f32.mrb[0].mxu0
        %v3547 = vadd.f32 0.0, %v3546
        %v3548 = vpop.f32.mrb[0].mxu0
        %v3549 = vadd.f32 0.0, %v3548
        %v3550 = vpop.f32.mrb[0].mxu0
        %v3551 = vadd.f32 0.0, %v3550
        %3552 = vmatprep.mubr.bf16.mxu0 0
        %3553 = vmatmul.mubr.bf16.gmra.mrb[0].mxu0 %v3208
        %v3554 = vpop.f32.mrb[0].mxu0
        %v3555 = vadd.f32 0.0, %v3554
        %v3556 = vpop.f32.mrb[0].mxu0
        %v3557 = vadd.f32 0.0, %v3556
        %v3558 = vpop.f32.mrb[0].mxu0
        %v3559 = vadd.f32 0.0, %v3558
        %v3560 = vpop.f32.mrb[0].mxu0
        %v3561 = vadd.f32 0.0, %v3560
        %3562 = vmatprep.mubr.bf16.mxu0 0
        %3563 = vmatmul.mubr.bf16.gmra.mrb[0].mxu0 %v3209
        %v3564 = vpop.f32.mrb[0].mxu0
        %v3565 = vadd.f32 0.0, %v3564
        %v3566 = vpop.f32.mrb[0].mxu0
        %v3567 = vadd.f32 0.0, %v3566
        %v3568 = vpop.f32.mrb[0].mxu0
        %v3569 = vadd.f32 0.0, %v3568
        %v3570 = vpop.f32.mrb[0].mxu0
        %v3571 = vadd.f32 0.0, %v3570
        %3572 = vmatprep.mubr.bf16.mxu0 0
        %3573 = vmatmul.mubr.bf16.gmra.mrb[0].mxu0 %v3210
        %v3574 = vpop.f32.mrb[0].mxu0
        %v3575 = vadd.f32 0.0, %v3574
        %v3576 = vpop.f32.mrb[0].mxu0
        %v3577 = vadd.f32 0.0, %v3576
        %v3578 = vpop.f32.mrb[0].mxu0
        %v3579 = vadd.f32 0.0, %v3578
        %v3580 = vpop.f32.mrb[0].mxu0
        %v3581 = vadd.f32 0.0, %v3580
        %3582 = vmatprep.mubr.bf16.mxu0 0
        %3583 = vmatmul.mubr.bf16.gmra.mrb[0].mxu0 %v3211
        %v3584 = vpop.f32.mrb[0].mxu0
        %v3585 = vadd.f32 0.0, %v3584
        %v3586 = vpop.f32.mrb[0].mxu0
        %v3587 = vadd.f32 0.0, %v3586
        %v3588 = vpop.f32.mrb[0].mxu0
        %v3589 = vadd.f32 0.0, %v3588
        %v3590 = vpop.f32.mrb[0].mxu0
        %v3591 = vadd.f32 0.0, %v3590
        %3592 = vmatprep.mubr.bf16.mxu0 0
        %3593 = vmatmul.mubr.bf16.gmra.mrb[0].mxu0 %v3212
        %v3594 = vpop.f32.mrb[0].mxu0
        %v3595 = vadd.f32 0.0, %v3594
        %v3596 = vpop.f32.mrb[0].mxu0
        %v3597 = vadd.f32 0.0, %v3596
        %v3598 = vpop.f32.mrb[0].mxu0
        %v3599 = vadd.f32 0.0, %v3598
        %v3600 = vpop.f32.mrb[0].mxu0
        %v3601 = vadd.f32 0.0, %v3600
        %3602 = vmatprep.mubr.bf16.mxu0 0
        %3603 = vmatmul.mubr.bf16.gmra.mrb[0].mxu0 %v3213
        %v3604 = vpop.f32.mrb[0].mxu0
        %v3605 = vadd.f32 0.0, %v3604
        %v3606 = vpop.f32.mrb[0].mxu0
        %v3607 = vadd.f32 0.0, %v3606
        %v3608 = vpop.f32.mrb[0].mxu0
        %v3609 = vadd.f32 0.0, %v3608
        %v3610 = vpop.f32.mrb[0].mxu0
        %v3611 = vadd.f32 0.0, %v3610
        %3612 = vmatprep.mubr.bf16.mxu0 0
        %3613 = vmatmul.mubr.bf16.gmra.mrb[0].mxu0 %v3214
        %v3614 = vpop.f32.mrb[0].mxu0
        %v3615 = vadd.f32 0.0, %v3614
        %v3616 = vpop.f32.mrb[0].mxu0
        %v3617 = vadd.f32 0.0, %v3616
        %v3618 = vpop.f32.mrb[0].mxu0
        %v3619 = vadd.f32 0.0, %v3618
        %v3620 = vpop.f32.mrb[0].mxu0
        %v3621 = vadd.f32 0.0, %v3620
        %3622 = vmatprep.mubr.bf16.mxu0 0
        %3623 = vmatmul.mubr.bf16.gmra.mrb[0].mxu0 %v3215
        %v3624 = vpop.f32.mrb[0].mxu0
        %v3625 = vadd.f32 0.0, %v3624
        %v3626 = vpop.f32.mrb[0].mxu0
        %v3627 = vadd.f32 0.0, %v3626
        %v3628 = vpop.f32.mrb[0].mxu0
        %v3629 = vadd.f32 0.0, %v3628
        %v3630 = vpop.f32.mrb[0].mxu0
        %v3631 = vadd.f32 0.0, %v3630
        %3632 = vmatprep.mubr.bf16.mxu0 0
        %3633 = vmatmul.mubr.bf16.gmra.mrb[0].mxu0 %v3216
        %v3634 = vpop.f32.mrb[0].mxu0
        %v3635 = vadd.f32 0.0, %v3634
        %v3636 = vpop.f32.mrb[0].mxu0
        %v3637 = vadd.f32 0.0, %v3636
        %v3638 = vpop.f32.mrb[0].mxu0
        %v3639 = vadd.f32 0.0, %v3638
        %v3640 = vpop.f32.mrb[0].mxu0
        %v3641 = vadd.f32 0.0, %v3640
        %3642 = vmatprep.mubr.bf16.mxu0 0
        %3643 = vmatmul.mubr.bf16.gmra.mrb[0].mxu0 %v3217
        %v3644 = vpop.f32.mrb[0].mxu0
        %v3645 = vadd.f32 0.0, %v3644
        %v3646 = vpop.f32.mrb[0].mxu0
        %v3647 = vadd.f32 0.0, %v3646
        %v3648 = vpop.f32.mrb[0].mxu0
        %v3649 = vadd.f32 0.0, %v3648
        %v3650 = vpop.f32.mrb[0].mxu0
        %v3651 = vadd.f32 0.0, %v3650
        %3652 = vmatprep.mubr.bf16.mxu0 0
        %3653 = vmatmul.mubr.bf16.gmra.mrb[0].mxu0 %v3218
        %v3654 = vpop.f32.mrb[0].mxu0
        %v3655 = vadd.f32 0.0, %v3654
        %v3656 = vpop.f32.mrb[0].mxu0
        %v3657 = vadd.f32 0.0, %v3656
        %v3658 = vpop.f32.mrb[0].mxu0
        %v3659 = vadd.f32 0.0, %v3658
        %v3660 = vpop.f32.mrb[0].mxu0
        %v3661 = vadd.f32 0.0, %v3660
        %3662 = vmatprep.mubr.bf16.mxu0 0
        %3663 = vmatmul.mubr.bf16.gmra.mrb[0].mxu0 %v3219
        %v3664 = vpop.f32.mrb[0].mxu0
        %v3665 = vadd.f32 0.0, %v3664
        %v3666 = vpop.f32.mrb[0].mxu0
        %v3667 = vadd.f32 0.0, %v3666
        %v3668 = vpop.f32.mrb[0].mxu0
        %v3669 = vadd.f32 0.0, %v3668
        %v3670 = vpop.f32.mrb[0].mxu0
        %v3671 = vadd.f32 0.0, %v3670
        %3672 = vmatprep.mubr.bf16.mxu0 0
        %3673 = vmatmul.mubr.bf16.gmra.mrb[0].mxu0 %v3220
        %v3674 = vpop.f32.mrb[0].mxu0
        %v3675 = vadd.f32 0.0, %v3674
        %v3676 = vpop.f32.mrb[0].mxu0
        %v3677 = vadd.f32 0.0, %v3676
        %v3678 = vpop.f32.mrb[0].mxu0
        %v3679 = vadd.f32 0.0, %v3678
        %v3680 = vpop.f32.mrb[0].mxu0
        %v3681 = vadd.f32 0.0, %v3680
        %3682 = vmatprep.mubr.bf16.mxu0 0
        %3683 = vmatmul.mubr.bf16.gmra.mrb[0].mxu0 %v3221
        %v3684 = vpop.f32.mrb[0].mxu0
        %v3685 = vadd.f32 0.0, %v3684
        %v3686 = vpop.f32.mrb[0].mxu0
        %v3687 = vadd.f32 0.0, %v3686
        %v3688 = vpop.f32.mrb[0].mxu0
        %v3689 = vadd.f32 0.0, %v3688
        %v3690 = vpop.f32.mrb[0].mxu0
        %v3691 = vadd.f32 0.0, %v3690
        %3692 = vmatprep.mubr.bf16.mxu0 0
        %3693 = vmatmul.mubr.bf16.gmra.mrb[0].mxu0 %v3222
        %v3694 = vpop.f32.mrb[0].mxu0
        %v3695 = vadd.f32 0.0, %v3694
        %v3696 = vpop.f32.mrb[0].mxu0
        %v3697 = vadd.f32 0.0, %v3696
        %v3698 = vpop.f32.mrb[0].mxu0
        %v3699 = vadd.f32 0.0, %v3698
        %v3700 = vpop.f32.mrb[0].mxu0
        %v3701 = vadd.f32 0.0, %v3700
        %3702 = vmatprep.mubr.bf16.mxu0 0
        %3703 = vmatmul.mubr.bf16.gmra.mrb[0].mxu0 %v3223
        %v3704 = vpop.f32.mrb[0].mxu0
        %v3705 = vadd.f32 0.0, %v3704
        %v3706 = vpop.f32.mrb[0].mxu0
        %v3707 = vadd.f32 0.0, %v3706
        %v3708 = vpop.f32.mrb[0].mxu0
        %v3709 = vadd.f32 0.0, %v3708
        %v3710 = vpop.f32.mrb[0].mxu0
        %v3711 = vadd.f32 0.0, %v3710
        %3712 = vmatprep.mubr.bf16.mxu0 0
        %3713 = vmatmul.mubr.bf16.gmra.mrb[0].mxu0 %v3224
        %v3714 = vpop.f32.mrb[0].mxu0
        %v3715 = vadd.f32 0.0, %v3714
        %v3716 = vpop.f32.mrb[0].mxu0
        %v3717 = vadd.f32 0.0, %v3716
        %v3718 = vpop.f32.mrb[0].mxu0
        %v3719 = vadd.f32 0.0, %v3718
        %v3720 = vpop.f32.mrb[0].mxu0
        %v3721 = vadd.f32 0.0, %v3720
        %3722 = vmatprep.mubr.bf16.mxu0 0
        %3723 = vmatmul.mubr.bf16.gmra.mrb[0].mxu0 %v3225
        %v3724 = vpop.f32.mrb[0].mxu0
        %v3725 = vadd.f32 0.0, %v3724
        %v3726 = vpop.f32.mrb[0].mxu0
        %v3727 = vadd.f32 0.0, %v3726
        %v3728 = vpop.f32.mrb[0].mxu0
        %v3729 = vadd.f32 0.0, %v3728
        %v3730 = vpop.f32.mrb[0].mxu0
        %v3731 = vadd.f32 0.0, %v3730
        %3732 = vmatprep.mubr.bf16.mxu0 0
        %3733 = vmatmul.mubr.bf16.gmra.mrb[0].mxu0 %v3226
        %v3734 = vpop.f32.mrb[0].mxu0
        %v3735 = vadd.f32 0.0, %v3734
        %v3736 = vpop.f32.mrb[0].mxu0
        %v3737 = vadd.f32 0.0, %v3736
        %v3738 = vpop.f32.mrb[0].mxu0
        %v3739 = vadd.f32 0.0, %v3738
        %v3740 = vpop.f32.mrb[0].mxu0
        %v3741 = vadd.f32 0.0, %v3740
        %3742 = vmatprep.mubr.bf16.mxu0 0
        %3743 = vmatmul.mubr.bf16.gmra.mrb[0].mxu0 %v3227
        %v3744 = vpop.f32.mrb[0].mxu0
        %v3745 = vadd.f32 0.0, %v3744
        %v3746 = vpop.f32.mrb[0].mxu0
        %v3747 = vadd.f32 0.0, %v3746
        %v3748 = vpop.f32.mrb[0].mxu0
        %v3749 = vadd.f32 0.0, %v3748
        %v3750 = vpop.f32.mrb[0].mxu0
        %v3751 = vadd.f32 0.0, %v3750
        %3752 = vmatprep.mubr.bf16.mxu0 0
        %3753 = vmatmul.mubr.bf16.gmra.mrb[0].mxu0 %v3228
        %v3754 = vpop.f32.mrb[0].mxu0
        %v3755 = vadd.f32 0.0, %v3754
        %v3756 = vpop.f32.mrb[0].mxu0
        %v3757 = vadd.f32 0.0, %v3756
        %v3758 = vpop.f32.mrb[0].mxu0
        %v3759 = vadd.f32 0.0, %v3758
        %v3760 = vpop.f32.mrb[0].mxu0
        %v3761 = vadd.f32 0.0, %v3760
        %3762 = vmatprep.mubr.bf16.mxu0 0
        %3763 = vmatmul.mubr.bf16.gmra.mrb[0].mxu0 %v3229
        %v3764 = vpop.f32.mrb[0].mxu0
        %v3765 = vadd.f32 0.0, %v3764
        %v3766 = vpop.f32.mrb[0].mxu0
        %v3767 = vadd.f32 0.0, %v3766
        %v3768 = vpop.f32.mrb[0].mxu0
        %v3769 = vadd.f32 0.0, %v3768
        %v3770 = vpop.f32.mrb[0].mxu0
        %v3771 = vadd.f32 0.0, %v3770
        %3772 = vmatprep.mubr.bf16.mxu0 0
        %3773 = vmatmul.mubr.bf16.gmra.mrb[0].mxu0 %v3230
        %v3774 = vpop.f32.mrb[0].mxu0
        %v3775 = vadd.f32 0.0, %v3774
        %v3776 = vpop.f32.mrb[0].mxu0
        %v3777 = vadd.f32 0.0, %v3776
        %v3778 = vpop.f32.mrb[0].mxu0
        %v3779 = vadd.f32 0.0, %v3778
        %v3780 = vpop.f32.mrb[0].mxu0
        %v3781 = vadd.f32 0.0, %v3780
        %3782 = vmatprep.mubr.bf16.mxu0 0
        %3783 = vmatmul.mubr.bf16.gmra.mrb[0].mxu0 %v3231
        %v3784 = vpop.f32.mrb[0].mxu0
        %v3785 = vadd.f32 0.0, %v3784
        %v3786 = vpop.f32.mrb[0].mxu0
        %v3787 = vadd.f32 0.0, %v3786
        %v3788 = vpop.f32.mrb[0].mxu0
        %v3789 = vadd.f32 0.0, %v3788
        %v3790 = vpop.f32.mrb[0].mxu0
        %v3791 = vadd.f32 0.0, %v3790
        %3792 = vdwg.mxu0
        %v3889 = vunpack.c.l.b16 %v2768
        %v3890 = vunpack.c.l.b16 %v2769
        %v3891 = vunpack.c.l.b16 %v2770
        %v3892 = vunpack.c.l.b16 %v2771
        %v3893 = vunpack.c.l.b16 %v2772
        %v3894 = vunpack.c.l.b16 %v2773
        %v3895 = vunpack.c.l.b16 %v2774
        %v3896 = vunpack.c.l.b16 %v2775
        %v3897 = vunpack.c.l.b16 %v2776
        %v3898 = vunpack.c.l.b16 %v2777
        %v3899 = vunpack.c.l.b16 %v2778
        %v3900 = vunpack.c.l.b16 %v2779
        %v3901 = vunpack.c.l.b16 %v2780
        %v3902 = vunpack.c.l.b16 %v2781
        %v3903 = vunpack.c.l.b16 %v2782
        %v3904 = vunpack.c.l.b16 %v2783
        %v3905 = vunpack.c.l.b16 %v2784
        %v3906 = vunpack.c.l.b16 %v2785
        %v3907 = vunpack.c.l.b16 %v2786
        %v3908 = vunpack.c.l.b16 %v2787
        %v3909 = vunpack.c.l.b16 %v2788
        %v3910 = vunpack.c.l.b16 %v2789
        %v3911 = vunpack.c.l.b16 %v2790
        %v3912 = vunpack.c.l.b16 %v2791
        %v3913 = vunpack.c.l.b16 %v2792
        %v3914 = vunpack.c.l.b16 %v2793
        %v3915 = vunpack.c.l.b16 %v2794
        %v3916 = vunpack.c.l.b16 %v2795
        %v3917 = vunpack.c.l.b16 %v2796
        %v3918 = vunpack.c.l.b16 %v2797
        %v3919 = vunpack.c.l.b16 %v2798
        %v3920 = vunpack.c.l.b16 %v2799
        %v3921 = vunpack.c.l.b16 %v2800
        %v3922 = vunpack.c.l.b16 %v2801
        %v3923 = vunpack.c.l.b16 %v2802
        %v3924 = vunpack.c.l.b16 %v2803
        %v3925 = vunpack.c.l.b16 %v2804
        %v3926 = vunpack.c.l.b16 %v2805
        %v3927 = vunpack.c.l.b16 %v2806
        %v3928 = vunpack.c.l.b16 %v2807
        %v3929 = vunpack.c.l.b16 %v2808
        %v3930 = vunpack.c.l.b16 %v2809
        %v3931 = vunpack.c.l.b16 %v2810
        %v3932 = vunpack.c.l.b16 %v2811
        %v3933 = vunpack.c.l.b16 %v2812
        %v3934 = vunpack.c.l.b16 %v2813
        %v3935 = vunpack.c.l.b16 %v2814
        %v3936 = vunpack.c.l.b16 %v2815
        %v3937 = vunpack.c.l.b16 %v2816
        %v3938 = vunpack.c.l.b16 %v2817
        %v3939 = vunpack.c.l.b16 %v2818
        %v3940 = vunpack.c.l.b16 %v2819
        %v3941 = vunpack.c.l.b16 %v2820
        %v3942 = vunpack.c.l.b16 %v2821
        %v3943 = vunpack.c.l.b16 %v2822
        %v3944 = vunpack.c.l.b16 %v2823
        %v3945 = vunpack.c.l.b16 %v2824
        %v3946 = vunpack.c.l.b16 %v2825
        %v3947 = vunpack.c.l.b16 %v2826
        %v3948 = vunpack.c.l.b16 %v2827
        %v3949 = vunpack.c.l.b16 %v2828
        %v3950 = vunpack.c.l.b16 %v2829
        %v3951 = vunpack.c.l.b16 %v2830
        %v3952 = vunpack.c.l.b16 %v2831
        %v3953 = vunpack.c.l.b16 %v2832
        %v3954 = vunpack.c.l.b16 %v2833
        %v3955 = vunpack.c.l.b16 %v2834
        %v3956 = vunpack.c.l.b16 %v2835
        %v3957 = vunpack.c.l.b16 %v2836
        %v3958 = vunpack.c.l.b16 %v2837
        %v3959 = vunpack.c.l.b16 %v2838
        %v3960 = vunpack.c.l.b16 %v2839
        %v3961 = vunpack.c.l.b16 %v2840
        %v3962 = vunpack.c.l.b16 %v2841
        %v3963 = vunpack.c.l.b16 %v2842
        %v3964 = vunpack.c.l.b16 %v2843
        %v3965 = vunpack.c.l.b16 %v2844
        %v3966 = vunpack.c.l.b16 %v2845
        %v3967 = vunpack.c.l.b16 %v2846
        %v3968 = vunpack.c.l.b16 %v2847
        %v3969 = vunpack.c.l.b16 %v2848
        %v3970 = vunpack.c.l.b16 %v2849
        %v3971 = vunpack.c.l.b16 %v2850
        %v3972 = vunpack.c.l.b16 %v2851
        %v3973 = vunpack.c.l.b16 %v2852
        %v3974 = vunpack.c.l.b16 %v2853
        %v3975 = vunpack.c.l.b16 %v2854
        %v3976 = vunpack.c.l.b16 %v2855
        %v3977 = vunpack.c.l.b16 %v2856
        %v3978 = vunpack.c.l.b16 %v2857
        %v3979 = vunpack.c.l.b16 %v2858
        %v3980 = vunpack.c.l.b16 %v2859
        %v3981 = vunpack.c.l.b16 %v2860
        %v3982 = vunpack.c.l.b16 %v2861
        %v3983 = vunpack.c.l.b16 %v2862
        %v3984 = vunpack.c.l.b16 %v2863
        %v3985 = vpack.c.b16 %v3890, %v3889
        %v3986 = vpack.c.b16 %v3892, %v3891
        %v3987 = vpack.c.b16 %v3894, %v3893
        %v3988 = vpack.c.b16 %v3896, %v3895
        %v3989 = vpack.c.b16 %v3898, %v3897
        %v3990 = vpack.c.b16 %v3900, %v3899
        %v3991 = vpack.c.b16 %v3902, %v3901
        %v3992 = vpack.c.b16 %v3904, %v3903
        %v3993 = vpack.c.b16 %v3906, %v3905
        %v3994 = vpack.c.b16 %v3908, %v3907
        %v3995 = vpack.c.b16 %v3910, %v3909
        %v3996 = vpack.c.b16 %v3912, %v3911
        %v3997 = vpack.c.b16 %v3914, %v3913
        %v3998 = vpack.c.b16 %v3916, %v3915
        %v3999 = vpack.c.b16 %v3918, %v3917
        %v4000 = vpack.c.b16 %v3920, %v3919
        %v4001 = vpack.c.b16 %v3922, %v3921
        %v4002 = vpack.c.b16 %v3924, %v3923
        %v4003 = vpack.c.b16 %v3926, %v3925
        %v4004 = vpack.c.b16 %v3928, %v3927
        %v4005 = vpack.c.b16 %v3930, %v3929
        %v4006 = vpack.c.b16 %v3932, %v3931
        %v4007 = vpack.c.b16 %v3934, %v3933
        %v4008 = vpack.c.b16 %v3936, %v3935
        %v4009 = vpack.c.b16 %v3938, %v3937
        %v4010 = vpack.c.b16 %v3940, %v3939
        %v4011 = vpack.c.b16 %v3942, %v3941
        %v4012 = vpack.c.b16 %v3944, %v3943
        %v4013 = vpack.c.b16 %v3946, %v3945
        %v4014 = vpack.c.b16 %v3948, %v3947
        %v4015 = vpack.c.b16 %v3950, %v3949
        %v4016 = vpack.c.b16 %v3952, %v3951
        %v4017 = vpack.c.b16 %v3954, %v3953
        %v4018 = vpack.c.b16 %v3956, %v3955
        %v4019 = vpack.c.b16 %v3958, %v3957
        %v4020 = vpack.c.b16 %v3960, %v3959
        %v4021 = vpack.c.b16 %v3962, %v3961
        %v4022 = vpack.c.b16 %v3964, %v3963
        %v4023 = vpack.c.b16 %v3966, %v3965
        %v4024 = vpack.c.b16 %v3968, %v3967
        %v4025 = vpack.c.b16 %v3970, %v3969
        %v4026 = vpack.c.b16 %v3972, %v3971
        %v4027 = vpack.c.b16 %v3974, %v3973
        %v4028 = vpack.c.b16 %v3976, %v3975
        %v4029 = vpack.c.b16 %v3978, %v3977
        %v4030 = vpack.c.b16 %v3980, %v3979
        %v4031 = vpack.c.b16 %v3982, %v3981
        %v4032 = vpack.c.b16 %v3984, %v3983
        %4081 = vmatprep.subr.bf16.mxu0 %v2865
        %4082 = vmatpush1.bf16.msra.mxu0 %v2864
        %4083 = vmatprep.subr.bf16.mxu0 %v2867
        %4084 = vmatpush1.bf16.msra.mxu0 %v2866
        %4085 = vmatprep.subr.bf16.mxu0 %v2869
        %4086 = vmatpush1.bf16.msra.mxu0 %v2868
        %4087 = vmatprep.subr.bf16.mxu0 %v2871
        %4088 = vmatpush1.bf16.msra.mxu0 %v2870
        %4089 = vmatprep.subr.bf16.mxu0 %v2873
        %4090 = vmatpush1.bf16.msra.mxu0 %v2872
        %4091 = vmatprep.subr.bf16.mxu0 %v2875
        %4092 = vmatpush1.bf16.msra.mxu0 %v2874
        %4093 = vmatprep.subr.bf16.mxu0 %v2877
        %4094 = vmatpush1.bf16.msra.mxu0 %v2876
        %4095 = vmatprep.subr.bf16.mxu0 %v2879
        %4096 = vmatpush1.bf16.msra.mxu0 %v2878
        %4097 = vmatprep.subr.bf16.mxu0 0
        %4098 = vmatpush1.bf16.msra.mxu0 0
        %4099 = vmatprep.subr.bf16.mxu0 0
        %4100 = vmatpush1.bf16.msra.mxu0 0
        %4101 = vmatprep.subr.bf16.mxu0 0
        %4102 = vmatpush1.bf16.msra.mxu0 0
        %4103 = vmatprep.subr.bf16.mxu0 0
        %4104 = vmatpush1.bf16.msra.mxu0 0
        %4105 = vmatprep.subr.bf16.mxu0 0
        %4106 = vmatpush1.bf16.msra.mxu0 0
        %4107 = vmatprep.subr.bf16.mxu0 0
        %4108 = vmatpush1.bf16.msra.mxu0 0
        %4109 = vmatprep.subr.bf16.mxu0 0
        %4110 = vmatpush1.bf16.msra.mxu0 0
        %4111 = vmatprep.subr.bf16.mxu0 0
        %4112 = vmatpush1.bf16.msra.mxu0 0
        %4113 = vmatprep.mubr.bf16.mxu0 0
        %4114 = vmatmul.mubr.bf16.gmra.mrb[0].mxu0 %v3985
        %v4115 = vpop.f32.mrb[0].mxu0
        %v4116 = vadd.f32 %v3315, %v4115
        %v4117 = vpop.f32.mrb[0].mxu0
        %v4118 = vadd.f32 %v3317, %v4117
        %v4119 = vpop.f32.mrb[0].mxu0
        %v4120 = vadd.f32 %v3319, %v4119
        %v4121 = vpop.f32.mrb[0].mxu0
        %v4122 = vadd.f32 %v3321, %v4121
        %4123 = vmatprep.mubr.bf16.mxu0 0
        %4124 = vmatmul.mubr.bf16.gmra.mrb[0].mxu0 %v3986
        %v4125 = vpop.f32.mrb[0].mxu0
        %v4126 = vadd.f32 %v3325, %v4125
        %v4127 = vpop.f32.mrb[0].mxu0
        %v4128 = vadd.f32 %v3327, %v4127
        %v4129 = vpop.f32.mrb[0].mxu0
        %v4130 = vadd.f32 %v3329, %v4129
        %v4131 = vpop.f32.mrb[0].mxu0
        %v4132 = vadd.f32 %v3331, %v4131
        %4133 = vmatprep.mubr.bf16.mxu0 0
        %4134 = vmatmul.mubr.bf16.gmra.mrb[0].mxu0 %v3987
        %v4135 = vpop.f32.mrb[0].mxu0
        %v4136 = vadd.f32 %v3335, %v4135
        %v4137 = vpop.f32.mrb[0].mxu0
        %v4138 = vadd.f32 %v3337, %v4137
        %v4139 = vpop.f32.mrb[0].mxu0
        %v4140 = vadd.f32 %v3339, %v4139
        %v4141 = vpop.f32.mrb[0].mxu0
        %v4142 = vadd.f32 %v3341, %v4141
        %4143 = vmatprep.mubr.bf16.mxu0 0
        %4144 = vmatmul.mubr.bf16.gmra.mrb[0].mxu0 %v3988
        %v4145 = vpop.f32.mrb[0].mxu0
        %v4146 = vadd.f32 %v3345, %v4145
        %v4147 = vpop.f32.mrb[0].mxu0
        %v4148 = vadd.f32 %v3347, %v4147
        %v4149 = vpop.f32.mrb[0].mxu0
        %v4150 = vadd.f32 %v3349, %v4149
        %v4151 = vpop.f32.mrb[0].mxu0
        %v4152 = vadd.f32 %v3351, %v4151
        %4153 = vmatprep.mubr.bf16.mxu0 0
        %4154 = vmatmul.mubr.bf16.gmra.mrb[0].mxu0 %v3989
        %v4155 = vpop.f32.mrb[0].mxu0
        %v4156 = vadd.f32 %v3355, %v4155
        %v4157 = vpop.f32.mrb[0].mxu0
        %v4158 = vadd.f32 %v3357, %v4157
        %v4159 = vpop.f32.mrb[0].mxu0
        %v4160 = vadd.f32 %v3359, %v4159
        %v4161 = vpop.f32.mrb[0].mxu0
        %v4162 = vadd.f32 %v3361, %v4161
        %4163 = vmatprep.mubr.bf16.mxu0 0
        %4164 = vmatmul.mubr.bf16.gmra.mrb[0].mxu0 %v3990
        %v4165 = vpop.f32.mrb[0].mxu0
        %v4166 = vadd.f32 %v3365, %v4165
        %v4167 = vpop.f32.mrb[0].mxu0
        %v4168 = vadd.f32 %v3367, %v4167
        %v4169 = vpop.f32.mrb[0].mxu0
        %v4170 = vadd.f32 %v3369, %v4169
        %v4171 = vpop.f32.mrb[0].mxu0
        %v4172 = vadd.f32 %v3371, %v4171
        %4173 = vmatprep.mubr.bf16.mxu0 0
        %4174 = vmatmul.mubr.bf16.gmra.mrb[0].mxu0 %v3991
        %v4175 = vpop.f32.mrb[0].mxu0
        %v4176 = vadd.f32 %v3375, %v4175
        %v4177 = vpop.f32.mrb[0].mxu0
        %v4178 = vadd.f32 %v3377, %v4177
        %v4179 = vpop.f32.mrb[0].mxu0
        %v4180 = vadd.f32 %v3379, %v4179
        %v4181 = vpop.f32.mrb[0].mxu0
        %v4182 = vadd.f32 %v3381, %v4181
        %4183 = vmatprep.mubr.bf16.mxu0 0
        %4184 = vmatmul.mubr.bf16.gmra.mrb[0].mxu0 %v3992
        %v4185 = vpop.f32.mrb[0].mxu0
        %v4186 = vadd.f32 %v3385, %v4185
        %v4187 = vpop.f32.mrb[0].mxu0
        %v4188 = vadd.f32 %v3387, %v4187
        %v4189 = vpop.f32.mrb[0].mxu0
        %v4190 = vadd.f32 %v3389, %v4189
        %v4191 = vpop.f32.mrb[0].mxu0
        %v4192 = vadd.f32 %v3391, %v4191
        %4193 = vmatprep.mubr.bf16.mxu0 0
        %4194 = vmatmul.mubr.bf16.gmra.mrb[0].mxu0 %v3993
        %v4195 = vpop.f32.mrb[0].mxu0
        %v4196 = vadd.f32 %v3395, %v4195
        %v4197 = vpop.f32.mrb[0].mxu0
        %v4198 = vadd.f32 %v3397, %v4197
        %v4199 = vpop.f32.mrb[0].mxu0
        %v4200 = vadd.f32 %v3399, %v4199
        %v4201 = vpop.f32.mrb[0].mxu0
        %v4202 = vadd.f32 %v3401, %v4201
        %4203 = vmatprep.mubr.bf16.mxu0 0
        %4204 = vmatmul.mubr.bf16.gmra.mrb[0].mxu0 %v3994
        %v4205 = vpop.f32.mrb[0].mxu0
        %v4206 = vadd.f32 %v3405, %v4205
        %v4207 = vpop.f32.mrb[0].mxu0
        %v4208 = vadd.f32 %v3407, %v4207
        %v4209 = vpop.f32.mrb[0].mxu0
        %v4210 = vadd.f32 %v3409, %v4209
        %v4211 = vpop.f32.mrb[0].mxu0
        %v4212 = vadd.f32 %v3411, %v4211
        %4213 = vmatprep.mubr.bf16.mxu0 0
        %4214 = vmatmul.mubr.bf16.gmra.mrb[0].mxu0 %v3995
        %v4215 = vpop.f32.mrb[0].mxu0
        %v4216 = vadd.f32 %v3415, %v4215
        %v4217 = vpop.f32.mrb[0].mxu0
        %v4218 = vadd.f32 %v3417, %v4217
        %v4219 = vpop.f32.mrb[0].mxu0
        %v4220 = vadd.f32 %v3419, %v4219
        %v4221 = vpop.f32.mrb[0].mxu0
        %v4222 = vadd.f32 %v3421, %v4221
        %4223 = vmatprep.mubr.bf16.mxu0 0
        %4224 = vmatmul.mubr.bf16.gmra.mrb[0].mxu0 %v3996
        %v4225 = vpop.f32.mrb[0].mxu0
        %v4226 = vadd.f32 %v3425, %v4225
        %v4227 = vpop.f32.mrb[0].mxu0
        %v4228 = vadd.f32 %v3427, %v4227
        %v4229 = vpop.f32.mrb[0].mxu0
        %v4230 = vadd.f32 %v3429, %v4229
        %v4231 = vpop.f32.mrb[0].mxu0
        %v4232 = vadd.f32 %v3431, %v4231
        %4233 = vmatprep.mubr.bf16.mxu0 0
        %4234 = vmatmul.mubr.bf16.gmra.mrb[0].mxu0 %v3997
        %v4235 = vpop.f32.mrb[0].mxu0
        %v4236 = vadd.f32 %v3435, %v4235
        %v4237 = vpop.f32.mrb[0].mxu0
        %v4238 = vadd.f32 %v3437, %v4237
        %v4239 = vpop.f32.mrb[0].mxu0
        %v4240 = vadd.f32 %v3439, %v4239
        %v4241 = vpop.f32.mrb[0].mxu0
        %v4242 = vadd.f32 %v3441, %v4241
        %4243 = vmatprep.mubr.bf16.mxu0 0
        %4244 = vmatmul.mubr.bf16.gmra.mrb[0].mxu0 %v3998
        %v4245 = vpop.f32.mrb[0].mxu0
        %v4246 = vadd.f32 %v3445, %v4245
        %v4247 = vpop.f32.mrb[0].mxu0
        %v4248 = vadd.f32 %v3447, %v4247
        %v4249 = vpop.f32.mrb[0].mxu0
        %v4250 = vadd.f32 %v3449, %v4249
        %v4251 = vpop.f32.mrb[0].mxu0
        %v4252 = vadd.f32 %v3451, %v4251
        %4253 = vmatprep.mubr.bf16.mxu0 0
        %4254 = vmatmul.mubr.bf16.gmra.mrb[0].mxu0 %v3999
        %v4255 = vpop.f32.mrb[0].mxu0
        %v4256 = vadd.f32 %v3455, %v4255
        %v4257 = vpop.f32.mrb[0].mxu0
        %v4258 = vadd.f32 %v3457, %v4257
        %v4259 = vpop.f32.mrb[0].mxu0
        %v4260 = vadd.f32 %v3459, %v4259
        %v4261 = vpop.f32.mrb[0].mxu0
        %v4262 = vadd.f32 %v3461, %v4261
        %4263 = vmatprep.mubr.bf16.mxu0 0
        %4264 = vmatmul.mubr.bf16.gmra.mrb[0].mxu0 %v4000
        %v4265 = vpop.f32.mrb[0].mxu0
        %v4266 = vadd.f32 %v3465, %v4265
        %v4267 = vpop.f32.mrb[0].mxu0
        %v4268 = vadd.f32 %v3467, %v4267
        %v4269 = vpop.f32.mrb[0].mxu0
        %v4270 = vadd.f32 %v3469, %v4269
        %v4271 = vpop.f32.mrb[0].mxu0
        %v4272 = vadd.f32 %v3471, %v4271
        %4273 = vmatprep.mubr.bf16.mxu0 0
        %4274 = vmatmul.mubr.bf16.gmra.mrb[0].mxu0 %v4001
        %v4275 = vpop.f32.mrb[0].mxu0
        %v4276 = vadd.f32 %v3475, %v4275
        %v4277 = vpop.f32.mrb[0].mxu0
        %v4278 = vadd.f32 %v3477, %v4277
        %v4279 = vpop.f32.mrb[0].mxu0
        %v4280 = vadd.f32 %v3479, %v4279
        %v4281 = vpop.f32.mrb[0].mxu0
        %v4282 = vadd.f32 %v3481, %v4281
        %4283 = vmatprep.mubr.bf16.mxu0 0
        %4284 = vmatmul.mubr.bf16.gmra.mrb[0].mxu0 %v4002
        %v4285 = vpop.f32.mrb[0].mxu0
        %v4286 = vadd.f32 %v3485, %v4285
        %v4287 = vpop.f32.mrb[0].mxu0
        %v4288 = vadd.f32 %v3487, %v4287
        %v4289 = vpop.f32.mrb[0].mxu0
        %v4290 = vadd.f32 %v3489, %v4289
        %v4291 = vpop.f32.mrb[0].mxu0
        %v4292 = vadd.f32 %v3491, %v4291
        %4293 = vmatprep.mubr.bf16.mxu0 0
        %4294 = vmatmul.mubr.bf16.gmra.mrb[0].mxu0 %v4003
        %v4295 = vpop.f32.mrb[0].mxu0
        %v4296 = vadd.f32 %v3495, %v4295
        %v4297 = vpop.f32.mrb[0].mxu0
        %v4298 = vadd.f32 %v3497, %v4297
        %v4299 = vpop.f32.mrb[0].mxu0
        %v4300 = vadd.f32 %v3499, %v4299
        %v4301 = vpop.f32.mrb[0].mxu0
        %v4302 = vadd.f32 %v3501, %v4301
        %4303 = vmatprep.mubr.bf16.mxu0 0
        %4304 = vmatmul.mubr.bf16.gmra.mrb[0].mxu0 %v4004
        %v4305 = vpop.f32.mrb[0].mxu0
        %v4306 = vadd.f32 %v3505, %v4305
        %v4307 = vpop.f32.mrb[0].mxu0
        %v4308 = vadd.f32 %v3507, %v4307
        %v4309 = vpop.f32.mrb[0].mxu0
        %v4310 = vadd.f32 %v3509, %v4309
        %v4311 = vpop.f32.mrb[0].mxu0
        %v4312 = vadd.f32 %v3511, %v4311
        %4313 = vmatprep.mubr.bf16.mxu0 0
        %4314 = vmatmul.mubr.bf16.gmra.mrb[0].mxu0 %v4005
        %v4315 = vpop.f32.mrb[0].mxu0
        %v4316 = vadd.f32 %v3515, %v4315
        %v4317 = vpop.f32.mrb[0].mxu0
        %v4318 = vadd.f32 %v3517, %v4317
        %v4319 = vpop.f32.mrb[0].mxu0
        %v4320 = vadd.f32 %v3519, %v4319
        %v4321 = vpop.f32.mrb[0].mxu0
        %v4322 = vadd.f32 %v3521, %v4321
        %4323 = vmatprep.mubr.bf16.mxu0 0
        %4324 = vmatmul.mubr.bf16.gmra.mrb[0].mxu0 %v4006
        %v4325 = vpop.f32.mrb[0].mxu0
        %v4326 = vadd.f32 %v3525, %v4325
        %v4327 = vpop.f32.mrb[0].mxu0
        %v4328 = vadd.f32 %v3527, %v4327
        %v4329 = vpop.f32.mrb[0].mxu0
        %v4330 = vadd.f32 %v3529, %v4329
        %v4331 = vpop.f32.mrb[0].mxu0
        %v4332 = vadd.f32 %v3531, %v4331
        %4333 = vmatprep.mubr.bf16.mxu0 0
        %4334 = vmatmul.mubr.bf16.gmra.mrb[0].mxu0 %v4007
        %v4335 = vpop.f32.mrb[0].mxu0
        %v4336 = vadd.f32 %v3535, %v4335
        %v4337 = vpop.f32.mrb[0].mxu0
        %v4338 = vadd.f32 %v3537, %v4337
        %v4339 = vpop.f32.mrb[0].mxu0
        %v4340 = vadd.f32 %v3539, %v4339
        %v4341 = vpop.f32.mrb[0].mxu0
        %v4342 = vadd.f32 %v3541, %v4341
        %4343 = vmatprep.mubr.bf16.mxu0 0
        %4344 = vmatmul.mubr.bf16.gmra.mrb[0].mxu0 %v4008
        %v4345 = vpop.f32.mrb[0].mxu0
        %v4346 = vadd.f32 %v3545, %v4345
        %v4347 = vpop.f32.mrb[0].mxu0
        %v4348 = vadd.f32 %v3547, %v4347
        %v4349 = vpop.f32.mrb[0].mxu0
        %v4350 = vadd.f32 %v3549, %v4349
        %v4351 = vpop.f32.mrb[0].mxu0
        %v4352 = vadd.f32 %v3551, %v4351
        %4353 = vmatprep.mubr.bf16.mxu0 0
        %4354 = vmatmul.mubr.bf16.gmra.mrb[0].mxu0 %v4009
        %v4355 = vpop.f32.mrb[0].mxu0
        %v4356 = vadd.f32 %v3555, %v4355
        %v4357 = vpop.f32.mrb[0].mxu0
        %v4358 = vadd.f32 %v3557, %v4357
        %v4359 = vpop.f32.mrb[0].mxu0
        %v4360 = vadd.f32 %v3559, %v4359
        %v4361 = vpop.f32.mrb[0].mxu0
        %v4362 = vadd.f32 %v3561, %v4361
        %4363 = vmatprep.mubr.bf16.mxu0 0
        %4364 = vmatmul.mubr.bf16.gmra.mrb[0].mxu0 %v4010
        %v4365 = vpop.f32.mrb[0].mxu0
        %v4366 = vadd.f32 %v3565, %v4365
        %v4367 = vpop.f32.mrb[0].mxu0
        %v4368 = vadd.f32 %v3567, %v4367
        %v4369 = vpop.f32.mrb[0].mxu0
        %v4370 = vadd.f32 %v3569, %v4369
        %v4371 = vpop.f32.mrb[0].mxu0
        %v4372 = vadd.f32 %v3571, %v4371
        %4373 = vmatprep.mubr.bf16.mxu0 0
        %4374 = vmatmul.mubr.bf16.gmra.mrb[0].mxu0 %v4011
        %v4375 = vpop.f32.mrb[0].mxu0
        %v4376 = vadd.f32 %v3575, %v4375
        %v4377 = vpop.f32.mrb[0].mxu0
        %v4378 = vadd.f32 %v3577, %v4377
        %v4379 = vpop.f32.mrb[0].mxu0
        %v4380 = vadd.f32 %v3579, %v4379
        %v4381 = vpop.f32.mrb[0].mxu0
        %v4382 = vadd.f32 %v3581, %v4381
        %4383 = vmatprep.mubr.bf16.mxu0 0
        %4384 = vmatmul.mubr.bf16.gmra.mrb[0].mxu0 %v4012
        %v4385 = vpop.f32.mrb[0].mxu0
        %v4386 = vadd.f32 %v3585, %v4385
        %v4387 = vpop.f32.mrb[0].mxu0
        %v4388 = vadd.f32 %v3587, %v4387
        %v4389 = vpop.f32.mrb[0].mxu0
        %v4390 = vadd.f32 %v3589, %v4389
        %v4391 = vpop.f32.mrb[0].mxu0
        %v4392 = vadd.f32 %v3591, %v4391
        %4393 = vmatprep.mubr.bf16.mxu0 0
        %4394 = vmatmul.mubr.bf16.gmra.mrb[0].mxu0 %v4013
        %v4395 = vpop.f32.mrb[0].mxu0
        %v4396 = vadd.f32 %v3595, %v4395
        %v4397 = vpop.f32.mrb[0].mxu0
        %v4398 = vadd.f32 %v3597, %v4397
        %v4399 = vpop.f32.mrb[0].mxu0
        %v4400 = vadd.f32 %v3599, %v4399
        %v4401 = vpop.f32.mrb[0].mxu0
        %v4402 = vadd.f32 %v3601, %v4401
        %4403 = vmatprep.mubr.bf16.mxu0 0
        %4404 = vmatmul.mubr.bf16.gmra.mrb[0].mxu0 %v4014
        %v4405 = vpop.f32.mrb[0].mxu0
        %v4406 = vadd.f32 %v3605, %v4405
        %v4407 = vpop.f32.mrb[0].mxu0
        %v4408 = vadd.f32 %v3607, %v4407
        %v4409 = vpop.f32.mrb[0].mxu0
        %v4410 = vadd.f32 %v3609, %v4409
        %v4411 = vpop.f32.mrb[0].mxu0
        %v4412 = vadd.f32 %v3611, %v4411
        %4413 = vmatprep.mubr.bf16.mxu0 0
        %4414 = vmatmul.mubr.bf16.gmra.mrb[0].mxu0 %v4015
        %v4415 = vpop.f32.mrb[0].mxu0
        %v4416 = vadd.f32 %v3615, %v4415
        %v4417 = vpop.f32.mrb[0].mxu0
        %v4418 = vadd.f32 %v3617, %v4417
        %v4419 = vpop.f32.mrb[0].mxu0
        %v4420 = vadd.f32 %v3619, %v4419
        %v4421 = vpop.f32.mrb[0].mxu0
        %v4422 = vadd.f32 %v3621, %v4421
        %4423 = vmatprep.mubr.bf16.mxu0 0
        %4424 = vmatmul.mubr.bf16.gmra.mrb[0].mxu0 %v4016
        %v4425 = vpop.f32.mrb[0].mxu0
        %v4426 = vadd.f32 %v3625, %v4425
        %v4427 = vpop.f32.mrb[0].mxu0
        %v4428 = vadd.f32 %v3627, %v4427
        %v4429 = vpop.f32.mrb[0].mxu0
        %v4430 = vadd.f32 %v3629, %v4429
        %v4431 = vpop.f32.mrb[0].mxu0
        %v4432 = vadd.f32 %v3631, %v4431
        %4433 = vmatprep.mubr.bf16.mxu0 0
        %4434 = vmatmul.mubr.bf16.gmra.mrb[0].mxu0 %v4017
        %v4435 = vpop.f32.mrb[0].mxu0
        %v4436 = vadd.f32 %v3635, %v4435
        %v4437 = vpop.f32.mrb[0].mxu0
        %v4438 = vadd.f32 %v3637, %v4437
        %v4439 = vpop.f32.mrb[0].mxu0
        %v4440 = vadd.f32 %v3639, %v4439
        %v4441 = vpop.f32.mrb[0].mxu0
        %v4442 = vadd.f32 %v3641, %v4441
        %4443 = vmatprep.mubr.bf16.mxu0 0
        %4444 = vmatmul.mubr.bf16.gmra.mrb[0].mxu0 %v4018
        %v4445 = vpop.f32.mrb[0].mxu0
        %v4446 = vadd.f32 %v3645, %v4445
        %v4447 = vpop.f32.mrb[0].mxu0
        %v4448 = vadd.f32 %v3647, %v4447
        %v4449 = vpop.f32.mrb[0].mxu0
        %v4450 = vadd.f32 %v3649, %v4449
        %v4451 = vpop.f32.mrb[0].mxu0
        %v4452 = vadd.f32 %v3651, %v4451
        %4453 = vmatprep.mubr.bf16.mxu0 0
        %4454 = vmatmul.mubr.bf16.gmra.mrb[0].mxu0 %v4019
        %v4455 = vpop.f32.mrb[0].mxu0
        %v4456 = vadd.f32 %v3655, %v4455
        %v4457 = vpop.f32.mrb[0].mxu0
        %v4458 = vadd.f32 %v3657, %v4457
        %v4459 = vpop.f32.mrb[0].mxu0
        %v4460 = vadd.f32 %v3659, %v4459
        %v4461 = vpop.f32.mrb[0].mxu0
        %v4462 = vadd.f32 %v3661, %v4461
        %4463 = vmatprep.mubr.bf16.mxu0 0
        %4464 = vmatmul.mubr.bf16.gmra.mrb[0].mxu0 %v4020
        %v4465 = vpop.f32.mrb[0].mxu0
        %v4466 = vadd.f32 %v3665, %v4465
        %v4467 = vpop.f32.mrb[0].mxu0
        %v4468 = vadd.f32 %v3667, %v4467
        %v4469 = vpop.f32.mrb[0].mxu0
        %v4470 = vadd.f32 %v3669, %v4469
        %v4471 = vpop.f32.mrb[0].mxu0
        %v4472 = vadd.f32 %v3671, %v4471
        %4473 = vmatprep.mubr.bf16.mxu0 0
        %4474 = vmatmul.mubr.bf16.gmra.mrb[0].mxu0 %v4021
        %v4475 = vpop.f32.mrb[0].mxu0
        %v4476 = vadd.f32 %v3675, %v4475
        %v4477 = vpop.f32.mrb[0].mxu0
        %v4478 = vadd.f32 %v3677, %v4477
        %v4479 = vpop.f32.mrb[0].mxu0
        %v4480 = vadd.f32 %v3679, %v4479
        %v4481 = vpop.f32.mrb[0].mxu0
        %v4482 = vadd.f32 %v3681, %v4481
        %4483 = vmatprep.mubr.bf16.mxu0 0
        %4484 = vmatmul.mubr.bf16.gmra.mrb[0].mxu0 %v4022
        %v4485 = vpop.f32.mrb[0].mxu0
        %v4486 = vadd.f32 %v3685, %v4485
        %v4487 = vpop.f32.mrb[0].mxu0
        %v4488 = vadd.f32 %v3687, %v4487
        %v4489 = vpop.f32.mrb[0].mxu0
        %v4490 = vadd.f32 %v3689, %v4489
        %v4491 = vpop.f32.mrb[0].mxu0
        %v4492 = vadd.f32 %v3691, %v4491
        %4493 = vmatprep.mubr.bf16.mxu0 0
        %4494 = vmatmul.mubr.bf16.gmra.mrb[0].mxu0 %v4023
        %v4495 = vpop.f32.mrb[0].mxu0
        %v4496 = vadd.f32 %v3695, %v4495
        %v4497 = vpop.f32.mrb[0].mxu0
        %v4498 = vadd.f32 %v3697, %v4497
        %v4499 = vpop.f32.mrb[0].mxu0
        %v4500 = vadd.f32 %v3699, %v4499
        %v4501 = vpop.f32.mrb[0].mxu0
        %v4502 = vadd.f32 %v3701, %v4501
        %4503 = vmatprep.mubr.bf16.mxu0 0
        %4504 = vmatmul.mubr.bf16.gmra.mrb[0].mxu0 %v4024
        %v4505 = vpop.f32.mrb[0].mxu0
        %v4506 = vadd.f32 %v3705, %v4505
        %v4507 = vpop.f32.mrb[0].mxu0
        %v4508 = vadd.f32 %v3707, %v4507
        %v4509 = vpop.f32.mrb[0].mxu0
        %v4510 = vadd.f32 %v3709, %v4509
        %v4511 = vpop.f32.mrb[0].mxu0
        %v4512 = vadd.f32 %v3711, %v4511
        %4513 = vmatprep.mubr.bf16.mxu0 0
        %4514 = vmatmul.mubr.bf16.gmra.mrb[0].mxu0 %v4025
        %v4515 = vpop.f32.mrb[0].mxu0
        %v4516 = vadd.f32 %v3715, %v4515
        %v4517 = vpop.f32.mrb[0].mxu0
        %v4518 = vadd.f32 %v3717, %v4517
        %v4519 = vpop.f32.mrb[0].mxu0
        %v4520 = vadd.f32 %v3719, %v4519
        %v4521 = vpop.f32.mrb[0].mxu0
        %v4522 = vadd.f32 %v3721, %v4521
        %4523 = vmatprep.mubr.bf16.mxu0 0
        %4524 = vmatmul.mubr.bf16.gmra.mrb[0].mxu0 %v4026
        %v4525 = vpop.f32.mrb[0].mxu0
        %v4526 = vadd.f32 %v3725, %v4525
        %v4527 = vpop.f32.mrb[0].mxu0
        %v4528 = vadd.f32 %v3727, %v4527
        %v4529 = vpop.f32.mrb[0].mxu0
        %v4530 = vadd.f32 %v3729, %v4529
        %v4531 = vpop.f32.mrb[0].mxu0
        %v4532 = vadd.f32 %v3731, %v4531
        %4533 = vmatprep.mubr.bf16.mxu0 0
        %4534 = vmatmul.mubr.bf16.gmra.mrb[0].mxu0 %v4027
        %v4535 = vpop.f32.mrb[0].mxu0
        %v4536 = vadd.f32 %v3735, %v4535
        %v4537 = vpop.f32.mrb[0].mxu0
        %v4538 = vadd.f32 %v3737, %v4537
        %v4539 = vpop.f32.mrb[0].mxu0
        %v4540 = vadd.f32 %v3739, %v4539
        %v4541 = vpop.f32.mrb[0].mxu0
        %v4542 = vadd.f32 %v3741, %v4541
        %4543 = vmatprep.mubr.bf16.mxu0 0
        %4544 = vmatmul.mubr.bf16.gmra.mrb[0].mxu0 %v4028
        %v4545 = vpop.f32.mrb[0].mxu0
        %v4546 = vadd.f32 %v3745, %v4545
        %v4547 = vpop.f32.mrb[0].mxu0
        %v4548 = vadd.f32 %v3747, %v4547
        %v4549 = vpop.f32.mrb[0].mxu0
        %v4550 = vadd.f32 %v3749, %v4549
        %v4551 = vpop.f32.mrb[0].mxu0
        %v4552 = vadd.f32 %v3751, %v4551
        %4553 = vmatprep.mubr.bf16.mxu0 0
        %4554 = vmatmul.mubr.bf16.gmra.mrb[0].mxu0 %v4029
        %v4555 = vpop.f32.mrb[0].mxu0
        %v4556 = vadd.f32 %v3755, %v4555
        %v4557 = vpop.f32.mrb[0].mxu0
        %v4558 = vadd.f32 %v3757, %v4557
        %v4559 = vpop.f32.mrb[0].mxu0
        %v4560 = vadd.f32 %v3759, %v4559
        %v4561 = vpop.f32.mrb[0].mxu0
        %v4562 = vadd.f32 %v3761, %v4561
        %4563 = vmatprep.mubr.bf16.mxu0 0
        %4564 = vmatmul.mubr.bf16.gmra.mrb[0].mxu0 %v4030
        %v4565 = vpop.f32.mrb[0].mxu0
        %v4566 = vadd.f32 %v3765, %v4565
        %v4567 = vpop.f32.mrb[0].mxu0
        %v4568 = vadd.f32 %v3767, %v4567
        %v4569 = vpop.f32.mrb[0].mxu0
        %v4570 = vadd.f32 %v3769, %v4569
        %v4571 = vpop.f32.mrb[0].mxu0
        %v4572 = vadd.f32 %v3771, %v4571
        %4573 = vmatprep.mubr.bf16.mxu0 0
        %4574 = vmatmul.mubr.bf16.gmra.mrb[0].mxu0 %v4031
        %v4575 = vpop.f32.mrb[0].mxu0
        %v4576 = vadd.f32 %v3775, %v4575
        %v4577 = vpop.f32.mrb[0].mxu0
        %v4578 = vadd.f32 %v3777, %v4577
        %v4579 = vpop.f32.mrb[0].mxu0
        %v4580 = vadd.f32 %v3779, %v4579
        %v4581 = vpop.f32.mrb[0].mxu0
        %v4582 = vadd.f32 %v3781, %v4581
        %4583 = vmatprep.mubr.bf16.mxu0 0
        %4584 = vmatmul.mubr.bf16.gmra.mrb[0].mxu0 %v4032
        %v4585 = vpop.f32.mrb[0].mxu0
        %v4586 = vadd.f32 %v3785, %v4585
        %v4587 = vpop.f32.mrb[0].mxu0
        %v4588 = vadd.f32 %v3787, %v4587
        %v4589 = vpop.f32.mrb[0].mxu0
        %v4590 = vadd.f32 %v3789, %v4589
        %v4591 = vpop.f32.mrb[0].mxu0
        %v4592 = vadd.f32 %v3791, %v4591
        %4593 = vdwg.mxu0
        %v4594 = vld [vmem:[%s5] sm:$0xff]
        %v4595 = vld [vmem:[%s5 + $0x8] sm:$0xff]
        %v4596 = vld [vmem:[%s5 + $0x10] sm:$0xff]
        %v4597 = vld [vmem:[%s5 + $0x18] sm:$0xff]
        %v4598 = vld [vmem:[%s5 + $0x20] sm:$0xff]
        %v4599 = vld [vmem:[%s5 + $0x28] sm:$0xff]
        %v4600 = vld [vmem:[%s5 + $0x30] sm:$0xff]
        %v4601 = vld [vmem:[%s5 + $0x38] sm:$0xff]
        %v4602 = vld [vmem:[%s5 + $0x40] sm:$0xff]
        %v4603 = vld [vmem:[%s5 + $0x48] sm:$0xff]
        %v4604 = vld [vmem:[%s5 + $0x50] sm:$0xff]
        %v4605 = vld [vmem:[%s5 + $0x58] sm:$0xff]
        %v4606 = vld [vmem:[%s5 + $0x60] sm:$0xff]
        %v4607 = vld [vmem:[%s5 + $0x68] sm:$0xff]
        %v4608 = vld [vmem:[%s5 + $0x70] sm:$0xff]
        %v4609 = vld [vmem:[%s5 + $0x78] sm:$0xff]
        %v4610 = vld [vmem:[%s5 + $0x80] sm:$0xff]
        %v4611 = vld [vmem:[%s5 + $0x88] sm:$0xff]
        %v4612 = vld [vmem:[%s5 + $0x90] sm:$0xff]
        %v4613 = vld [vmem:[%s5 + $0x98] sm:$0xff]
        %v4614 = vld [vmem:[%s5 + $0xa0] sm:$0xff]
        %v4615 = vld [vmem:[%s5 + $0xa8] sm:$0xff]
        %v4616 = vld [vmem:[%s5 + $0xb0] sm:$0xff]
        %v4617 = vld [vmem:[%s5 + $0xb8] sm:$0xff]
        %v4618 = vld [vmem:[%s5 + $0xc0] sm:$0xff]
        %v4619 = vld [vmem:[%s5 + $0xc8] sm:$0xff]
        %v4620 = vld [vmem:[%s5 + $0xd0] sm:$0xff]
        %v4621 = vld [vmem:[%s5 + $0xd8] sm:$0xff]
        %v4622 = vld [vmem:[%s5 + $0xe0] sm:$0xff]
        %v4623 = vld [vmem:[%s5 + $0xe8] sm:$0xff]
        %v4624 = vld [vmem:[%s5 + $0xf0] sm:$0xff]
        %v4625 = vld [vmem:[%s5 + $0xf8] sm:$0xff]
        %v4626 = vld [vmem:[%s5 + $0x100] sm:$0xff]
        %v4627 = vld [vmem:[%s5 + $0x108] sm:$0xff]
        %v4628 = vld [vmem:[%s5 + $0x110] sm:$0xff]
        %v4629 = vld [vmem:[%s5 + $0x118] sm:$0xff]
        %v4630 = vld [vmem:[%s5 + $0x120] sm:$0xff]
        %v4631 = vld [vmem:[%s5 + $0x128] sm:$0xff]
        %v4632 = vld [vmem:[%s5 + $0x130] sm:$0xff]
        %v4633 = vld [vmem:[%s5 + $0x138] sm:$0xff]
        %v4634 = vld [vmem:[%s5 + $0x140] sm:$0xff]
        %v4635 = vld [vmem:[%s5 + $0x148] sm:$0xff]
        %v4636 = vld [vmem:[%s5 + $0x150] sm:$0xff]
        %v4637 = vld [vmem:[%s5 + $0x158] sm:$0xff]
        %v4638 = vld [vmem:[%s5 + $0x160] sm:$0xff]
        %v4639 = vld [vmem:[%s5 + $0x168] sm:$0xff]
        %v4640 = vld [vmem:[%s5 + $0x170] sm:$0xff]
        %v4641 = vld [vmem:[%s5 + $0x178] sm:$0xff]
        %v4642 = vld [vmem:[%s5 + $0x180] sm:$0xff]
        %v4643 = vld [vmem:[%s5 + $0x188] sm:$0xff]
        %v4644 = vld [vmem:[%s5 + $0x190] sm:$0xff]
        %v4645 = vld [vmem:[%s5 + $0x198] sm:$0xff]
        %v4646 = vld [vmem:[%s5 + $0x1a0] sm:$0xff]
        %v4647 = vld [vmem:[%s5 + $0x1a8] sm:$0xff]
        %v4648 = vld [vmem:[%s5 + $0x1b0] sm:$0xff]
        %v4649 = vld [vmem:[%s5 + $0x1b8] sm:$0xff]
        %v4650 = vld [vmem:[%s5 + $0x1c0] sm:$0xff]
        %v4651 = vld [vmem:[%s5 + $0x1c8] sm:$0xff]
        %v4652 = vld [vmem:[%s5 + $0x1d0] sm:$0xff]
        %v4653 = vld [vmem:[%s5 + $0x1d8] sm:$0xff]
        %v4654 = vld [vmem:[%s5 + $0x1e0] sm:$0xff]
        %v4655 = vld [vmem:[%s5 + $0x1e8] sm:$0xff]
        %v4656 = vld [vmem:[%s5 + $0x1f0] sm:$0xff]
        %v4657 = vld [vmem:[%s5 + $0x1f8] sm:$0xff]
        %v4658 = vld [vmem:[%s5 + $0x200] sm:$0xff]
        %v4659 = vld [vmem:[%s5 + $0x208] sm:$0xff]
        %v4660 = vld [vmem:[%s5 + $0x210] sm:$0xff]
        %v4661 = vld [vmem:[%s5 + $0x218] sm:$0xff]
        %v4662 = vld [vmem:[%s5 + $0x220] sm:$0xff]
        %v4663 = vld [vmem:[%s5 + $0x228] sm:$0xff]
        %v4664 = vld [vmem:[%s5 + $0x230] sm:$0xff]
        %v4665 = vld [vmem:[%s5 + $0x238] sm:$0xff]
        %v4666 = vld [vmem:[%s5 + $0x240] sm:$0xff]
        %v4667 = vld [vmem:[%s5 + $0x248] sm:$0xff]
        %v4668 = vld [vmem:[%s5 + $0x250] sm:$0xff]
        %v4669 = vld [vmem:[%s5 + $0x258] sm:$0xff]
        %v4670 = vld [vmem:[%s5 + $0x260] sm:$0xff]
        %v4671 = vld [vmem:[%s5 + $0x268] sm:$0xff]
        %v4672 = vld [vmem:[%s5 + $0x270] sm:$0xff]
        %v4673 = vld [vmem:[%s5 + $0x278] sm:$0xff]
        %v4674 = vld [vmem:[%s5 + $0x280] sm:$0xff]
        %v4675 = vld [vmem:[%s5 + $0x288] sm:$0xff]
        %v4676 = vld [vmem:[%s5 + $0x290] sm:$0xff]
        %v4677 = vld [vmem:[%s5 + $0x298] sm:$0xff]
        %v4678 = vld [vmem:[%s5 + $0x2a0] sm:$0xff]
        %v4679 = vld [vmem:[%s5 + $0x2a8] sm:$0xff]
        %v4680 = vld [vmem:[%s5 + $0x2b0] sm:$0xff]
        %v4681 = vld [vmem:[%s5 + $0x2b8] sm:$0xff]
        %v4682 = vld [vmem:[%s5 + $0x2c0] sm:$0xff]
        %v4683 = vld [vmem:[%s5 + $0x2c8] sm:$0xff]
        %v4684 = vld [vmem:[%s5 + $0x2d0] sm:$0xff]
        %v4685 = vld [vmem:[%s5 + $0x2d8] sm:$0xff]
        %v4686 = vld [vmem:[%s5 + $0x2e0] sm:$0xff]
        %v4687 = vld [vmem:[%s5 + $0x2e8] sm:$0xff]
        %v4688 = vld [vmem:[%s5 + $0x2f0] sm:$0xff]
        %v4689 = vld [vmem:[%s5 + $0x2f8] sm:$0xff]
        %4691 = vset.pattern.permute.xlu0 0
        %4692 = vperm.xlu0 %4691, %v4594
        %v4693 = vpop.permute.xlu0 %4692
        %4696 = vset.pattern.permute.xlu0 0
        %4697 = vperm.xlu0 %4696, %v4595
        %v4698 = vpop.permute.xlu0 %4697
        %4701 = vset.pattern.permute.xlu0 0
        %4702 = vperm.xlu0 %4701, %v4596
        %v4703 = vpop.permute.xlu0 %4702
        %4706 = vset.pattern.permute.xlu0 0
        %4707 = vperm.xlu0 %4706, %v4597
        %v4708 = vpop.permute.xlu0 %4707
        %4711 = vset.pattern.permute.xlu0 0
        %4712 = vperm.xlu0 %4711, %v4598
        %v4713 = vpop.permute.xlu0 %4712
        %4716 = vset.pattern.permute.xlu0 0
        %4717 = vperm.xlu0 %4716, %v4599
        %v4718 = vpop.permute.xlu0 %4717
        %4721 = vset.pattern.permute.xlu0 0
        %4722 = vperm.xlu0 %4721, %v4600
        %v4723 = vpop.permute.xlu0 %4722
        %4726 = vset.pattern.permute.xlu0 0
        %4727 = vperm.xlu0 %4726, %v4601
        %v4728 = vpop.permute.xlu0 %4727
        %4731 = vset.pattern.permute.xlu0 0
        %4732 = vperm.xlu0 %4731, %v4602
        %v4733 = vpop.permute.xlu0 %4732
        %4736 = vset.pattern.permute.xlu0 0
        %4737 = vperm.xlu0 %4736, %v4603
        %v4738 = vpop.permute.xlu0 %4737
        %4741 = vset.pattern.permute.xlu0 0
        %4742 = vperm.xlu0 %4741, %v4604
        %v4743 = vpop.permute.xlu0 %4742
        %4746 = vset.pattern.permute.xlu0 0
        %4747 = vperm.xlu0 %4746, %v4605
        %v4748 = vpop.permute.xlu0 %4747
        %4751 = vset.pattern.permute.xlu0 0
        %4752 = vperm.xlu0 %4751, %v4606
        %v4753 = vpop.permute.xlu0 %4752
        %4756 = vset.pattern.permute.xlu0 0
        %4757 = vperm.xlu0 %4756, %v4607
        %v4758 = vpop.permute.xlu0 %4757
        %4761 = vset.pattern.permute.xlu0 0
        %4762 = vperm.xlu0 %4761, %v4608
        %v4763 = vpop.permute.xlu0 %4762
        %4766 = vset.pattern.permute.xlu0 0
        %4767 = vperm.xlu0 %4766, %v4609
        %v4768 = vpop.permute.xlu0 %4767
        %4771 = vset.pattern.permute.xlu0 0
        %4772 = vperm.xlu0 %4771, %v4610
        %v4773 = vpop.permute.xlu0 %4772
        %4776 = vset.pattern.permute.xlu0 0
        %4777 = vperm.xlu0 %4776, %v4611
        %v4778 = vpop.permute.xlu0 %4777
        %4781 = vset.pattern.permute.xlu0 0
        %4782 = vperm.xlu0 %4781, %v4612
        %v4783 = vpop.permute.xlu0 %4782
        %4786 = vset.pattern.permute.xlu0 0
        %4787 = vperm.xlu0 %4786, %v4613
        %v4788 = vpop.permute.xlu0 %4787
        %4791 = vset.pattern.permute.xlu0 0
        %4792 = vperm.xlu0 %4791, %v4614
        %v4793 = vpop.permute.xlu0 %4792
        %4796 = vset.pattern.permute.xlu0 0
        %4797 = vperm.xlu0 %4796, %v4615
        %v4798 = vpop.permute.xlu0 %4797
        %4801 = vset.pattern.permute.xlu0 0
        %4802 = vperm.xlu0 %4801, %v4616
        %v4803 = vpop.permute.xlu0 %4802
        %4806 = vset.pattern.permute.xlu0 0
        %4807 = vperm.xlu0 %4806, %v4617
        %v4808 = vpop.permute.xlu0 %4807
        %4811 = vset.pattern.permute.xlu0 0
        %4812 = vperm.xlu0 %4811, %v4618
        %v4813 = vpop.permute.xlu0 %4812
        %4816 = vset.pattern.permute.xlu0 0
        %4817 = vperm.xlu0 %4816, %v4619
        %v4818 = vpop.permute.xlu0 %4817
        %4821 = vset.pattern.permute.xlu0 0
        %4822 = vperm.xlu0 %4821, %v4620
        %v4823 = vpop.permute.xlu0 %4822
        %4826 = vset.pattern.permute.xlu0 0
        %4827 = vperm.xlu0 %4826, %v4621
        %v4828 = vpop.permute.xlu0 %4827
        %4831 = vset.pattern.permute.xlu0 0
        %4832 = vperm.xlu0 %4831, %v4622
        %v4833 = vpop.permute.xlu0 %4832
        %4836 = vset.pattern.permute.xlu0 0
        %4837 = vperm.xlu0 %4836, %v4623
        %v4838 = vpop.permute.xlu0 %4837
        %4841 = vset.pattern.permute.xlu0 0
        %4842 = vperm.xlu0 %4841, %v4624
        %v4843 = vpop.permute.xlu0 %4842
        %4846 = vset.pattern.permute.xlu0 0
        %4847 = vperm.xlu0 %4846, %v4625
        %v4848 = vpop.permute.xlu0 %4847
        %4851 = vset.pattern.permute.xlu0 0
        %4852 = vperm.xlu0 %4851, %v4626
        %v4853 = vpop.permute.xlu0 %4852
        %4856 = vset.pattern.permute.xlu0 0
        %4857 = vperm.xlu0 %4856, %v4627
        %v4858 = vpop.permute.xlu0 %4857
        %4861 = vset.pattern.permute.xlu0 0
        %4862 = vperm.xlu0 %4861, %v4628
        %v4863 = vpop.permute.xlu0 %4862
        %4866 = vset.pattern.permute.xlu0 0
        %4867 = vperm.xlu0 %4866, %v4629
        %v4868 = vpop.permute.xlu0 %4867
        %4871 = vset.pattern.permute.xlu0 0
        %4872 = vperm.xlu0 %4871, %v4630
        %v4873 = vpop.permute.xlu0 %4872
        %4876 = vset.pattern.permute.xlu0 0
        %4877 = vperm.xlu0 %4876, %v4631
        %v4878 = vpop.permute.xlu0 %4877
        %4881 = vset.pattern.permute.xlu0 0
        %4882 = vperm.xlu0 %4881, %v4632
        %v4883 = vpop.permute.xlu0 %4882
        %4886 = vset.pattern.permute.xlu0 0
        %4887 = vperm.xlu0 %4886, %v4633
        %v4888 = vpop.permute.xlu0 %4887
        %4891 = vset.pattern.permute.xlu0 0
        %4892 = vperm.xlu0 %4891, %v4634
        %v4893 = vpop.permute.xlu0 %4892
        %4896 = vset.pattern.permute.xlu0 0
        %4897 = vperm.xlu0 %4896, %v4635
        %v4898 = vpop.permute.xlu0 %4897
        %4901 = vset.pattern.permute.xlu0 0
        %4902 = vperm.xlu0 %4901, %v4636
        %v4903 = vpop.permute.xlu0 %4902
        %4906 = vset.pattern.permute.xlu0 0
        %4907 = vperm.xlu0 %4906, %v4637
        %v4908 = vpop.permute.xlu0 %4907
        %4911 = vset.pattern.permute.xlu0 0
        %4912 = vperm.xlu0 %4911, %v4638
        %v4913 = vpop.permute.xlu0 %4912
        %4916 = vset.pattern.permute.xlu0 0
        %4917 = vperm.xlu0 %4916, %v4639
        %v4918 = vpop.permute.xlu0 %4917
        %4921 = vset.pattern.permute.xlu0 0
        %4922 = vperm.xlu0 %4921, %v4640
        %v4923 = vpop.permute.xlu0 %4922
        %4926 = vset.pattern.permute.xlu0 0
        %4927 = vperm.xlu0 %4926, %v4641
        %v4928 = vpop.permute.xlu0 %4927
        %4931 = vset.pattern.permute.xlu0 0
        %4932 = vperm.xlu0 %4931, %v4642
        %v4933 = vpop.permute.xlu0 %4932
        %4936 = vset.pattern.permute.xlu0 0
        %4937 = vperm.xlu0 %4936, %v4643
        %v4938 = vpop.permute.xlu0 %4937
        %4941 = vset.pattern.permute.xlu0 0
        %4942 = vperm.xlu0 %4941, %v4644
        %v4943 = vpop.permute.xlu0 %4942
        %4946 = vset.pattern.permute.xlu0 0
        %4947 = vperm.xlu0 %4946, %v4645
        %v4948 = vpop.permute.xlu0 %4947
        %4951 = vset.pattern.permute.xlu0 0
        %4952 = vperm.xlu0 %4951, %v4646
        %v4953 = vpop.permute.xlu0 %4952
        %4956 = vset.pattern.permute.xlu0 0
        %4957 = vperm.xlu0 %4956, %v4647
        %v4958 = vpop.permute.xlu0 %4957
        %4961 = vset.pattern.permute.xlu0 0
        %4962 = vperm.xlu0 %4961, %v4648
        %v4963 = vpop.permute.xlu0 %4962
        %4966 = vset.pattern.permute.xlu0 0
        %4967 = vperm.xlu0 %4966, %v4649
        %v4968 = vpop.permute.xlu0 %4967
        %4971 = vset.pattern.permute.xlu0 0
        %4972 = vperm.xlu0 %4971, %v4650
        %v4973 = vpop.permute.xlu0 %4972
        %4976 = vset.pattern.permute.xlu0 0
        %4977 = vperm.xlu0 %4976, %v4651
        %v4978 = vpop.permute.xlu0 %4977
        %4981 = vset.pattern.permute.xlu0 0
        %4982 = vperm.xlu0 %4981, %v4652
        %v4983 = vpop.permute.xlu0 %4982
        %4986 = vset.pattern.permute.xlu0 0
        %4987 = vperm.xlu0 %4986, %v4653
        %v4988 = vpop.permute.xlu0 %4987
        %4991 = vset.pattern.permute.xlu0 0
        %4992 = vperm.xlu0 %4991, %v4654
        %v4993 = vpop.permute.xlu0 %4992
        %4996 = vset.pattern.permute.xlu0 0
        %4997 = vperm.xlu0 %4996, %v4655
        %v4998 = vpop.permute.xlu0 %4997
        %5001 = vset.pattern.permute.xlu0 0
        %5002 = vperm.xlu0 %5001, %v4656
        %v5003 = vpop.permute.xlu0 %5002
        %5006 = vset.pattern.permute.xlu0 0
        %5007 = vperm.xlu0 %5006, %v4657
        %v5008 = vpop.permute.xlu0 %5007
        %5011 = vset.pattern.permute.xlu0 0
        %5012 = vperm.xlu0 %5011, %v4658
        %v5013 = vpop.permute.xlu0 %5012
        %5016 = vset.pattern.permute.xlu0 0
        %5017 = vperm.xlu0 %5016, %v4659
        %v5018 = vpop.permute.xlu0 %5017
        %5021 = vset.pattern.permute.xlu0 0
        %5022 = vperm.xlu0 %5021, %v4660
        %v5023 = vpop.permute.xlu0 %5022
        %5026 = vset.pattern.permute.xlu0 0
        %5027 = vperm.xlu0 %5026, %v4661
        %v5028 = vpop.permute.xlu0 %5027
        %5031 = vset.pattern.permute.xlu0 0
        %5032 = vperm.xlu0 %5031, %v4662
        %v5033 = vpop.permute.xlu0 %5032
        %5036 = vset.pattern.permute.xlu0 0
        %5037 = vperm.xlu0 %5036, %v4663
        %v5038 = vpop.permute.xlu0 %5037
        %5041 = vset.pattern.permute.xlu0 0
        %5042 = vperm.xlu0 %5041, %v4664
        %v5043 = vpop.permute.xlu0 %5042
        %5046 = vset.pattern.permute.xlu0 0
        %5047 = vperm.xlu0 %5046, %v4665
        %v5048 = vpop.permute.xlu0 %5047
        %5051 = vset.pattern.permute.xlu0 0
        %5052 = vperm.xlu0 %5051, %v4666
        %v5053 = vpop.permute.xlu0 %5052
        %5056 = vset.pattern.permute.xlu0 0
        %5057 = vperm.xlu0 %5056, %v4667
        %v5058 = vpop.permute.xlu0 %5057
        %5061 = vset.pattern.permute.xlu0 0
        %5062 = vperm.xlu0 %5061, %v4668
        %v5063 = vpop.permute.xlu0 %5062
        %5066 = vset.pattern.permute.xlu0 0
        %5067 = vperm.xlu0 %5066, %v4669
        %v5068 = vpop.permute.xlu0 %5067
        %5071 = vset.pattern.permute.xlu0 0
        %5072 = vperm.xlu0 %5071, %v4670
        %v5073 = vpop.permute.xlu0 %5072
        %5076 = vset.pattern.permute.xlu0 0
        %5077 = vperm.xlu0 %5076, %v4671
        %v5078 = vpop.permute.xlu0 %5077
        %5081 = vset.pattern.permute.xlu0 0
        %5082 = vperm.xlu0 %5081, %v4672
        %v5083 = vpop.permute.xlu0 %5082
        %5086 = vset.pattern.permute.xlu0 0
        %5087 = vperm.xlu0 %5086, %v4673
        %v5088 = vpop.permute.xlu0 %5087
        %5091 = vset.pattern.permute.xlu0 0
        %5092 = vperm.xlu0 %5091, %v4674
        %v5093 = vpop.permute.xlu0 %5092
        %5096 = vset.pattern.permute.xlu0 0
        %5097 = vperm.xlu0 %5096, %v4675
        %v5098 = vpop.permute.xlu0 %5097
        %5101 = vset.pattern.permute.xlu0 0
        %5102 = vperm.xlu0 %5101, %v4676
        %v5103 = vpop.permute.xlu0 %5102
        %5106 = vset.pattern.permute.xlu0 0
        %5107 = vperm.xlu0 %5106, %v4677
        %v5108 = vpop.permute.xlu0 %5107
        %5111 = vset.pattern.permute.xlu0 0
        %5112 = vperm.xlu0 %5111, %v4678
        %v5113 = vpop.permute.xlu0 %5112
        %5116 = vset.pattern.permute.xlu0 0
        %5117 = vperm.xlu0 %5116, %v4679
        %v5118 = vpop.permute.xlu0 %5117
        %5121 = vset.pattern.permute.xlu0 0
        %5122 = vperm.xlu0 %5121, %v4680
        %v5123 = vpop.permute.xlu0 %5122
        %5126 = vset.pattern.permute.xlu0 0
        %5127 = vperm.xlu0 %5126, %v4681
        %v5128 = vpop.permute.xlu0 %5127
        %5131 = vset.pattern.permute.xlu0 0
        %5132 = vperm.xlu0 %5131, %v4682
        %v5133 = vpop.permute.xlu0 %5132
        %5136 = vset.pattern.permute.xlu0 0
        %5137 = vperm.xlu0 %5136, %v4683
        %v5138 = vpop.permute.xlu0 %5137
        %5141 = vset.pattern.permute.xlu0 0
        %5142 = vperm.xlu0 %5141, %v4684
        %v5143 = vpop.permute.xlu0 %5142
        %5146 = vset.pattern.permute.xlu0 0
        %5147 = vperm.xlu0 %5146, %v4685
        %v5148 = vpop.permute.xlu0 %5147
        %5151 = vset.pattern.permute.xlu0 0
        %5152 = vperm.xlu0 %5151, %v4686
        %v5153 = vpop.permute.xlu0 %5152
        %5156 = vset.pattern.permute.xlu0 0
        %5157 = vperm.xlu0 %5156, %v4687
        %v5158 = vpop.permute.xlu0 %5157
        %5161 = vset.pattern.permute.xlu0 0
        %5162 = vperm.xlu0 %5161, %v4688
        %v5163 = vpop.permute.xlu0 %5162
        %5166 = vset.pattern.permute.xlu0 0
        %5167 = vperm.xlu0 %5166, %v4689
        %v5168 = vpop.permute.xlu0 %5167
        %v5170 = vadd.f32 %v4116, %v4693
        %v5171 = vadd.f32 %v4118, %v4693
        %v5172 = vadd.f32 %v4120, %v4698
        %v5173 = vadd.f32 %v4122, %v4698
        %v5174 = vadd.f32 %v4126, %v4703
        %v5175 = vadd.f32 %v4128, %v4703
        %v5176 = vadd.f32 %v4130, %v4708
        %v5177 = vadd.f32 %v4132, %v4708
        %v5178 = vadd.f32 %v4136, %v4713
        %v5179 = vadd.f32 %v4138, %v4713
        %v5180 = vadd.f32 %v4140, %v4718
        %v5181 = vadd.f32 %v4142, %v4718
        %v5182 = vadd.f32 %v4146, %v4723
        %v5183 = vadd.f32 %v4148, %v4723
        %v5184 = vadd.f32 %v4150, %v4728
        %v5185 = vadd.f32 %v4152, %v4728
        %v5186 = vadd.f32 %v4156, %v4733
        %v5187 = vadd.f32 %v4158, %v4733
        %v5188 = vadd.f32 %v4160, %v4738
        %v5189 = vadd.f32 %v4162, %v4738
        %v5190 = vadd.f32 %v4166, %v4743
        %v5191 = vadd.f32 %v4168, %v4743
        %v5192 = vadd.f32 %v4170, %v4748
        %v5193 = vadd.f32 %v4172, %v4748
        %v5194 = vadd.f32 %v4176, %v4753
        %v5195 = vadd.f32 %v4178, %v4753
        %v5196 = vadd.f32 %v4180, %v4758
        %v5197 = vadd.f32 %v4182, %v4758
        %v5198 = vadd.f32 %v4186, %v4763
        %v5199 = vadd.f32 %v4188, %v4763
        %v5200 = vadd.f32 %v4190, %v4768
        %v5201 = vadd.f32 %v4192, %v4768
        %v5202 = vadd.f32 %v4196, %v4773
        %v5203 = vadd.f32 %v4198, %v4773
        %v5204 = vadd.f32 %v4200, %v4778
        %v5205 = vadd.f32 %v4202, %v4778
        %v5206 = vadd.f32 %v4206, %v4783
        %v5207 = vadd.f32 %v4208, %v4783
        %v5208 = vadd.f32 %v4210, %v4788
        %v5209 = vadd.f32 %v4212, %v4788
        %v5210 = vadd.f32 %v4216, %v4793
        %v5211 = vadd.f32 %v4218, %v4793
        %v5212 = vadd.f32 %v4220, %v4798
        %v5213 = vadd.f32 %v4222, %v4798
        %v5214 = vadd.f32 %v4226, %v4803
        %v5215 = vadd.f32 %v4228, %v4803
        %v5216 = vadd.f32 %v4230, %v4808
        %v5217 = vadd.f32 %v4232, %v4808
        %v5218 = vadd.f32 %v4236, %v4813
        %v5219 = vadd.f32 %v4238, %v4813
        %v5220 = vadd.f32 %v4240, %v4818
        %v5221 = vadd.f32 %v4242, %v4818
        %v5222 = vadd.f32 %v4246, %v4823
        %v5223 = vadd.f32 %v4248, %v4823
        %v5224 = vadd.f32 %v4250, %v4828
        %v5225 = vadd.f32 %v4252, %v4828
        %v5226 = vadd.f32 %v4256, %v4833
        %v5227 = vadd.f32 %v4258, %v4833
        %v5228 = vadd.f32 %v4260, %v4838
        %v5229 = vadd.f32 %v4262, %v4838
        %v5230 = vadd.f32 %v4266, %v4843
        %v5231 = vadd.f32 %v4268, %v4843
        %v5232 = vadd.f32 %v4270, %v4848
        %v5233 = vadd.f32 %v4272, %v4848
        %v5234 = vadd.f32 %v4276, %v4853
        %v5235 = vadd.f32 %v4278, %v4853
        %v5236 = vadd.f32 %v4280, %v4858
        %v5237 = vadd.f32 %v4282, %v4858
        %v5238 = vadd.f32 %v4286, %v4863
        %v5239 = vadd.f32 %v4288, %v4863
        %v5240 = vadd.f32 %v4290, %v4868
        %v5241 = vadd.f32 %v4292, %v4868
        %v5242 = vadd.f32 %v4296, %v4873
        %v5243 = vadd.f32 %v4298, %v4873
        %v5244 = vadd.f32 %v4300, %v4878
        %v5245 = vadd.f32 %v4302, %v4878
        %v5246 = vadd.f32 %v4306, %v4883
        %v5247 = vadd.f32 %v4308, %v4883
        %v5248 = vadd.f32 %v4310, %v4888
        %v5249 = vadd.f32 %v4312, %v4888
        %v5250 = vadd.f32 %v4316, %v4893
        %v5251 = vadd.f32 %v4318, %v4893
        %v5252 = vadd.f32 %v4320, %v4898
        %v5253 = vadd.f32 %v4322, %v4898
        %v5254 = vadd.f32 %v4326, %v4903
        %v5255 = vadd.f32 %v4328, %v4903
        %v5256 = vadd.f32 %v4330, %v4908
        %v5257 = vadd.f32 %v4332, %v4908
        %v5258 = vadd.f32 %v4336, %v4913
        %v5259 = vadd.f32 %v4338, %v4913
        %v5260 = vadd.f32 %v4340, %v4918
        %v5261 = vadd.f32 %v4342, %v4918
        %v5262 = vadd.f32 %v4346, %v4923
        %v5263 = vadd.f32 %v4348, %v4923
        %v5264 = vadd.f32 %v4350, %v4928
        %v5265 = vadd.f32 %v4352, %v4928
        %v5266 = vadd.f32 %v4356, %v4933
        %v5267 = vadd.f32 %v4358, %v4933
        %v5268 = vadd.f32 %v4360, %v4938
        %v5269 = vadd.f32 %v4362, %v4938
        %v5270 = vadd.f32 %v4366, %v4943
        %v5271 = vadd.f32 %v4368, %v4943
        %v5272 = vadd.f32 %v4370, %v4948
        %v5273 = vadd.f32 %v4372, %v4948
        %v5274 = vadd.f32 %v4376, %v4953
        %v5275 = vadd.f32 %v4378, %v4953
        %v5276 = vadd.f32 %v4380, %v4958
        %v5277 = vadd.f32 %v4382, %v4958
        %v5278 = vadd.f32 %v4386, %v4963
        %v5279 = vadd.f32 %v4388, %v4963
        %v5280 = vadd.f32 %v4390, %v4968
        %v5281 = vadd.f32 %v4392, %v4968
        %v5282 = vadd.f32 %v4396, %v4973
        %v5283 = vadd.f32 %v4398, %v4973
        %v5284 = vadd.f32 %v4400, %v4978
        %v5285 = vadd.f32 %v4402, %v4978
        %v5286 = vadd.f32 %v4406, %v4983
        %v5287 = vadd.f32 %v4408, %v4983
        %v5288 = vadd.f32 %v4410, %v4988
        %v5289 = vadd.f32 %v4412, %v4988
        %v5290 = vadd.f32 %v4416, %v4993
        %v5291 = vadd.f32 %v4418, %v4993
        %v5292 = vadd.f32 %v4420, %v4998
        %v5293 = vadd.f32 %v4422, %v4998
        %v5294 = vadd.f32 %v4426, %v5003
        %v5295 = vadd.f32 %v4428, %v5003
        %v5296 = vadd.f32 %v4430, %v5008
        %v5297 = vadd.f32 %v4432, %v5008
        %v5298 = vadd.f32 %v4436, %v5013
        %v5299 = vadd.f32 %v4438, %v5013
        %v5300 = vadd.f32 %v4440, %v5018
        %v5301 = vadd.f32 %v4442, %v5018
        %v5302 = vadd.f32 %v4446, %v5023
        %v5303 = vadd.f32 %v4448, %v5023
        %v5304 = vadd.f32 %v4450, %v5028
        %v5305 = vadd.f32 %v4452, %v5028
        %v5306 = vadd.f32 %v4456, %v5033
        %v5307 = vadd.f32 %v4458, %v5033
        %v5308 = vadd.f32 %v4460, %v5038
        %v5309 = vadd.f32 %v4462, %v5038
        %v5310 = vadd.f32 %v4466, %v5043
        %v5311 = vadd.f32 %v4468, %v5043
        %v5312 = vadd.f32 %v4470, %v5048
        %v5313 = vadd.f32 %v4472, %v5048
        %v5314 = vadd.f32 %v4476, %v5053
        %v5315 = vadd.f32 %v4478, %v5053
        %v5316 = vadd.f32 %v4480, %v5058
        %v5317 = vadd.f32 %v4482, %v5058
        %v5318 = vadd.f32 %v4486, %v5063
        %v5319 = vadd.f32 %v4488, %v5063
        %v5320 = vadd.f32 %v4490, %v5068
        %v5321 = vadd.f32 %v4492, %v5068
        %v5322 = vadd.f32 %v4496, %v5073
        %v5323 = vadd.f32 %v4498, %v5073
        %v5324 = vadd.f32 %v4500, %v5078
        %v5325 = vadd.f32 %v4502, %v5078
        %v5326 = vadd.f32 %v4506, %v5083
        %v5327 = vadd.f32 %v4508, %v5083
        %v5328 = vadd.f32 %v4510, %v5088
        %v5329 = vadd.f32 %v4512, %v5088
        %v5330 = vadd.f32 %v4516, %v5093
        %v5331 = vadd.f32 %v4518, %v5093
        %v5332 = vadd.f32 %v4520, %v5098
        %v5333 = vadd.f32 %v4522, %v5098
        %v5334 = vadd.f32 %v4526, %v5103
        %v5335 = vadd.f32 %v4528, %v5103
        %v5336 = vadd.f32 %v4530, %v5108
        %v5337 = vadd.f32 %v4532, %v5108
        %v5338 = vadd.f32 %v4536, %v5113
        %v5339 = vadd.f32 %v4538, %v5113
        %v5340 = vadd.f32 %v4540, %v5118
        %v5341 = vadd.f32 %v4542, %v5118
        %v5342 = vadd.f32 %v4546, %v5123
        %v5343 = vadd.f32 %v4548, %v5123
        %v5344 = vadd.f32 %v4550, %v5128
        %v5345 = vadd.f32 %v4552, %v5128
        %v5346 = vadd.f32 %v4556, %v5133
        %v5347 = vadd.f32 %v4558, %v5133
        %v5348 = vadd.f32 %v4560, %v5138
        %v5349 = vadd.f32 %v4562, %v5138
        %v5350 = vadd.f32 %v4566, %v5143
        %v5351 = vadd.f32 %v4568, %v5143
        %v5352 = vadd.f32 %v4570, %v5148
        %v5353 = vadd.f32 %v4572, %v5148
        %v5354 = vadd.f32 %v4576, %v5153
        %v5355 = vadd.f32 %v4578, %v5153
        %v5356 = vadd.f32 %v4580, %v5158
        %v5357 = vadd.f32 %v4582, %v5158
        %v5358 = vadd.f32 %v4586, %v5163
        %v5359 = vadd.f32 %v4588, %v5163
        %v5360 = vadd.f32 %v4590, %v5168
        %v5361 = vadd.f32 %v4592, %v5168
        %v5362 = vmul.f32 %v5170, 0.5
        %v5363 = vmul.f32 %v5171, 0.5
        %v5364 = vmul.f32 %v5172, 0.5
        %v5365 = vmul.f32 %v5173, 0.5
        %v5366 = vmul.f32 %v5174, 0.5
        %v5367 = vmul.f32 %v5175, 0.5
        %v5368 = vmul.f32 %v5176, 0.5
        %v5369 = vmul.f32 %v5177, 0.5
        %v5370 = vmul.f32 %v5178, 0.5
        %v5371 = vmul.f32 %v5179, 0.5
        %v5372 = vmul.f32 %v5180, 0.5
        %v5373 = vmul.f32 %v5181, 0.5
        %v5374 = vmul.f32 %v5182, 0.5
        %v5375 = vmul.f32 %v5183, 0.5
        %v5376 = vmul.f32 %v5184, 0.5
        %v5377 = vmul.f32 %v5185, 0.5
        %v5378 = vmul.f32 %v5186, 0.5
        %v5379 = vmul.f32 %v5187, 0.5
        %v5380 = vmul.f32 %v5188, 0.5
        %v5381 = vmul.f32 %v5189, 0.5
        %v5382 = vmul.f32 %v5190, 0.5
        %v5383 = vmul.f32 %v5191, 0.5
        %v5384 = vmul.f32 %v5192, 0.5
        %v5385 = vmul.f32 %v5193, 0.5
        %v5386 = vmul.f32 %v5194, 0.5
        %v5387 = vmul.f32 %v5195, 0.5
        %v5388 = vmul.f32 %v5196, 0.5
        %v5389 = vmul.f32 %v5197, 0.5
        %v5390 = vmul.f32 %v5198, 0.5
        %v5391 = vmul.f32 %v5199, 0.5
        %v5392 = vmul.f32 %v5200, 0.5
        %v5393 = vmul.f32 %v5201, 0.5
        %v5394 = vtanh.pop %v5362
        %v5395 = vtanh.pop %v5363
        %v5396 = vtanh.pop %v5364
        %v5397 = vtanh.pop %v5365
        %v5398 = vtanh.pop %v5366
        %v5399 = vtanh.pop %v5367
        %v5400 = vtanh.pop %v5368
        %v5401 = vtanh.pop %v5369
        %v5402 = vtanh.pop %v5370
        %v5403 = vtanh.pop %v5371
        %v5404 = vtanh.pop %v5372
        %v5405 = vtanh.pop %v5373
        %v5406 = vtanh.pop %v5374
        %v5407 = vtanh.pop %v5375
        %v5408 = vtanh.pop %v5376
        %v5409 = vtanh.pop %v5377
        %v5410 = vtanh.pop %v5378
        %v5411 = vtanh.pop %v5379
        %v5412 = vtanh.pop %v5380
        %v5413 = vtanh.pop %v5381
        %v5414 = vtanh.pop %v5382
        %v5415 = vtanh.pop %v5383
        %v5416 = vtanh.pop %v5384
        %v5417 = vtanh.pop %v5385
        %v5418 = vtanh.pop %v5386
        %v5419 = vtanh.pop %v5387
        %v5420 = vtanh.pop %v5388
        %v5421 = vtanh.pop %v5389
        %v5422 = vtanh.pop %v5390
        %v5423 = vtanh.pop %v5391
        %v5424 = vtanh.pop %v5392
        %v5425 = vtanh.pop %v5393
        %v5426 = vmul.f32 %v5394, 0.5
        %v5427 = vmul.f32 %v5395, 0.5
        %v5428 = vmul.f32 %v5396, 0.5
        %v5429 = vmul.f32 %v5397, 0.5
        %v5430 = vmul.f32 %v5398, 0.5
        %v5431 = vmul.f32 %v5399, 0.5
        %v5432 = vmul.f32 %v5400, 0.5
        %v5433 = vmul.f32 %v5401, 0.5
        %v5434 = vmul.f32 %v5402, 0.5
        %v5435 = vmul.f32 %v5403, 0.5
        %v5436 = vmul.f32 %v5404, 0.5
        %v5437 = vmul.f32 %v5405, 0.5
        %v5438 = vmul.f32 %v5406, 0.5
        %v5439 = vmul.f32 %v5407, 0.5
        %v5440 = vmul.f32 %v5408, 0.5
        %v5441 = vmul.f32 %v5409, 0.5
        %v5442 = vmul.f32 %v5410, 0.5
        %v5443 = vmul.f32 %v5411, 0.5
        %v5444 = vmul.f32 %v5412, 0.5
        %v5445 = vmul.f32 %v5413, 0.5
        %v5446 = vmul.f32 %v5414, 0.5
        %v5447 = vmul.f32 %v5415, 0.5
        %v5448 = vmul.f32 %v5416, 0.5
        %v5449 = vmul.f32 %v5417, 0.5
        %v5450 = vmul.f32 %v5418, 0.5
        %v5451 = vmul.f32 %v5419, 0.5
        %v5452 = vmul.f32 %v5420, 0.5
        %v5453 = vmul.f32 %v5421, 0.5
        %v5454 = vmul.f32 %v5422, 0.5
        %v5455 = vmul.f32 %v5423, 0.5
        %v5456 = vmul.f32 %v5424, 0.5
        %v5457 = vmul.f32 %v5425, 0.5
        %v5458 = vadd.f32 %v5426, 0.5
        %v5459 = vadd.f32 %v5427, 0.5
        %v5460 = vadd.f32 %v5428, 0.5
        %v5461 = vadd.f32 %v5429, 0.5
        %v5462 = vadd.f32 %v5430, 0.5
        %v5463 = vadd.f32 %v5431, 0.5
        %v5464 = vadd.f32 %v5432, 0.5
        %v5465 = vadd.f32 %v5433, 0.5
        %v5466 = vadd.f32 %v5434, 0.5
        %v5467 = vadd.f32 %v5435, 0.5
        %v5468 = vadd.f32 %v5436, 0.5
        %v5469 = vadd.f32 %v5437, 0.5
        %v5470 = vadd.f32 %v5438, 0.5
        %v5471 = vadd.f32 %v5439, 0.5
        %v5472 = vadd.f32 %v5440, 0.5
        %v5473 = vadd.f32 %v5441, 0.5
        %v5474 = vadd.f32 %v5442, 0.5
        %v5475 = vadd.f32 %v5443, 0.5
        %v5476 = vadd.f32 %v5444, 0.5
        %v5477 = vadd.f32 %v5445, 0.5
        %v5478 = vadd.f32 %v5446, 0.5
        %v5479 = vadd.f32 %v5447, 0.5
        %v5480 = vadd.f32 %v5448, 0.5
        %v5481 = vadd.f32 %v5449, 0.5
        %v5482 = vadd.f32 %v5450, 0.5
        %v5483 = vadd.f32 %v5451, 0.5
        %v5484 = vadd.f32 %v5452, 0.5
        %v5485 = vadd.f32 %v5453, 0.5
        %v5486 = vadd.f32 %v5454, 0.5
        %v5487 = vadd.f32 %v5455, 0.5
        %v5488 = vadd.f32 %v5456, 0.5
        %v5489 = vadd.f32 %v5457, 0.5
        %v5490 = vtanh.pop %v5202
        %v5491 = vtanh.pop %v5203
        %v5492 = vtanh.pop %v5204
        %v5493 = vtanh.pop %v5205
        %v5494 = vtanh.pop %v5206
        %v5495 = vtanh.pop %v5207
        %v5496 = vtanh.pop %v5208
        %v5497 = vtanh.pop %v5209
        %v5498 = vtanh.pop %v5210
        %v5499 = vtanh.pop %v5211
        %v5500 = vtanh.pop %v5212
        %v5501 = vtanh.pop %v5213
        %v5502 = vtanh.pop %v5214
        %v5503 = vtanh.pop %v5215
        %v5504 = vtanh.pop %v5216
        %v5505 = vtanh.pop %v5217
        %v5506 = vtanh.pop %v5218
        %v5507 = vtanh.pop %v5219
        %v5508 = vtanh.pop %v5220
        %v5509 = vtanh.pop %v5221
        %v5510 = vtanh.pop %v5222
        %v5511 = vtanh.pop %v5223
        %v5512 = vtanh.pop %v5224
        %v5513 = vtanh.pop %v5225
        %v5514 = vtanh.pop %v5226
        %v5515 = vtanh.pop %v5227
        %v5516 = vtanh.pop %v5228
        %v5517 = vtanh.pop %v5229
        %v5518 = vtanh.pop %v5230
        %v5519 = vtanh.pop %v5231
        %v5520 = vtanh.pop %v5232
        %v5521 = vtanh.pop %v5233
        %v5522 = vmul.f32 %v5234, 0.5
        %v5523 = vmul.f32 %v5235, 0.5
        %v5524 = vmul.f32 %v5236, 0.5
        %v5525 = vmul.f32 %v5237, 0.5
        %v5526 = vmul.f32 %v5238, 0.5
        %v5527 = vmul.f32 %v5239, 0.5
        %v5528 = vmul.f32 %v5240, 0.5
        %v5529 = vmul.f32 %v5241, 0.5
        %v5530 = vmul.f32 %v5242, 0.5
        %v5531 = vmul.f32 %v5243, 0.5
        %v5532 = vmul.f32 %v5244, 0.5
        %v5533 = vmul.f32 %v5245, 0.5
        %v5534 = vmul.f32 %v5246, 0.5
        %v5535 = vmul.f32 %v5247, 0.5
        %v5536 = vmul.f32 %v5248, 0.5
        %v5537 = vmul.f32 %v5249, 0.5
        %v5538 = vmul.f32 %v5250, 0.5
        %v5539 = vmul.f32 %v5251, 0.5
        %v5540 = vmul.f32 %v5252, 0.5
        %v5541 = vmul.f32 %v5253, 0.5
        %v5542 = vmul.f32 %v5254, 0.5
        %v5543 = vmul.f32 %v5255, 0.5
        %v5544 = vmul.f32 %v5256, 0.5
        %v5545 = vmul.f32 %v5257, 0.5
        %v5546 = vmul.f32 %v5258, 0.5
        %v5547 = vmul.f32 %v5259, 0.5
        %v5548 = vmul.f32 %v5260, 0.5
        %v5549 = vmul.f32 %v5261, 0.5
        %v5550 = vmul.f32 %v5262, 0.5
        %v5551 = vmul.f32 %v5263, 0.5
        %v5552 = vmul.f32 %v5264, 0.5
        %v5553 = vmul.f32 %v5265, 0.5
        %v5554 = vtanh.pop %v5522
        %v5555 = vtanh.pop %v5523
        %v5556 = vtanh.pop %v5524
        %v5557 = vtanh.pop %v5525
        %v5558 = vtanh.pop %v5526
        %v5559 = vtanh.pop %v5527
        %v5560 = vtanh.pop %v5528
        %v5561 = vtanh.pop %v5529
        %v5562 = vtanh.pop %v5530
        %v5563 = vtanh.pop %v5531
        %v5564 = vtanh.pop %v5532
        %v5565 = vtanh.pop %v5533
        %v5566 = vtanh.pop %v5534
        %v5567 = vtanh.pop %v5535
        %v5568 = vtanh.pop %v5536
        %v5569 = vtanh.pop %v5537
        %v5570 = vtanh.pop %v5538
        %v5571 = vtanh.pop %v5539
        %v5572 = vtanh.pop %v5540
        %v5573 = vtanh.pop %v5541
        %v5574 = vtanh.pop %v5542
        %v5575 = vtanh.pop %v5543
        %v5576 = vtanh.pop %v5544
        %v5577 = vtanh.pop %v5545
        %v5578 = vtanh.pop %v5546
        %v5579 = vtanh.pop %v5547
        %v5580 = vtanh.pop %v5548
        %v5581 = vtanh.pop %v5549
        %v5582 = vtanh.pop %v5550
        %v5583 = vtanh.pop %v5551
        %v5584 = vtanh.pop %v5552
        %v5585 = vtanh.pop %v5553
        %v5586 = vmul.f32 %v5554, 0.5
        %v5587 = vmul.f32 %v5555, 0.5
        %v5588 = vmul.f32 %v5556, 0.5
        %v5589 = vmul.f32 %v5557, 0.5
        %v5590 = vmul.f32 %v5558, 0.5
        %v5591 = vmul.f32 %v5559, 0.5
        %v5592 = vmul.f32 %v5560, 0.5
        %v5593 = vmul.f32 %v5561, 0.5
        %v5594 = vmul.f32 %v5562, 0.5
        %v5595 = vmul.f32 %v5563, 0.5
        %v5596 = vmul.f32 %v5564, 0.5
        %v5597 = vmul.f32 %v5565, 0.5
        %v5598 = vmul.f32 %v5566, 0.5
        %v5599 = vmul.f32 %v5567, 0.5
        %v5600 = vmul.f32 %v5568, 0.5
        %v5601 = vmul.f32 %v5569, 0.5
        %v5602 = vmul.f32 %v5570, 0.5
        %v5603 = vmul.f32 %v5571, 0.5
        %v5604 = vmul.f32 %v5572, 0.5
        %v5605 = vmul.f32 %v5573, 0.5
        %v5606 = vmul.f32 %v5574, 0.5
        %v5607 = vmul.f32 %v5575, 0.5
        %v5608 = vmul.f32 %v5576, 0.5
        %v5609 = vmul.f32 %v5577, 0.5
        %v5610 = vmul.f32 %v5578, 0.5
        %v5611 = vmul.f32 %v5579, 0.5
        %v5612 = vmul.f32 %v5580, 0.5
        %v5613 = vmul.f32 %v5581, 0.5
        %v5614 = vmul.f32 %v5582, 0.5
        %v5615 = vmul.f32 %v5583, 0.5
        %v5616 = vmul.f32 %v5584, 0.5
        %v5617 = vmul.f32 %v5585, 0.5
        %v5618 = vadd.f32 %v5586, 0.5
        %v5619 = vadd.f32 %v5587, 0.5
        %v5620 = vadd.f32 %v5588, 0.5
        %v5621 = vadd.f32 %v5589, 0.5
        %v5622 = vadd.f32 %v5590, 0.5
        %v5623 = vadd.f32 %v5591, 0.5
        %v5624 = vadd.f32 %v5592, 0.5
        %v5625 = vadd.f32 %v5593, 0.5
        %v5626 = vadd.f32 %v5594, 0.5
        %v5627 = vadd.f32 %v5595, 0.5
        %v5628 = vadd.f32 %v5596, 0.5
        %v5629 = vadd.f32 %v5597, 0.5
        %v5630 = vadd.f32 %v5598, 0.5
        %v5631 = vadd.f32 %v5599, 0.5
        %v5632 = vadd.f32 %v5600, 0.5
        %v5633 = vadd.f32 %v5601, 0.5
        %v5634 = vadd.f32 %v5602, 0.5
        %v5635 = vadd.f32 %v5603, 0.5
        %v5636 = vadd.f32 %v5604, 0.5
        %v5637 = vadd.f32 %v5605, 0.5
        %v5638 = vadd.f32 %v5606, 0.5
        %v5639 = vadd.f32 %v5607, 0.5
        %v5640 = vadd.f32 %v5608, 0.5
        %v5641 = vadd.f32 %v5609, 0.5
        %v5642 = vadd.f32 %v5610, 0.5
        %v5643 = vadd.f32 %v5611, 0.5
        %v5644 = vadd.f32 %v5612, 0.5
        %v5645 = vadd.f32 %v5613, 0.5
        %v5646 = vadd.f32 %v5614, 0.5
        %v5647 = vadd.f32 %v5615, 0.5
        %v5648 = vadd.f32 %v5616, 0.5
        %v5649 = vadd.f32 %v5617, 0.5
        %v5650 = vmul.f32 %v5458, %v5490
        %v5651 = vmul.f32 %v5459, %v5491
        %v5652 = vmul.f32 %v5460, %v5492
        %v5653 = vmul.f32 %v5461, %v5493
        %v5654 = vmul.f32 %v5462, %v5494
        %v5655 = vmul.f32 %v5463, %v5495
        %v5656 = vmul.f32 %v5464, %v5496
        %v5657 = vmul.f32 %v5465, %v5497
        %v5658 = vmul.f32 %v5466, %v5498
        %v5659 = vmul.f32 %v5467, %v5499
        %v5660 = vmul.f32 %v5468, %v5500
        %v5661 = vmul.f32 %v5469, %v5501
        %v5662 = vmul.f32 %v5470, %v5502
        %v5663 = vmul.f32 %v5471, %v5503
        %v5664 = vmul.f32 %v5472, %v5504
        %v5665 = vmul.f32 %v5473, %v5505
        %v5666 = vmul.f32 %v5474, %v5506
        %v5667 = vmul.f32 %v5475, %v5507
        %v5668 = vmul.f32 %v5476, %v5508
        %v5669 = vmul.f32 %v5477, %v5509
        %v5670 = vmul.f32 %v5478, %v5510
        %v5671 = vmul.f32 %v5479, %v5511
        %v5672 = vmul.f32 %v5480, %v5512
        %v5673 = vmul.f32 %v5481, %v5513
        %v5674 = vmul.f32 %v5482, %v5514
        %v5675 = vmul.f32 %v5483, %v5515
        %v5676 = vmul.f32 %v5484, %v5516
        %v5677 = vmul.f32 %v5485, %v5517
        %v5678 = vmul.f32 %v5486, %v5518
        %v5679 = vmul.f32 %v5487, %v5519
        %v5680 = vmul.f32 %v5488, %v5520
        %v5681 = vmul.f32 %v5489, %v5521
        %v5682 = vtanh.pop %v5650
        %v5683 = vtanh.pop %v5651
        %v5684 = vtanh.pop %v5652
        %v5685 = vtanh.pop %v5653
        %v5686 = vtanh.pop %v5654
        %v5687 = vtanh.pop %v5655
        %v5688 = vtanh.pop %v5656
        %v5689 = vtanh.pop %v5657
        %v5690 = vtanh.pop %v5658
        %v5691 = vtanh.pop %v5659
        %v5692 = vtanh.pop %v5660
        %v5693 = vtanh.pop %v5661
        %v5694 = vtanh.pop %v5662
        %v5695 = vtanh.pop %v5663
        %v5696 = vtanh.pop %v5664
        %v5697 = vtanh.pop %v5665
        %v5698 = vtanh.pop %v5666
        %v5699 = vtanh.pop %v5667
        %v5700 = vtanh.pop %v5668
        %v5701 = vtanh.pop %v5669
        %v5702 = vtanh.pop %v5670
        %v5703 = vtanh.pop %v5671
        %v5704 = vtanh.pop %v5672
        %v5705 = vtanh.pop %v5673
        %v5706 = vtanh.pop %v5674
        %v5707 = vtanh.pop %v5675
        %v5708 = vtanh.pop %v5676
        %v5709 = vtanh.pop %v5677
        %v5710 = vtanh.pop %v5678
        %v5711 = vtanh.pop %v5679
        %v5712 = vtanh.pop %v5680
        %v5713 = vtanh.pop %v5681
        %v5714 = vmul.f32 %v5618, %v5682
        %v5715 = vmul.f32 %v5619, %v5683
        %v5716 = vmul.f32 %v5620, %v5684
        %v5717 = vmul.f32 %v5621, %v5685
        %v5718 = vmul.f32 %v5622, %v5686
        %v5719 = vmul.f32 %v5623, %v5687
        %v5720 = vmul.f32 %v5624, %v5688
        %v5721 = vmul.f32 %v5625, %v5689
        %v5722 = vmul.f32 %v5626, %v5690
        %v5723 = vmul.f32 %v5627, %v5691
        %v5724 = vmul.f32 %v5628, %v5692
        %v5725 = vmul.f32 %v5629, %v5693
        %v5726 = vmul.f32 %v5630, %v5694
        %v5727 = vmul.f32 %v5631, %v5695
        %v5728 = vmul.f32 %v5632, %v5696
        %v5729 = vmul.f32 %v5633, %v5697
        %v5730 = vmul.f32 %v5634, %v5698
        %v5731 = vmul.f32 %v5635, %v5699
        %v5732 = vmul.f32 %v5636, %v5700
        %v5733 = vmul.f32 %v5637, %v5701
        %v5734 = vmul.f32 %v5638, %v5702
        %v5735 = vmul.f32 %v5639, %v5703
        %v5736 = vmul.f32 %v5640, %v5704
        %v5737 = vmul.f32 %v5641, %v5705
        %v5738 = vmul.f32 %v5642, %v5706
        %v5739 = vmul.f32 %v5643, %v5707
        %v5740 = vmul.f32 %v5644, %v5708
        %v5741 = vmul.f32 %v5645, %v5709
        %v5742 = vmul.f32 %v5646, %v5710
        %v5743 = vmul.f32 %v5647, %v5711
        %v5744 = vmul.f32 %v5648, %v5712
        %v5745 = vmul.f32 %v5649, %v5713
        %v5746 = vmul.f32 %v5266, 0.5
        %v5747 = vmul.f32 %v5267, 0.5
        %v5748 = vmul.f32 %v5268, 0.5
        %v5749 = vmul.f32 %v5269, 0.5
        %v5750 = vmul.f32 %v5270, 0.5
        %v5751 = vmul.f32 %v5271, 0.5
        %v5752 = vmul.f32 %v5272, 0.5
        %v5753 = vmul.f32 %v5273, 0.5
        %v5754 = vmul.f32 %v5274, 0.5
        %v5755 = vmul.f32 %v5275, 0.5
        %v5756 = vmul.f32 %v5276, 0.5
        %v5757 = vmul.f32 %v5277, 0.5
        %v5758 = vmul.f32 %v5278, 0.5
        %v5759 = vmul.f32 %v5279, 0.5
        %v5760 = vmul.f32 %v5280, 0.5
        %v5761 = vmul.f32 %v5281, 0.5
        %v5762 = vmul.f32 %v5282, 0.5
        %v5763 = vmul.f32 %v5283, 0.5
        %v5764 = vmul.f32 %v5284, 0.5
        %v5765 = vmul.f32 %v5285, 0.5
        %v5766 = vmul.f32 %v5286, 0.5
        %v5767 = vmul.f32 %v5287, 0.5
        %v5768 = vmul.f32 %v5288, 0.5
        %v5769 = vmul.f32 %v5289, 0.5
        %v5770 = vmul.f32 %v5290, 0.5
        %v5771 = vmul.f32 %v5291, 0.5
        %v5772 = vmul.f32 %v5292, 0.5
        %v5773 = vmul.f32 %v5293, 0.5
        %v5774 = vmul.f32 %v5294, 0.5
        %v5775 = vmul.f32 %v5295, 0.5
        %v5776 = vmul.f32 %v5296, 0.5
        %v5777 = vmul.f32 %v5297, 0.5
        %v5778 = vtanh.pop %v5746
        %v5779 = vtanh.pop %v5747
        %v5780 = vtanh.pop %v5748
        %v5781 = vtanh.pop %v5749
        %v5782 = vtanh.pop %v5750
        %v5783 = vtanh.pop %v5751
        %v5784 = vtanh.pop %v5752
        %v5785 = vtanh.pop %v5753
        %v5786 = vtanh.pop %v5754
        %v5787 = vtanh.pop %v5755
        %v5788 = vtanh.pop %v5756
        %v5789 = vtanh.pop %v5757
        %v5790 = vtanh.pop %v5758
        %v5791 = vtanh.pop %v5759
        %v5792 = vtanh.pop %v5760
        %v5793 = vtanh.pop %v5761
        %v5794 = vtanh.pop %v5762
        %v5795 = vtanh.pop %v5763
        %v5796 = vtanh.pop %v5764
        %v5797 = vtanh.pop %v5765
        %v5798 = vtanh.pop %v5766
        %v5799 = vtanh.pop %v5767
        %v5800 = vtanh.pop %v5768
        %v5801 = vtanh.pop %v5769
        %v5802 = vtanh.pop %v5770
        %v5803 = vtanh.pop %v5771
        %v5804 = vtanh.pop %v5772
        %v5805 = vtanh.pop %v5773
        %v5806 = vtanh.pop %v5774
        %v5807 = vtanh.pop %v5775
        %v5808 = vtanh.pop %v5776
        %v5809 = vtanh.pop %v5777
        %v5810 = vmul.f32 %v5778, 0.5
        %v5811 = vmul.f32 %v5779, 0.5
        %v5812 = vmul.f32 %v5780, 0.5
        %v5813 = vmul.f32 %v5781, 0.5
        %v5814 = vmul.f32 %v5782, 0.5
        %v5815 = vmul.f32 %v5783, 0.5
        %v5816 = vmul.f32 %v5784, 0.5
        %v5817 = vmul.f32 %v5785, 0.5
        %v5818 = vmul.f32 %v5786, 0.5
        %v5819 = vmul.f32 %v5787, 0.5
        %v5820 = vmul.f32 %v5788, 0.5
        %v5821 = vmul.f32 %v5789, 0.5
        %v5822 = vmul.f32 %v5790, 0.5
        %v5823 = vmul.f32 %v5791, 0.5
        %v5824 = vmul.f32 %v5792, 0.5
        %v5825 = vmul.f32 %v5793, 0.5
        %v5826 = vmul.f32 %v5794, 0.5
        %v5827 = vmul.f32 %v5795, 0.5
        %v5828 = vmul.f32 %v5796, 0.5
        %v5829 = vmul.f32 %v5797, 0.5
        %v5830 = vmul.f32 %v5798, 0.5
        %v5831 = vmul.f32 %v5799, 0.5
        %v5832 = vmul.f32 %v5800, 0.5
        %v5833 = vmul.f32 %v5801, 0.5
        %v5834 = vmul.f32 %v5802, 0.5
        %v5835 = vmul.f32 %v5803, 0.5
        %v5836 = vmul.f32 %v5804, 0.5
        %v5837 = vmul.f32 %v5805, 0.5
        %v5838 = vmul.f32 %v5806, 0.5
        %v5839 = vmul.f32 %v5807, 0.5
        %v5840 = vmul.f32 %v5808, 0.5
        %v5841 = vmul.f32 %v5809, 0.5
        %v5842 = vadd.f32 %v5810, 0.5
        %v5843 = vadd.f32 %v5811, 0.5
        %v5844 = vadd.f32 %v5812, 0.5
        %v5845 = vadd.f32 %v5813, 0.5
        %v5846 = vadd.f32 %v5814, 0.5
        %v5847 = vadd.f32 %v5815, 0.5
        %v5848 = vadd.f32 %v5816, 0.5
        %v5849 = vadd.f32 %v5817, 0.5
        %v5850 = vadd.f32 %v5818, 0.5
        %v5851 = vadd.f32 %v5819, 0.5
        %v5852 = vadd.f32 %v5820, 0.5
        %v5853 = vadd.f32 %v5821, 0.5
        %v5854 = vadd.f32 %v5822, 0.5
        %v5855 = vadd.f32 %v5823, 0.5
        %v5856 = vadd.f32 %v5824, 0.5
        %v5857 = vadd.f32 %v5825, 0.5
        %v5858 = vadd.f32 %v5826, 0.5
        %v5859 = vadd.f32 %v5827, 0.5
        %v5860 = vadd.f32 %v5828, 0.5
        %v5861 = vadd.f32 %v5829, 0.5
        %v5862 = vadd.f32 %v5830, 0.5
        %v5863 = vadd.f32 %v5831, 0.5
        %v5864 = vadd.f32 %v5832, 0.5
        %v5865 = vadd.f32 %v5833, 0.5
        %v5866 = vadd.f32 %v5834, 0.5
        %v5867 = vadd.f32 %v5835, 0.5
        %v5868 = vadd.f32 %v5836, 0.5
        %v5869 = vadd.f32 %v5837, 0.5
        %v5870 = vadd.f32 %v5838, 0.5
        %v5871 = vadd.f32 %v5839, 0.5
        %v5872 = vadd.f32 %v5840, 0.5
        %v5873 = vadd.f32 %v5841, 0.5
        %v5874 = vtanh.pop %v5298
        %v5875 = vtanh.pop %v5299
        %v5876 = vtanh.pop %v5300
        %v5877 = vtanh.pop %v5301
        %v5878 = vtanh.pop %v5302
        %v5879 = vtanh.pop %v5303
        %v5880 = vtanh.pop %v5304
        %v5881 = vtanh.pop %v5305
        %v5882 = vtanh.pop %v5306
        %v5883 = vtanh.pop %v5307
        %v5884 = vtanh.pop %v5308
        %v5885 = vtanh.pop %v5309
        %v5886 = vtanh.pop %v5310
        %v5887 = vtanh.pop %v5311
        %v5888 = vtanh.pop %v5312
        %v5889 = vtanh.pop %v5313
        %v5890 = vtanh.pop %v5314
        %v5891 = vtanh.pop %v5315
        %v5892 = vtanh.pop %v5316
        %v5893 = vtanh.pop %v5317
        %v5894 = vtanh.pop %v5318
        %v5895 = vtanh.pop %v5319
        %v5896 = vtanh.pop %v5320
        %v5897 = vtanh.pop %v5321
        %v5898 = vtanh.pop %v5322
        %v5899 = vtanh.pop %v5323
        %v5900 = vtanh.pop %v5324
        %v5901 = vtanh.pop %v5325
        %v5902 = vtanh.pop %v5326
        %v5903 = vtanh.pop %v5327
        %v5904 = vtanh.pop %v5328
        %v5905 = vtanh.pop %v5329
        %v5906 = vmul.f32 %v5330, 0.5
        %v5907 = vmul.f32 %v5331, 0.5
        %v5908 = vmul.f32 %v5332, 0.5
        %v5909 = vmul.f32 %v5333, 0.5
        %v5910 = vmul.f32 %v5334, 0.5
        %v5911 = vmul.f32 %v5335, 0.5
        %v5912 = vmul.f32 %v5336, 0.5
        %v5913 = vmul.f32 %v5337, 0.5
        %v5914 = vmul.f32 %v5338, 0.5
        %v5915 = vmul.f32 %v5339, 0.5
        %v5916 = vmul.f32 %v5340, 0.5
        %v5917 = vmul.f32 %v5341, 0.5
        %v5918 = vmul.f32 %v5342, 0.5
        %v5919 = vmul.f32 %v5343, 0.5
        %v5920 = vmul.f32 %v5344, 0.5
        %v5921 = vmul.f32 %v5345, 0.5
        %v5922 = vmul.f32 %v5346, 0.5
        %v5923 = vmul.f32 %v5347, 0.5
        %v5924 = vmul.f32 %v5348, 0.5
        %v5925 = vmul.f32 %v5349, 0.5
        %v5926 = vmul.f32 %v5350, 0.5
        %v5927 = vmul.f32 %v5351, 0.5
        %v5928 = vmul.f32 %v5352, 0.5
        %v5929 = vmul.f32 %v5353, 0.5
        %v5930 = vmul.f32 %v5354, 0.5
        %v5931 = vmul.f32 %v5355, 0.5
        %v5932 = vmul.f32 %v5356, 0.5
        %v5933 = vmul.f32 %v5357, 0.5
        %v5934 = vmul.f32 %v5358, 0.5
        %v5935 = vmul.f32 %v5359, 0.5
        %v5936 = vmul.f32 %v5360, 0.5
        %v5937 = vmul.f32 %v5361, 0.5
        %v5938 = vtanh.pop %v5906
        %v5939 = vtanh.pop %v5907
        %v5940 = vtanh.pop %v5908
        %v5941 = vtanh.pop %v5909
        %v5942 = vtanh.pop %v5910
        %v5943 = vtanh.pop %v5911
        %v5944 = vtanh.pop %v5912
        %v5945 = vtanh.pop %v5913
        %v5946 = vtanh.pop %v5914
        %v5947 = vtanh.pop %v5915
        %v5948 = vtanh.pop %v5916
        %v5949 = vtanh.pop %v5917
        %v5950 = vtanh.pop %v5918
        %v5951 = vtanh.pop %v5919
        %v5952 = vtanh.pop %v5920
        %v5953 = vtanh.pop %v5921
        %v5954 = vtanh.pop %v5922
        %v5955 = vtanh.pop %v5923
        %v5956 = vtanh.pop %v5924
        %v5957 = vtanh.pop %v5925
        %v5958 = vtanh.pop %v5926
        %v5959 = vtanh.pop %v5927
        %v5960 = vtanh.pop %v5928
        %v5961 = vtanh.pop %v5929
        %v5962 = vtanh.pop %v5930
        %v5963 = vtanh.pop %v5931
        %v5964 = vtanh.pop %v5932
        %v5965 = vtanh.pop %v5933
        %v5966 = vtanh.pop %v5934
        %v5967 = vtanh.pop %v5935
        %v5968 = vtanh.pop %v5936
        %v5969 = vtanh.pop %v5937
        %v5970 = vmul.f32 %v5938, 0.5
        %v5971 = vmul.f32 %v5939, 0.5
        %v5972 = vmul.f32 %v5940, 0.5
        %v5973 = vmul.f32 %v5941, 0.5
        %v5974 = vmul.f32 %v5942, 0.5
        %v5975 = vmul.f32 %v5943, 0.5
        %v5976 = vmul.f32 %v5944, 0.5
        %v5977 = vmul.f32 %v5945, 0.5
        %v5978 = vmul.f32 %v5946, 0.5
        %v5979 = vmul.f32 %v5947, 0.5
        %v5980 = vmul.f32 %v5948, 0.5
        %v5981 = vmul.f32 %v5949, 0.5
        %v5982 = vmul.f32 %v5950, 0.5
        %v5983 = vmul.f32 %v5951, 0.5
        %v5984 = vmul.f32 %v5952, 0.5
        %v5985 = vmul.f32 %v5953, 0.5
        %v5986 = vmul.f32 %v5954, 0.5
        %v5987 = vmul.f32 %v5955, 0.5
        %v5988 = vmul.f32 %v5956, 0.5
        %v5989 = vmul.f32 %v5957, 0.5
        %v5990 = vmul.f32 %v5958, 0.5
        %v5991 = vmul.f32 %v5959, 0.5
        %v5992 = vmul.f32 %v5960, 0.5
        %v5993 = vmul.f32 %v5961, 0.5
        %v5994 = vmul.f32 %v5962, 0.5
        %v5995 = vmul.f32 %v5963, 0.5
        %v5996 = vmul.f32 %v5964, 0.5
        %v5997 = vmul.f32 %v5965, 0.5
        %v5998 = vmul.f32 %v5966, 0.5
        %v5999 = vmul.f32 %v5967, 0.5
        %v6000 = vmul.f32 %v5968, 0.5
        %v6001 = vmul.f32 %v5969, 0.5
        %v6002 = vadd.f32 %v5970, 0.5
        %v6003 = vadd.f32 %v5971, 0.5
        %v6004 = vadd.f32 %v5972, 0.5
        %v6005 = vadd.f32 %v5973, 0.5
        %v6006 = vadd.f32 %v5974, 0.5
        %v6007 = vadd.f32 %v5975, 0.5
        %v6008 = vadd.f32 %v5976, 0.5
        %v6009 = vadd.f32 %v5977, 0.5
        %v6010 = vadd.f32 %v5978, 0.5
        %v6011 = vadd.f32 %v5979, 0.5
        %v6012 = vadd.f32 %v5980, 0.5
        %v6013 = vadd.f32 %v5981, 0.5
        %v6014 = vadd.f32 %v5982, 0.5
        %v6015 = vadd.f32 %v5983, 0.5
        %v6016 = vadd.f32 %v5984, 0.5
        %v6017 = vadd.f32 %v5985, 0.5
        %v6018 = vadd.f32 %v5986, 0.5
        %v6019 = vadd.f32 %v5987, 0.5
        %v6020 = vadd.f32 %v5988, 0.5
        %v6021 = vadd.f32 %v5989, 0.5
        %v6022 = vadd.f32 %v5990, 0.5
        %v6023 = vadd.f32 %v5991, 0.5
        %v6024 = vadd.f32 %v5992, 0.5
        %v6025 = vadd.f32 %v5993, 0.5
        %v6026 = vadd.f32 %v5994, 0.5
        %v6027 = vadd.f32 %v5995, 0.5
        %v6028 = vadd.f32 %v5996, 0.5
        %v6029 = vadd.f32 %v5997, 0.5
        %v6030 = vadd.f32 %v5998, 0.5
        %v6031 = vadd.f32 %v5999, 0.5
        %v6032 = vadd.f32 %v6000, 0.5
        %v6033 = vadd.f32 %v6001, 0.5
        %v6034 = vmul.f32 %v5842, %v5874
        %v6035 = vmul.f32 %v5843, %v5875
        %v6036 = vmul.f32 %v5844, %v5876
        %v6037 = vmul.f32 %v5845, %v5877
        %v6038 = vmul.f32 %v5846, %v5878
        %v6039 = vmul.f32 %v5847, %v5879
        %v6040 = vmul.f32 %v5848, %v5880
        %v6041 = vmul.f32 %v5849, %v5881
        %v6042 = vmul.f32 %v5850, %v5882
        %v6043 = vmul.f32 %v5851, %v5883
        %v6044 = vmul.f32 %v5852, %v5884
        %v6045 = vmul.f32 %v5853, %v5885
        %v6046 = vmul.f32 %v5854, %v5886
        %v6047 = vmul.f32 %v5855, %v5887
        %v6048 = vmul.f32 %v5856, %v5888
        %v6049 = vmul.f32 %v5857, %v5889
        %v6050 = vmul.f32 %v5858, %v5890
        %v6051 = vmul.f32 %v5859, %v5891
        %v6052 = vmul.f32 %v5860, %v5892
        %v6053 = vmul.f32 %v5861, %v5893
        %v6054 = vmul.f32 %v5862, %v5894
        %v6055 = vmul.f32 %v5863, %v5895
        %v6056 = vmul.f32 %v5864, %v5896
        %v6057 = vmul.f32 %v5865, %v5897
        %v6058 = vmul.f32 %v5866, %v5898
        %v6059 = vmul.f32 %v5867, %v5899
        %v6060 = vmul.f32 %v5868, %v5900
        %v6061 = vmul.f32 %v5869, %v5901
        %v6062 = vmul.f32 %v5870, %v5902
        %v6063 = vmul.f32 %v5871, %v5903
        %v6064 = vmul.f32 %v5872, %v5904
        %v6065 = vmul.f32 %v5873, %v5905
        %v6066 = vtanh.pop %v6034
        %v6067 = vtanh.pop %v6035
        %v6068 = vtanh.pop %v6036
        %v6069 = vtanh.pop %v6037
        %v6070 = vtanh.pop %v6038
        %v6071 = vtanh.pop %v6039
        %v6072 = vtanh.pop %v6040
        %v6073 = vtanh.pop %v6041
        %v6074 = vtanh.pop %v6042
        %v6075 = vtanh.pop %v6043
        %v6076 = vtanh.pop %v6044
        %v6077 = vtanh.pop %v6045
        %v6078 = vtanh.pop %v6046
        %v6079 = vtanh.pop %v6047
        %v6080 = vtanh.pop %v6048
        %v6081 = vtanh.pop %v6049
        %v6082 = vtanh.pop %v6050
        %v6083 = vtanh.pop %v6051
        %v6084 = vtanh.pop %v6052
        %v6085 = vtanh.pop %v6053
        %v6086 = vtanh.pop %v6054
        %v6087 = vtanh.pop %v6055
        %v6088 = vtanh.pop %v6056
        %v6089 = vtanh.pop %v6057
        %v6090 = vtanh.pop %v6058
        %v6091 = vtanh.pop %v6059
        %v6092 = vtanh.pop %v6060
        %v6093 = vtanh.pop %v6061
        %v6094 = vtanh.pop %v6062
        %v6095 = vtanh.pop %v6063
        %v6096 = vtanh.pop %v6064
        %v6097 = vtanh.pop %v6065
        %v6098 = vmul.f32 %v6002, %v6066
        %v6099 = vmul.f32 %v6003, %v6067
        %v6100 = vmul.f32 %v6004, %v6068
        %v6101 = vmul.f32 %v6005, %v6069
        %v6102 = vmul.f32 %v6006, %v6070
        %v6103 = vmul.f32 %v6007, %v6071
        %v6104 = vmul.f32 %v6008, %v6072
        %v6105 = vmul.f32 %v6009, %v6073
        %v6106 = vmul.f32 %v6010, %v6074
        %v6107 = vmul.f32 %v6011, %v6075
        %v6108 = vmul.f32 %v6012, %v6076
        %v6109 = vmul.f32 %v6013, %v6077
        %v6110 = vmul.f32 %v6014, %v6078
        %v6111 = vmul.f32 %v6015, %v6079
        %v6112 = vmul.f32 %v6016, %v6080
        %v6113 = vmul.f32 %v6017, %v6081
        %v6114 = vmul.f32 %v6018, %v6082
        %v6115 = vmul.f32 %v6019, %v6083
        %v6116 = vmul.f32 %v6020, %v6084
        %v6117 = vmul.f32 %v6021, %v6085
        %v6118 = vmul.f32 %v6022, %v6086
        %v6119 = vmul.f32 %v6023, %v6087
        %v6120 = vmul.f32 %v6024, %v6088
        %v6121 = vmul.f32 %v6025, %v6089
        %v6122 = vmul.f32 %v6026, %v6090
        %v6123 = vmul.f32 %v6027, %v6091
        %v6124 = vmul.f32 %v6028, %v6092
        %v6125 = vmul.f32 %v6029, %v6093
        %v6126 = vmul.f32 %v6030, %v6094
        %v6127 = vmul.f32 %v6031, %v6095
        %v6128 = vmul.f32 %v6032, %v6096
        %v6129 = vmul.f32 %v6033, %v6097
        %v6130 = vld [vmem:[%s6] sm:$0x1]
        %v6131 = vld [vmem:[%s7] sm:$0x1]
        %6132 = vmatprep.subr.mxu0 %v6099
        %6133 = vmatpush1.msra.mxu0 %v6098
        %6134 = vmatprep.subr.mxu0 %v6101
        %6135 = vmatpush1.msra.mxu0 %v6100
        %6136 = vmatprep.subr.mxu0 %v6103
        %6137 = vmatpush1.msra.mxu0 %v6102
        %6138 = vmatprep.subr.mxu0 %v6105
        %6139 = vmatpush1.msra.mxu0 %v6104
        %6140 = vmatprep.subr.mxu0 %v6107
        %6141 = vmatpush1.msra.mxu0 %v6106
        %6142 = vmatprep.subr.mxu0 %v6109
        %6143 = vmatpush1.msra.mxu0 %v6108
        %6144 = vmatprep.subr.mxu0 %v6111
        %6145 = vmatpush1.msra.mxu0 %v6110
        %6146 = vmatprep.subr.mxu0 %v6113
        %6147 = vmatpush1.msra.mxu0 %v6112
        %6148 = vmatprep.subr.mxu0 %v6115
        %6149 = vmatpush1.msra.mxu0 %v6114
        %6150 = vmatprep.subr.mxu0 %v6117
        %6151 = vmatpush1.msra.mxu0 %v6116
        %6152 = vmatprep.subr.mxu0 %v6119
        %6153 = vmatpush1.msra.mxu0 %v6118
        %6154 = vmatprep.subr.mxu0 %v6121
        %6155 = vmatpush1.msra.mxu0 %v6120
        %6156 = vmatprep.subr.mxu0 %v6123
        %6157 = vmatpush1.msra.mxu0 %v6122
        %6158 = vmatprep.subr.mxu0 %v6125
        %6159 = vmatpush1.msra.mxu0 %v6124
        %6160 = vmatprep.subr.mxu0 %v6127
        %6161 = vmatpush1.msra.mxu0 %v6126
        %6162 = vmatprep.subr.mxu0 %v6129
        %6163 = vmatpush1.msra.mxu0 %v6128
        %6164 = vmatprep.subr.mxu0 0.0
        %6165 = vmatpush1.msra.mxu0 0.0
        %6166 = vmatprep.subr.mxu0 0.0
        %6167 = vmatpush1.msra.mxu0 0.0
        %6168 = vmatprep.subr.mxu0 0.0
        %6169 = vmatpush1.msra.mxu0 0.0
        %6170 = vmatprep.subr.mxu0 0.0
        %6171 = vmatpush1.msra.mxu0 0.0
        %6172 = vmatprep.subr.mxu0 0.0
        %6173 = vmatpush1.msra.mxu0 0.0
        %6174 = vmatprep.subr.mxu0 0.0
        %6175 = vmatpush1.msra.mxu0 0.0
        %6176 = vmatprep.subr.mxu0 0.0
        %6177 = vmatpush1.msra.mxu0 0.0
        %6178 = vmatprep.subr.mxu0 0.0
        %6179 = vmatpush1.msra.mxu0 0.0
        %6180 = vmatprep.subr.mxu0 0.0
        %6181 = vmatpush1.msra.mxu0 0.0
        %6182 = vmatprep.subr.mxu0 0.0
        %6183 = vmatpush1.msra.mxu0 0.0
        %6184 = vmatprep.subr.mxu0 0.0
        %6185 = vmatpush1.msra.mxu0 0.0
        %6186 = vmatprep.subr.mxu0 0.0
        %6187 = vmatpush1.msra.mxu0 0.0
        %6188 = vmatprep.subr.mxu0 0.0
        %6189 = vmatpush1.msra.mxu0 0.0
        %6190 = vmatprep.subr.mxu0 0.0
        %6191 = vmatpush1.msra.mxu0 0.0
        %6192 = vmatprep.subr.mxu0 0.0
        %6193 = vmatpush1.msra.mxu0 0.0
        %6194 = vmatprep.subr.mxu0 0.0
        %6195 = vmatpush1.msra.mxu0 0.0
        %6196 = vmatprep.mubr.f32.mxu0 0.0
        %6197 = vmatmul.mubr.f32.gmra.mrb[0].mxu0 %v6131
        %v6198 = vpop.f32.mrb[0].mxu0
        %v6199 = vadd.f32 0.0, %v6198
        %v6200 = vpop.f32.mrb[0].mxu0
        %v6201 = vadd.f32 0.0, %v6200
        %6202 = vdwg.mxu0
        %6203 = vmatprep.subr.mxu0 %v5715
        %6204 = vmatpush1.msra.mxu0 %v5714
        %6205 = vmatprep.subr.mxu0 %v5717
        %6206 = vmatpush1.msra.mxu0 %v5716
        %6207 = vmatprep.subr.mxu0 %v5719
        %6208 = vmatpush1.msra.mxu0 %v5718
        %6209 = vmatprep.subr.mxu0 %v5721
        %6210 = vmatpush1.msra.mxu0 %v5720
        %6211 = vmatprep.subr.mxu0 %v5723
        %6212 = vmatpush1.msra.mxu0 %v5722
        %6213 = vmatprep.subr.mxu0 %v5725
        %6214 = vmatpush1.msra.mxu0 %v5724
        %6215 = vmatprep.subr.mxu0 %v5727
        %6216 = vmatpush1.msra.mxu0 %v5726
        %6217 = vmatprep.subr.mxu0 %v5729
        %6218 = vmatpush1.msra.mxu0 %v5728
        %6219 = vmatprep.subr.mxu0 %v5731
        %6220 = vmatpush1.msra.mxu0 %v5730
        %6221 = vmatprep.subr.mxu0 %v5733
        %6222 = vmatpush1.msra.mxu0 %v5732
        %6223 = vmatprep.subr.mxu0 %v5735
        %6224 = vmatpush1.msra.mxu0 %v5734
        %6225 = vmatprep.subr.mxu0 %v5737
        %6226 = vmatpush1.msra.mxu0 %v5736
        %6227 = vmatprep.subr.mxu0 %v5739
        %6228 = vmatpush1.msra.mxu0 %v5738
        %6229 = vmatprep.subr.mxu0 %v5741
        %6230 = vmatpush1.msra.mxu0 %v5740
        %6231 = vmatprep.subr.mxu0 %v5743
        %6232 = vmatpush1.msra.mxu0 %v5742
        %6233 = vmatprep.subr.mxu0 %v5745
        %6234 = vmatpush1.msra.mxu0 %v5744
        %6235 = vmatprep.subr.mxu0 0.0
        %6236 = vmatpush1.msra.mxu0 0.0
        %6237 = vmatprep.subr.mxu0 0.0
        %6238 = vmatpush1.msra.mxu0 0.0
        %6239 = vmatprep.subr.mxu0 0.0
        %6240 = vmatpush1.msra.mxu0 0.0
        %6241 = vmatprep.subr.mxu0 0.0
        %6242 = vmatpush1.msra.mxu0 0.0
        %6243 = vmatprep.subr.mxu0 0.0
        %6244 = vmatpush1.msra.mxu0 0.0
        %6245 = vmatprep.subr.mxu0 0.0
        %6246 = vmatpush1.msra.mxu0 0.0
        %6247 = vmatprep.subr.mxu0 0.0
        %6248 = vmatpush1.msra.mxu0 0.0
        %6249 = vmatprep.subr.mxu0 0.0
        %6250 = vmatpush1.msra.mxu0 0.0
        %6251 = vmatprep.subr.mxu0 0.0
        %6252 = vmatpush1.msra.mxu0 0.0
        %6253 = vmatprep.subr.mxu0 0.0
        %6254 = vmatpush1.msra.mxu0 0.0
        %6255 = vmatprep.subr.mxu0 0.0
        %6256 = vmatpush1.msra.mxu0 0.0
        %6257 = vmatprep.subr.mxu0 0.0
        %6258 = vmatpush1.msra.mxu0 0.0
        %6259 = vmatprep.subr.mxu0 0.0
        %6260 = vmatpush1.msra.mxu0 0.0
        %6261 = vmatprep.subr.mxu0 0.0
        %6262 = vmatpush1.msra.mxu0 0.0
        %6263 = vmatprep.subr.mxu0 0.0
        %6264 = vmatpush1.msra.mxu0 0.0
        %6265 = vmatprep.subr.mxu0 0.0
        %6266 = vmatpush1.msra.mxu0 0.0
        %6267 = vmatprep.mubr.f32.mxu0 0.0
        %6268 = vmatmul.mubr.f32.gmra.mrb[0].mxu0 %v6130
        %v6269 = vpop.f32.mrb[0].mxu0
        %v6270 = vadd.f32 %v6199, %v6269
        %v6271 = vpop.f32.mrb[0].mxu0
        %v6272 = vadd.f32 %v6201, %v6271
        %6273 = vdwg.mxu0
        %v6274 = vld [vmem:[#allocation2] sm:$0x1]
        %6276 = vset.pattern.permute.xlu0 0
        %6277 = vperm.xlu0 %6276, %v6274
        %v6278 = vpop.permute.xlu0 %6277
        %v6280 = vlaneseq
        %v6281 = vshrl.u32 %v6280, 7
        %v6282 = vsub.s32 0, %v6281
        %v6283 = vrot.slane %v6278, %v6282
        %v6284 = vadd.f32 %v6270, %v6283
        %v6285 = vadd.f32 %v6272, %v6283
        %v6288 = vcombine.low %v6284, %v6285
        %v6290 = vunpack.c.l.s4 1966171168
        %v6291 = vunpack.c.0.s8 %v6290
        %v6292 = vlaneseq
        %v6293 = vshrl.u32 %v6292, 7
        %v6294 = vsub.s32 %v6291, %v6293
        %v6295 = vrot.slane %v6288, %v6294
        %v6297 = vunpack.c.l.s4 1966171168
        %v6298 = vunpack.c.0.s8 %v6297
        %v6299 = vlaneseq
        %v6300 = vshrl.u32 %v6299, 7
        %v6301 = vsub.s32 %v6298, %v6300
        %v6302 = vrot.slane %v6295, %v6301
        %v6304 = vlaneseq
        %vm6305 = vcmp.ge.s32.totalorder %v6304, 0
        %vm6306 = vcmp.lt.s32.totalorder %v6304, 256
        %vm6307 = vmand %vm6305, %vm6306
        %6308 = vst.msk [vmem:[%s427] sm:$0x3] %vm6307, %v6302
        %s6309 = sand.u32 %s227, 1
        %s6310 = scalar_lea.sflag [#allocation5], %s6309
        %s6311 = sand.u32 %s227, 1
        %s6312 = smul.addr %s6311, 2
        %s6313 = scalar_lea.vmem [#allocation4], %s6312
        // Predicated region
        $region95: #{tpu_custom_call.1} parent=89 // pred_check
          %p6314 = pneg %p237
        $region96: #{tpu_custom_call.1} parent=89 // pred_check_branch
          %6316 = sbr.rel (%p6314) target = $region98
        $region97: #{tpu_custom_call.1} parent=89 // pred_region
          %s6317 = smul.u32 2, %s25
          %s6319 = ssub.s32 32, 32
          %6320 = vsyncadd %s6310, %s6319
          %s6321 = smul.addr %s6317, 16
          %s6322 = scalar_lea.hbm %s9, %s6321
          %s6324 = sshll.u32 %s6313, 4
          %s6325 = int_to_ptr.vmem [resolvable:$true] %s6324
          %6327 = dma.vmem_to_hbm [thread:$0]  %s6325, 32, %s6322, %s6310
        $region98: #{tpu_custom_call.1} parent=89 // pred_fallthru
          _
      $region90: #{tpu_custom_call.1} parent=5 // pred_fallthru
        _
      %p6328 = scmp.le.s32.totalorder 2, %s20
      // Predicated region
      $region99: #{tpu_custom_call.1} parent=5 // pred_check
        %p6329 = pneg %p6328
      $region100: #{tpu_custom_call.1} parent=5 // pred_check_branch
        %6331 = sbr.rel (%p6329) target = $region102
      $region101: #{tpu_custom_call.1} parent=5 // pred_region
        %s6332 = ssub.s32 %s20, 2
        // Predicated region
        $region103: #{tpu_custom_call.1} parent=101 // pred_check
          %p6333 = pneg %p243
        $region104: #{tpu_custom_call.1} parent=101 // pred_check_branch
          %6335 = sbr.rel (%p6333) target = $region106
        $region105: #{tpu_custom_call.1} parent=101 // pred_region
          %s6336 = sand.u32 %s228, 1
          %s6337 = scalar_lea.sflag [#allocation5], %s6336
          %s6338 = sand.u32 %s228, 1
          %s6339 = smul.addr %s6338, 2
          %s6340 = scalar_lea.vmem [#allocation4], %s6339
          %6341 = dma.done %s6337, 32
        $region106: #{tpu_custom_call.1} parent=101 // pred_fallthru
          _
      $region102: #{tpu_custom_call.1} parent=5 // pred_fallthru
        _
    $region6: #{tpu_custom_call.1} parent=1 // loop_footer
      %s24 = sadd.s32 1, %s20
    $region7: #{tpu_custom_call.1} parent=1 // loop_footer_branch
      %19 = sbr.rel target = $region3
    $region8: #{tpu_custom_call.1} parent=1 // loop_exit
      _
    %6342 = vsyncpa [#allocation5], 1
    %s6343 = scalar_lea.sflag [#allocation5], 1
    %6344 = vsyncpa %s6343, 1

</llo_original>
